<compile_context>
chip_gen: v5e
topology: v5e:2x2
jax: 0.10.0
libtpu: 0.0.40
codegen_flags: <defaults>
</compile_context>

<pallas_src>
import jax
import jax.numpy as jnp
import numpy as np
from jax import lax
from jax.experimental import pallas as pl
from jax.experimental.pallas import tpu as pltpu

KSIZE = 7
PAD = (KSIZE - 1) // 2


def _shift_zero(a, off, axis):
    """out[..., i, ...] = a[..., i + off, ...] along `axis`, zero where OOB.

    Kept as slice+concat (not pltpu.roll): every shifted map here is only a few
    vregs, so its absolute cost is negligible and slice+concat is the lowering
    path already proven on this kernel.
    """
    axis = axis % a.ndim
    if off == 0:
        return a
    n = a.shape[axis]
    if abs(off) >= n:
        return jnp.zeros_like(a)
    pad_shape = list(a.shape)
    pad_shape[axis] = abs(off)
    zeros = jnp.zeros(pad_shape, a.dtype)
    if off > 0:
        body = lax.slice_in_dim(a, off, n, axis=axis)
        return lax.concatenate([body, zeros], dimension=axis)
    body = lax.slice_in_dim(a, 0, n + off, axis=axis)
    return lax.concatenate([zeros, body], dimension=axis)


def _conv7x7_sigmoid(chans, shift_kx, shift_ky, w_ref, b_ref, branch):
    """BN-folded Conv2d(2->1, k=7, 'same') + sigmoid on a pair of pooled maps.

    chans    : (max_map, mean_map), f32, any shape; shift_kx / shift_ky are
               closures implementing the width / height shifts on that shape.
    w_ref    : flat SMEM weights [branch, channel, ky, kx]; b_ref[branch] bias.

    Loop order is kx-outermost: per kx only the two freshly shifted channel
    maps are live, accumulating into 7 ky partial sums (small live set).
    """
    base = branch * 2 * KSIZE * KSIZE
    acc = [None] * KSIZE
    for kx in range(KSIZE):
        for c, m in enumerate(chans):
            sh = shift_kx(m, kx - PAD)
            for ky in range(KSIZE):
                w = w_ref[base + c * KSIZE * KSIZE + ky * KSIZE + kx]
                t = w * sh
                acc[ky] = t if acc[ky] is None else acc[ky] + t
    parts = [shift_ky(acc[ky], ky - PAD) for ky in range(KSIZE)]
    # Pairwise tree sum of the 7 independent ky partials (VALU ILP).
    while len(parts) > 1:
        nxt = [parts[i] + parts[i + 1] for i in range(0, len(parts) - 1, 2)]
        if len(parts) % 2:
            nxt.append(parts[-1])
        parts = nxt
    return jax.nn.sigmoid(parts[0] + b_ref[branch])


def _make_kernel(C, H, W):
    N = H * W
    f32 = jnp.float32

    def kernel(w_ref, b_ref, x_ref, o_ref):
        """Fused TripletAttention for one (bt, C, H*W) lane-dense block.

        w_ref : (3*2*7*7,) SMEM  BN-folded conv weights, branch order [cw, hc, hw]
        b_ref : (3,)       SMEM  BN-folded biases
        x_ref : (bt, C, N) VMEM  N = H*W
        o_ref : (bt, C, N) VMEM
        """
        x = x_ref[...]                                   # keep input dtype
        bt = x.shape[0]

        # ---- hw branch pooled maps: reduce over C -> (bt, N), lane-dense ----
        mx_hw = jnp.max(x, axis=1).astype(f32)
        mn_hw = jnp.sum(x, axis=1, dtype=f32) * (1.0 / C)

        # ---- cw / hc pooled maps from the H static row slices of the flat axis ----
        # cw: reduce over H -> (bt, C, W);  hc: per-row reduce over W -> (bt, C, H)
        hpos = lax.broadcasted_iota(jnp.int32, (1, 1, H), 2)
        mx_cw = None
        mn_cw = None
        mx_hc = jnp.zeros((bt, C, H), f32)
        mn_hc = jnp.zeros((bt, C, H), f32)
        for h in range(H):
            slf = x[:, :, h * W:(h + 1) * W].astype(f32)          # (bt, C, W)
            mx_cw = slf if mx_cw is None else jnp.maximum(mx_cw, slf)
            mn_cw = slf if mn_cw is None else mn_cw + slf
            sel = hpos == h
            mx_hc = jnp.where(sel, jnp.max(slf, axis=-1, keepdims=True), mx_hc)
            mn_hc = jnp.where(sel, jnp.sum(slf, axis=-1, keepdims=True), mn_hc)
        mn_cw = mn_cw * (1.0 / H)
        mn_hc = mn_hc * (1.0 / W)

        # ---- hoisted W-direction boundary masks for the flattened hw conv ----
        col = jnp.concatenate(
            [lax.broadcasted_iota(jnp.int32, (1, W), 1)] * H, axis=-1)   # (1, N)
        kx_mask = {off: jnp.logical_and(col + off >= 0, col + off < W)
                   for off in range(-PAD, PAD + 1) if off != 0}

        def shift_kx_hw(a, off):                 # kx over W inside the flat axis
            if off == 0:
                return a
            return jnp.where(kx_mask[off], _shift_zero(a, off, 1), 0.0)

        def shift_ky_hw(a, off):                 # ky over H == stride-W lane shift
            return _shift_zero(a, off * W, 1)

        # ---- the three gates (conv + folded BN + sigmoid) ----
        # cw branch: conv plane (C, W): height=C (axis 1), width=W (axis 2)
        s_cw = _conv7x7_sigmoid(
            (mx_cw, mn_cw),
            shift_kx=lambda a, o: _shift_zero(a, o, 2),
            shift_ky=lambda a, o: _shift_zero(a, o, 1),
            w_ref=w_ref, b_ref=b_ref, branch=0)
        # hc branch: conv plane (H, C): height=H (axis 2, lanes), width=C (axis 1)
        s_hc = _conv7x7_sigmoid(
            (mx_hc, mn_hc),
            shift_kx=lambda a, o: _shift_zero(a, o, 1),
            shift_ky=lambda a, o: _shift_zero(a, o, 2),
            w_ref=w_ref, b_ref=b_ref, branch=1)
        # hw branch: conv plane (H, W) embedded in the flat (bt, N) maps
        s_hw = _conv7x7_sigmoid(
            (mx_hw, mn_hw),
            shift_kx=shift_kx_hw, shift_ky=shift_ky_hw,
            w_ref=w_ref, b_ref=b_ref, branch=2)

        # ---- combine: pre-scale by 1/3, cast the tiny gates to x.dtype, then
        #      broadcast into the flat layout and do a single multiply of x ----
        inv3 = f32(1.0 / 3.0)
        g_cw = (s_cw * inv3).astype(x.dtype)     # (bt, C, W)
        g_hc = (s_hc * inv3).astype(x.dtype)     # (bt, C, H)
        g_hw = (s_hw * inv3).astype(x.dtype)     # (bt, N)

        cw_full = jnp.concatenate([g_cw] * H, axis=-1)            # value @ h*W+w = g_cw[w]
        hc_full = jnp.concatenate(                                 # value @ h*W+w = g_hc[h]
            [jnp.broadcast_to(g_hc[:, :, h:h + 1], g_cw.shape) for h in range(H)],
            axis=-1)
        scale = cw_full + hc_full + g_hw[:, None, :]               # (bt, C, N)
        o_ref[...] = (x * scale).astype(o_ref.dtype)

    return kernel


def fold_bn(conv_w, conv_b, gamma, beta, mean, var, eps=1e-5):
    """Fold BatchNorm2d(1) (inference mode) into the Conv2d(2->1) params."""
    s = gamma / jnp.sqrt(var + eps)                 # (1,)
    w_fold = (conv_w * s)[0]                        # (2, 7, 7)
    b_fold = s * (conv_b - mean) + beta             # (1,)
    return w_fold, b_fold


def _pick_vmem_limit():
    """Scoped VMEM limit: 64 MiB on v5e/v6e (128 MiB physical), 32 MiB on v7x."""
    try:
        cap = int(pltpu.get_tpu_info().vmem_capacity_bytes)
    except Exception:
        cap = 64 * 1024 * 1024                      # v7x-safe assumption
    return max(32 * 1024 * 1024, min(64 * 1024 * 1024, cap // 2))


def _pick_batch_tile(B, C, N, itemsize, vmem_limit):
    """Largest batch tile dividing B whose real VMEM footprint fits the budget.

    Accounts for (8,128) sublane/lane padding, double-buffered input+output and
    ~3 block-equivalents of in-kernel intermediates (row slices, f32 pooled/conv
    maps, the scale broadcast).  Prefers an even grid step count (balances the
    two v7x TensorCores) when that costs at most a 2x smaller block; on
    single-TC v5e/v6e the extra grid step costs only ~0.35 us.
    """
    c_pad = -(-C // 8) * 8
    n_pad = -(-N // 128) * 128
    row_bytes = c_pad * n_pad * itemsize            # one batch row, as laid out in VMEM
    per_batch = 7 * row_bytes                       # 2x in + 2x out + ~3x intermediates
    budget = (vmem_limit * 3) // 4
    cap = max(1, budget // per_batch)
    fitting = [d for d in range(1, B + 1) if B % d == 0 and d <= cap]
    bt = max(fitting)
    if (B // bt) % 2 == 1:
        even = [d for d in fitting if (B // d) % 2 == 0 and 2 * d >= bt]
        if even:
            bt = max(even)
    return bt


def triplet_attention(x, params):
    """x: (B, C, H, W). params: dict branch -> (w_fold (2,7,7), b_fold (1,))."""
    B, C, H, W = x.shape
    N = H * W
    order = ("cw", "hc", "hw")
    w_all = jnp.concatenate(
        [params[k][0].reshape(-1).astype(jnp.float32) for k in order])  # (294,)
    b_all = jnp.concatenate(
        [params[k][1].reshape(-1).astype(jnp.float32) for k in order])  # (3,)

    vmem_limit = _pick_vmem_limit()
    bt = _pick_batch_tile(B, C, N, x.dtype.itemsize, vmem_limit)

    x_flat = x.reshape(B, C, N)                     # free in HBM (row-major)
    out_flat = pl.pallas_call(
        _make_kernel(C, H, W),
        out_shape=jax.ShapeDtypeStruct((B, C, N), x.dtype),
        grid=(B // bt,),
        in_specs=[
            pl.BlockSpec(memory_space=pltpu.MemorySpace.SMEM),   # weights
            pl.BlockSpec(memory_space=pltpu.MemorySpace.SMEM),   # biases
            pl.BlockSpec((bt, C, N), lambda i: (i, 0, 0)),
        ],
        out_specs=pl.BlockSpec((bt, C, N), lambda i: (i, 0, 0)),
        compiler_params=pltpu.CompilerParams(
            dimension_semantics=("parallel",),
            vmem_limit_bytes=vmem_limit,
        ),
    )(w_all, b_all, x_flat)
    return out_flat.reshape(B, C, H, W)


# ---------------- pure-JAX reference (validation only) ----------------
def ref_gate(x, conv_w, conv_b, gamma, beta, mean, var, eps=1e-5):
    mx = jnp.max(x, axis=1, keepdims=True)
    mn = jnp.mean(x, axis=1, keepdims=True)
    comp = jnp.concatenate([mx, mn], axis=1)
    y = lax.conv_general_dilated(
        comp, conv_w, window_strides=(1, 1), padding=[(PAD, PAD), (PAD, PAD)],
        dimension_numbers=("NCHW", "OIHW", "NCHW"))
    y = y + conv_b.reshape(1, -1, 1, 1)
    y = gamma * (y - mean) / jnp.sqrt(var + eps) + beta
    return x * jax.nn.sigmoid(y)


if __name__ == "__main__":
    B, C, H, W = 2, 4, 16, 16
    key = jax.random.PRNGKey(0)
    keys = jax.random.split(key, 4)
    x = jax.random.normal(keys[0], (B, C, H, W), jnp.float32)

    raw, params = {}, {}
    for i, name in enumerate(("cw", "hc", "hw")):
        kw, kb, kg, kbe, km, kv = jax.random.split(keys[i + 1], 6)
        conv_w = 0.1 * jax.random.normal(kw, (1, 2, KSIZE, KSIZE), jnp.float32)
        conv_b = 0.1 * jax.random.normal(kb, (1,), jnp.float32)
        gamma = 1.0 + 0.1 * jax.random.normal(kg, (1,), jnp.float32)
        beta = 0.1 * jax.random.normal(kbe, (1,), jnp.float32)
        mean = 0.1 * jax.random.normal(km, (1,), jnp.float32)
        var = 1.0 + 0.1 * jax.random.uniform(kv, (1,), jnp.float32)
        raw[name] = (conv_w, conv_b, gamma, beta, mean, var)
        params[name] = fold_bn(conv_w, conv_b, gamma, beta, mean, var)

    out = jax.block_until_ready(jax.jit(triplet_attention)(x, params))

    def ref_triplet(xx):
        o_hw = ref_gate(xx, *raw["hw"])
        o1 = jnp.transpose(
            ref_gate(jnp.transpose(xx, (0, 2, 1, 3)), *raw["cw"]), (0, 2, 1, 3))
        o2 = jnp.transpose(
            ref_gate(jnp.transpose(xx, (0, 3, 2, 1)), *raw["hc"]), (0, 3, 2, 1))
        return (1.0 / 3.0) * (o_hw + o1 + o2)

    ref = jax.block_until_ready(ref_triplet(x))
    np.testing.assert_allclose(np.asarray(out), np.asarray(ref),
                               rtol=1e-5, atol=1e-5)
    print("KERNEL_OK")
</pallas_src>

<mosaic_0001>
module attributes {stable_mosaic.version = 11 : i64} {
  func.func @kernel(%arg0: i32, %arg1: memref<294xf32, #tpu.memory_space<smem>>, %arg2: memref<3xf32, #tpu.memory_space<smem>>, %arg3: memref<1x4x256xf32, #tpu.memory_space<vmem>>, %arg4: memref<1x4x256xf32, #tpu.memory_space<vmem>>) attributes {dimension_semantics = [#tpu.dimension_semantics<parallel>], iteration_bounds = array<i64: 2>, scalar_prefetch = 0 : i64, scratch_operands = 0 : i64, tpu.core_type = #tpu.core_type<tc>, window_params = [{transform_indices = @transform_0, window_bounds = array<i64: 294>}, {transform_indices = @transform_1, window_bounds = array<i64: 3>}, {transform_indices = @transform_2, window_bounds = array<i64: 1, 4, 256>}, {transform_indices = @transform_3, window_bounds = array<i64: 1, 4, 256>}]} {
    %c0 = arith.constant 0 : index
    %c0_0 = arith.constant 0 : index
    %c0_1 = arith.constant 0 : index
    %0 = vector.load %arg3[%c0, %c0_0, %c0_1] : memref<1x4x256xf32, #tpu.memory_space<vmem>>, vector<1x4x256xf32>
    %cst = arith.constant dense<0xFF800000> : vector<1x256xf32>
    %1 = vector.multi_reduction <maximumf>, %0, %cst [1] : vector<1x4x256xf32> to vector<1x256xf32>
    %cst_2 = arith.constant dense<0.000000e+00> : vector<1x256xf32>
    %2 = vector.multi_reduction <add>, %0, %cst_2 [1] : vector<1x4x256xf32> to vector<1x256xf32>
    %cst_3 = arith.constant 2.500000e-01 : f32
    %3 = vector.broadcast %cst_3 : f32 to vector<1x256xf32>
    %4 = arith.mulf %2, %3 : vector<1x256xf32>
    %5 = tpu.iota {dimensions = array<i32: 2>} : vector<1x1x16xi32>
    %cst_4 = arith.constant 0.000000e+00 : f32
    %6 = vector.broadcast %cst_4 : f32 to vector<1x4x16xf32>
    %cst_5 = arith.constant 0.000000e+00 : f32
    %7 = vector.broadcast %cst_5 : f32 to vector<1x4x16xf32>
    %8 = vector.extract_strided_slice %0 {offsets = [0, 0, 0], sizes = [1, 4, 16], strides = [1, 1, 1]} : vector<1x4x256xf32> to vector<1x4x16xf32>
    %c0_i32 = arith.constant 0 : i32
    %9 = vector.broadcast %c0_i32 : i32 to vector<1x1x16xi32>
    %10 = arith.cmpi eq, %5, %9 : vector<1x1x16xi32>
    %cst_6 = arith.constant dense<0xFF800000> : vector<1x4xf32>
    %11 = vector.multi_reduction <maximumf>, %8, %cst_6 [2] : vector<1x4x16xf32> to vector<1x4xf32>
    %12 = vector.shape_cast %11 : vector<1x4xf32> to vector<1x4x1xf32>
    %13 = vector.shape_cast %10 : vector<1x1x16xi1> to vector<1x1x16xi1>
    %14 = vector.broadcast %13 : vector<1x1x16xi1> to vector<1x4x16xi1>
    %15 = vector.shape_cast %12 : vector<1x4x1xf32> to vector<1x4x1xf32>
    %16 = vector.broadcast %15 : vector<1x4x1xf32> to vector<1x4x16xf32>
    %17 = arith.select %14, %16, %6 : vector<1x4x16xi1>, vector<1x4x16xf32>
    %cst_7 = arith.constant dense<0.000000e+00> : vector<1x4xf32>
    %18 = vector.multi_reduction <add>, %8, %cst_7 [2] : vector<1x4x16xf32> to vector<1x4xf32>
    %19 = vector.shape_cast %18 : vector<1x4xf32> to vector<1x4x1xf32>
    %20 = vector.shape_cast %10 : vector<1x1x16xi1> to vector<1x1x16xi1>
    %21 = vector.broadcast %20 : vector<1x1x16xi1> to vector<1x4x16xi1>
    %22 = vector.shape_cast %19 : vector<1x4x1xf32> to vector<1x4x1xf32>
    %23 = vector.broadcast %22 : vector<1x4x1xf32> to vector<1x4x16xf32>
    %24 = arith.select %21, %23, %7 : vector<1x4x16xi1>, vector<1x4x16xf32>
    %25 = vector.extract_strided_slice %0 {offsets = [0, 0, 16], sizes = [1, 4, 16], strides = [1, 1, 1]} : vector<1x4x256xf32> to vector<1x4x16xf32>
    %26 = arith.maximumf %8, %25 : vector<1x4x16xf32>
    %27 = arith.addf %8, %25 : vector<1x4x16xf32>
    %c1_i32 = arith.constant 1 : i32
    %28 = vector.broadcast %c1_i32 : i32 to vector<1x1x16xi32>
    %29 = arith.cmpi eq, %5, %28 : vector<1x1x16xi32>
    %cst_8 = arith.constant dense<0xFF800000> : vector<1x4xf32>
    %30 = vector.multi_reduction <maximumf>, %25, %cst_8 [2] : vector<1x4x16xf32> to vector<1x4xf32>
    %31 = vector.shape_cast %30 : vector<1x4xf32> to vector<1x4x1xf32>
    %32 = vector.shape_cast %29 : vector<1x1x16xi1> to vector<1x1x16xi1>
    %33 = vector.broadcast %32 : vector<1x1x16xi1> to vector<1x4x16xi1>
    %34 = vector.shape_cast %31 : vector<1x4x1xf32> to vector<1x4x1xf32>
    %35 = vector.broadcast %34 : vector<1x4x1xf32> to vector<1x4x16xf32>
    %36 = arith.select %33, %35, %17 : vector<1x4x16xi1>, vector<1x4x16xf32>
    %cst_9 = arith.constant dense<0.000000e+00> : vector<1x4xf32>
    %37 = vector.multi_reduction <add>, %25, %cst_9 [2] : vector<1x4x16xf32> to vector<1x4xf32>
    %38 = vector.shape_cast %37 : vector<1x4xf32> to vector<1x4x1xf32>
    %39 = vector.shape_cast %29 : vector<1x1x16xi1> to vector<1x1x16xi1>
    %40 = vector.broadcast %39 : vector<1x1x16xi1> to vector<1x4x16xi1>
    %41 = vector.shape_cast %38 : vector<1x4x1xf32> to vector<1x4x1xf32>
    %42 = vector.broadcast %41 : vector<1x4x1xf32> to vector<1x4x16xf32>
    %43 = arith.select %40, %42, %24 : vector<1x4x16xi1>, vector<1x4x16xf32>
    %44 = vector.extract_strided_slice %0 {offsets = [0, 0, 32], sizes = [1, 4, 16], strides = [1, 1, 1]} : vector<1x4x256xf32> to vector<1x4x16xf32>
    %45 = arith.maximumf %26, %44 : vector<1x4x16xf32>
    %46 = arith.addf %27, %44 : vector<1x4x16xf32>
    %c2_i32 = arith.constant 2 : i32
    %47 = vector.broadcast %c2_i32 : i32 to vector<1x1x16xi32>
    %48 = arith.cmpi eq, %5, %47 : vector<1x1x16xi32>
    %cst_10 = arith.constant dense<0xFF800000> : vector<1x4xf32>
    %49 = vector.multi_reduction <maximumf>, %44, %cst_10 [2] : vector<1x4x16xf32> to vector<1x4xf32>
    %50 = vector.shape_cast %49 : vector<1x4xf32> to vector<1x4x1xf32>
    %51 = vector.shape_cast %48 : vector<1x1x16xi1> to vector<1x1x16xi1>
    %52 = vector.broadcast %51 : vector<1x1x16xi1> to vector<1x4x16xi1>
    %53 = vector.shape_cast %50 : vector<1x4x1xf32> to vector<1x4x1xf32>
    %54 = vector.broadcast %53 : vector<1x4x1xf32> to vector<1x4x16xf32>
    %55 = arith.select %52, %54, %36 : vector<1x4x16xi1>, vector<1x4x16xf32>
    %cst_11 = arith.constant dense<0.000000e+00> : vector<1x4xf32>
    %56 = vector.multi_reduction <add>, %44, %cst_11 [2] : vector<1x4x16xf32> to vector<1x4xf32>
    %57 = vector.shape_cast %56 : vector<1x4xf32> to vector<1x4x1xf32>
    %58 = vector.shape_cast %48 : vector<1x1x16xi1> to vector<1x1x16xi1>
    %59 = vector.broadcast %58 : vector<1x1x16xi1> to vector<1x4x16xi1>
    %60 = vector.shape_cast %57 : vector<1x4x1xf32> to vector<1x4x1xf32>
    %61 = vector.broadcast %60 : vector<1x4x1xf32> to vector<1x4x16xf32>
    %62 = arith.select %59, %61, %43 : vector<1x4x16xi1>, vector<1x4x16xf32>
    %63 = vector.extract_strided_slice %0 {offsets = [0, 0, 48], sizes = [1, 4, 16], strides = [1, 1, 1]} : vector<1x4x256xf32> to vector<1x4x16xf32>
    %64 = arith.maximumf %45, %63 : vector<1x4x16xf32>
    %65 = arith.addf %46, %63 : vector<1x4x16xf32>
    %c3_i32 = arith.constant 3 : i32
    %66 = vector.broadcast %c3_i32 : i32 to vector<1x1x16xi32>
    %67 = arith.cmpi eq, %5, %66 : vector<1x1x16xi32>
    %cst_12 = arith.constant dense<0xFF800000> : vector<1x4xf32>
    %68 = vector.multi_reduction <maximumf>, %63, %cst_12 [2] : vector<1x4x16xf32> to vector<1x4xf32>
    %69 = vector.shape_cast %68 : vector<1x4xf32> to vector<1x4x1xf32>
    %70 = vector.shape_cast %67 : vector<1x1x16xi1> to vector<1x1x16xi1>
    %71 = vector.broadcast %70 : vector<1x1x16xi1> to vector<1x4x16xi1>
    %72 = vector.shape_cast %69 : vector<1x4x1xf32> to vector<1x4x1xf32>
    %73 = vector.broadcast %72 : vector<1x4x1xf32> to vector<1x4x16xf32>
    %74 = arith.select %71, %73, %55 : vector<1x4x16xi1>, vector<1x4x16xf32>
    %cst_13 = arith.constant dense<0.000000e+00> : vector<1x4xf32>
    %75 = vector.multi_reduction <add>, %63, %cst_13 [2] : vector<1x4x16xf32> to vector<1x4xf32>
    %76 = vector.shape_cast %75 : vector<1x4xf32> to vector<1x4x1xf32>
    %77 = vector.shape_cast %67 : vector<1x1x16xi1> to vector<1x1x16xi1>
    %78 = vector.broadcast %77 : vector<1x1x16xi1> to vector<1x4x16xi1>
    %79 = vector.shape_cast %76 : vector<1x4x1xf32> to vector<1x4x1xf32>
    %80 = vector.broadcast %79 : vector<1x4x1xf32> to vector<1x4x16xf32>
    %81 = arith.select %78, %80, %62 : vector<1x4x16xi1>, vector<1x4x16xf32>
    %82 = vector.extract_strided_slice %0 {offsets = [0, 0, 64], sizes = [1, 4, 16], strides = [1, 1, 1]} : vector<1x4x256xf32> to vector<1x4x16xf32>
    %83 = arith.maximumf %64, %82 : vector<1x4x16xf32>
    %84 = arith.addf %65, %82 : vector<1x4x16xf32>
    %c4_i32 = arith.constant 4 : i32
    %85 = vector.broadcast %c4_i32 : i32 to vector<1x1x16xi32>
    %86 = arith.cmpi eq, %5, %85 : vector<1x1x16xi32>
    %cst_14 = arith.constant dense<0xFF800000> : vector<1x4xf32>
    %87 = vector.multi_reduction <maximumf>, %82, %cst_14 [2] : vector<1x4x16xf32> to vector<1x4xf32>
    %88 = vector.shape_cast %87 : vector<1x4xf32> to vector<1x4x1xf32>
    %89 = vector.shape_cast %86 : vector<1x1x16xi1> to vector<1x1x16xi1>
    %90 = vector.broadcast %89 : vector<1x1x16xi1> to vector<1x4x16xi1>
    %91 = vector.shape_cast %88 : vector<1x4x1xf32> to vector<1x4x1xf32>
    %92 = vector.broadcast %91 : vector<1x4x1xf32> to vector<1x4x16xf32>
    %93 = arith.select %90, %92, %74 : vector<1x4x16xi1>, vector<1x4x16xf32>
    %cst_15 = arith.constant dense<0.000000e+00> : vector<1x4xf32>
    %94 = vector.multi_reduction <add>, %82, %cst_15 [2] : vector<1x4x16xf32> to vector<1x4xf32>
    %95 = vector.shape_cast %94 : vector<1x4xf32> to vector<1x4x1xf32>
    %96 = vector.shape_cast %86 : vector<1x1x16xi1> to vector<1x1x16xi1>
    %97 = vector.broadcast %96 : vector<1x1x16xi1> to vector<1x4x16xi1>
    %98 = vector.shape_cast %95 : vector<1x4x1xf32> to vector<1x4x1xf32>
    %99 = vector.broadcast %98 : vector<1x4x1xf32> to vector<1x4x16xf32>
    %100 = arith.select %97, %99, %81 : vector<1x4x16xi1>, vector<1x4x16xf32>
    %101 = vector.extract_strided_slice %0 {offsets = [0, 0, 80], sizes = [1, 4, 16], strides = [1, 1, 1]} : vector<1x4x256xf32> to vector<1x4x16xf32>
    %102 = arith.maximumf %83, %101 : vector<1x4x16xf32>
    %103 = arith.addf %84, %101 : vector<1x4x16xf32>
    %c5_i32 = arith.constant 5 : i32
    %104 = vector.broadcast %c5_i32 : i32 to vector<1x1x16xi32>
    %105 = arith.cmpi eq, %5, %104 : vector<1x1x16xi32>
    %cst_16 = arith.constant dense<0xFF800000> : vector<1x4xf32>
    %106 = vector.multi_reduction <maximumf>, %101, %cst_16 [2] : vector<1x4x16xf32> to vector<1x4xf32>
    %107 = vector.shape_cast %106 : vector<1x4xf32> to vector<1x4x1xf32>
    %108 = vector.shape_cast %105 : vector<1x1x16xi1> to vector<1x1x16xi1>
    %109 = vector.broadcast %108 : vector<1x1x16xi1> to vector<1x4x16xi1>
    %110 = vector.shape_cast %107 : vector<1x4x1xf32> to vector<1x4x1xf32>
    %111 = vector.broadcast %110 : vector<1x4x1xf32> to vector<1x4x16xf32>
    %112 = arith.select %109, %111, %93 : vector<1x4x16xi1>, vector<1x4x16xf32>
    %cst_17 = arith.constant dense<0.000000e+00> : vector<1x4xf32>
    %113 = vector.multi_reduction <add>, %101, %cst_17 [2] : vector<1x4x16xf32> to vector<1x4xf32>
    %114 = vector.shape_cast %113 : vector<1x4xf32> to vector<1x4x1xf32>
    %115 = vector.shape_cast %105 : vector<1x1x16xi1> to vector<1x1x16xi1>
    %116 = vector.broadcast %115 : vector<1x1x16xi1> to vector<1x4x16xi1>
    %117 = vector.shape_cast %114 : vector<1x4x1xf32> to vector<1x4x1xf32>
    %118 = vector.broadcast %117 : vector<1x4x1xf32> to vector<1x4x16xf32>
    %119 = arith.select %116, %118, %100 : vector<1x4x16xi1>, vector<1x4x16xf32>
    %120 = vector.extract_strided_slice %0 {offsets = [0, 0, 96], sizes = [1, 4, 16], strides = [1, 1, 1]} : vector<1x4x256xf32> to vector<1x4x16xf32>
    %121 = arith.maximumf %102, %120 : vector<1x4x16xf32>
    %122 = arith.addf %103, %120 : vector<1x4x16xf32>
    %c6_i32 = arith.constant 6 : i32
    %123 = vector.broadcast %c6_i32 : i32 to vector<1x1x16xi32>
    %124 = arith.cmpi eq, %5, %123 : vector<1x1x16xi32>
    %cst_18 = arith.constant dense<0xFF800000> : vector<1x4xf32>
    %125 = vector.multi_reduction <maximumf>, %120, %cst_18 [2] : vector<1x4x16xf32> to vector<1x4xf32>
    %126 = vector.shape_cast %125 : vector<1x4xf32> to vector<1x4x1xf32>
    %127 = vector.shape_cast %124 : vector<1x1x16xi1> to vector<1x1x16xi1>
    %128 = vector.broadcast %127 : vector<1x1x16xi1> to vector<1x4x16xi1>
    %129 = vector.shape_cast %126 : vector<1x4x1xf32> to vector<1x4x1xf32>
    %130 = vector.broadcast %129 : vector<1x4x1xf32> to vector<1x4x16xf32>
    %131 = arith.select %128, %130, %112 : vector<1x4x16xi1>, vector<1x4x16xf32>
    %cst_19 = arith.constant dense<0.000000e+00> : vector<1x4xf32>
    %132 = vector.multi_reduction <add>, %120, %cst_19 [2] : vector<1x4x16xf32> to vector<1x4xf32>
    %133 = vector.shape_cast %132 : vector<1x4xf32> to vector<1x4x1xf32>
    %134 = vector.shape_cast %124 : vector<1x1x16xi1> to vector<1x1x16xi1>
    %135 = vector.broadcast %134 : vector<1x1x16xi1> to vector<1x4x16xi1>
    %136 = vector.shape_cast %133 : vector<1x4x1xf32> to vector<1x4x1xf32>
    %137 = vector.broadcast %136 : vector<1x4x1xf32> to vector<1x4x16xf32>
    %138 = arith.select %135, %137, %119 : vector<1x4x16xi1>, vector<1x4x16xf32>
    %139 = vector.extract_strided_slice %0 {offsets = [0, 0, 112], sizes = [1, 4, 16], strides = [1, 1, 1]} : vector<1x4x256xf32> to vector<1x4x16xf32>
    %140 = arith.maximumf %121, %139 : vector<1x4x16xf32>
    %141 = arith.addf %122, %139 : vector<1x4x16xf32>
    %c7_i32 = arith.constant 7 : i32
    %142 = vector.broadcast %c7_i32 : i32 to vector<1x1x16xi32>
    %143 = arith.cmpi eq, %5, %142 : vector<1x1x16xi32>
    %cst_20 = arith.constant dense<0xFF800000> : vector<1x4xf32>
    %144 = vector.multi_reduction <maximumf>, %139, %cst_20 [2] : vector<1x4x16xf32> to vector<1x4xf32>
    %145 = vector.shape_cast %144 : vector<1x4xf32> to vector<1x4x1xf32>
    %146 = vector.shape_cast %143 : vector<1x1x16xi1> to vector<1x1x16xi1>
    %147 = vector.broadcast %146 : vector<1x1x16xi1> to vector<1x4x16xi1>
    %148 = vector.shape_cast %145 : vector<1x4x1xf32> to vector<1x4x1xf32>
    %149 = vector.broadcast %148 : vector<1x4x1xf32> to vector<1x4x16xf32>
    %150 = arith.select %147, %149, %131 : vector<1x4x16xi1>, vector<1x4x16xf32>
    %cst_21 = arith.constant dense<0.000000e+00> : vector<1x4xf32>
    %151 = vector.multi_reduction <add>, %139, %cst_21 [2] : vector<1x4x16xf32> to vector<1x4xf32>
    %152 = vector.shape_cast %151 : vector<1x4xf32> to vector<1x4x1xf32>
    %153 = vector.shape_cast %143 : vector<1x1x16xi1> to vector<1x1x16xi1>
    %154 = vector.broadcast %153 : vector<1x1x16xi1> to vector<1x4x16xi1>
    %155 = vector.shape_cast %152 : vector<1x4x1xf32> to vector<1x4x1xf32>
    %156 = vector.broadcast %155 : vector<1x4x1xf32> to vector<1x4x16xf32>
    %157 = arith.select %154, %156, %138 : vector<1x4x16xi1>, vector<1x4x16xf32>
    %158 = vector.extract_strided_slice %0 {offsets = [0, 0, 128], sizes = [1, 4, 16], strides = [1, 1, 1]} : vector<1x4x256xf32> to vector<1x4x16xf32>
    %159 = arith.maximumf %140, %158 : vector<1x4x16xf32>
    %160 = arith.addf %141, %158 : vector<1x4x16xf32>
    %c8_i32 = arith.constant 8 : i32
    %161 = vector.broadcast %c8_i32 : i32 to vector<1x1x16xi32>
    %162 = arith.cmpi eq, %5, %161 : vector<1x1x16xi32>
    %cst_22 = arith.constant dense<0xFF800000> : vector<1x4xf32>
    %163 = vector.multi_reduction <maximumf>, %158, %cst_22 [2] : vector<1x4x16xf32> to vector<1x4xf32>
    %164 = vector.shape_cast %163 : vector<1x4xf32> to vector<1x4x1xf32>
    %165 = vector.shape_cast %162 : vector<1x1x16xi1> to vector<1x1x16xi1>
    %166 = vector.broadcast %165 : vector<1x1x16xi1> to vector<1x4x16xi1>
    %167 = vector.shape_cast %164 : vector<1x4x1xf32> to vector<1x4x1xf32>
    %168 = vector.broadcast %167 : vector<1x4x1xf32> to vector<1x4x16xf32>
    %169 = arith.select %166, %168, %150 : vector<1x4x16xi1>, vector<1x4x16xf32>
    %cst_23 = arith.constant dense<0.000000e+00> : vector<1x4xf32>
    %170 = vector.multi_reduction <add>, %158, %cst_23 [2] : vector<1x4x16xf32> to vector<1x4xf32>
    %171 = vector.shape_cast %170 : vector<1x4xf32> to vector<1x4x1xf32>
    %172 = vector.shape_cast %162 : vector<1x1x16xi1> to vector<1x1x16xi1>
    %173 = vector.broadcast %172 : vector<1x1x16xi1> to vector<1x4x16xi1>
    %174 = vector.shape_cast %171 : vector<1x4x1xf32> to vector<1x4x1xf32>
    %175 = vector.broadcast %174 : vector<1x4x1xf32> to vector<1x4x16xf32>
    %176 = arith.select %173, %175, %157 : vector<1x4x16xi1>, vector<1x4x16xf32>
    %177 = vector.extract_strided_slice %0 {offsets = [0, 0, 144], sizes = [1, 4, 16], strides = [1, 1, 1]} : vector<1x4x256xf32> to vector<1x4x16xf32>
    %178 = arith.maximumf %159, %177 : vector<1x4x16xf32>
    %179 = arith.addf %160, %177 : vector<1x4x16xf32>
    %c9_i32 = arith.constant 9 : i32
    %180 = vector.broadcast %c9_i32 : i32 to vector<1x1x16xi32>
    %181 = arith.cmpi eq, %5, %180 : vector<1x1x16xi32>
    %cst_24 = arith.constant dense<0xFF800000> : vector<1x4xf32>
    %182 = vector.multi_reduction <maximumf>, %177, %cst_24 [2] : vector<1x4x16xf32> to vector<1x4xf32>
    %183 = vector.shape_cast %182 : vector<1x4xf32> to vector<1x4x1xf32>
    %184 = vector.shape_cast %181 : vector<1x1x16xi1> to vector<1x1x16xi1>
    %185 = vector.broadcast %184 : vector<1x1x16xi1> to vector<1x4x16xi1>
    %186 = vector.shape_cast %183 : vector<1x4x1xf32> to vector<1x4x1xf32>
    %187 = vector.broadcast %186 : vector<1x4x1xf32> to vector<1x4x16xf32>
    %188 = arith.select %185, %187, %169 : vector<1x4x16xi1>, vector<1x4x16xf32>
    %cst_25 = arith.constant dense<0.000000e+00> : vector<1x4xf32>
    %189 = vector.multi_reduction <add>, %177, %cst_25 [2] : vector<1x4x16xf32> to vector<1x4xf32>
    %190 = vector.shape_cast %189 : vector<1x4xf32> to vector<1x4x1xf32>
    %191 = vector.shape_cast %181 : vector<1x1x16xi1> to vector<1x1x16xi1>
    %192 = vector.broadcast %191 : vector<1x1x16xi1> to vector<1x4x16xi1>
    %193 = vector.shape_cast %190 : vector<1x4x1xf32> to vector<1x4x1xf32>
    %194 = vector.broadcast %193 : vector<1x4x1xf32> to vector<1x4x16xf32>
    %195 = arith.select %192, %194, %176 : vector<1x4x16xi1>, vector<1x4x16xf32>
    %196 = vector.extract_strided_slice %0 {offsets = [0, 0, 160], sizes = [1, 4, 16], strides = [1, 1, 1]} : vector<1x4x256xf32> to vector<1x4x16xf32>
    %197 = arith.maximumf %178, %196 : vector<1x4x16xf32>
    %198 = arith.addf %179, %196 : vector<1x4x16xf32>
    %c10_i32 = arith.constant 10 : i32
    %199 = vector.broadcast %c10_i32 : i32 to vector<1x1x16xi32>
    %200 = arith.cmpi eq, %5, %199 : vector<1x1x16xi32>
    %cst_26 = arith.constant dense<0xFF800000> : vector<1x4xf32>
    %201 = vector.multi_reduction <maximumf>, %196, %cst_26 [2] : vector<1x4x16xf32> to vector<1x4xf32>
    %202 = vector.shape_cast %201 : vector<1x4xf32> to vector<1x4x1xf32>
    %203 = vector.shape_cast %200 : vector<1x1x16xi1> to vector<1x1x16xi1>
    %204 = vector.broadcast %203 : vector<1x1x16xi1> to vector<1x4x16xi1>
    %205 = vector.shape_cast %202 : vector<1x4x1xf32> to vector<1x4x1xf32>
    %206 = vector.broadcast %205 : vector<1x4x1xf32> to vector<1x4x16xf32>
    %207 = arith.select %204, %206, %188 : vector<1x4x16xi1>, vector<1x4x16xf32>
    %cst_27 = arith.constant dense<0.000000e+00> : vector<1x4xf32>
    %208 = vector.multi_reduction <add>, %196, %cst_27 [2] : vector<1x4x16xf32> to vector<1x4xf32>
    %209 = vector.shape_cast %208 : vector<1x4xf32> to vector<1x4x1xf32>
    %210 = vector.shape_cast %200 : vector<1x1x16xi1> to vector<1x1x16xi1>
    %211 = vector.broadcast %210 : vector<1x1x16xi1> to vector<1x4x16xi1>
    %212 = vector.shape_cast %209 : vector<1x4x1xf32> to vector<1x4x1xf32>
    %213 = vector.broadcast %212 : vector<1x4x1xf32> to vector<1x4x16xf32>
    %214 = arith.select %211, %213, %195 : vector<1x4x16xi1>, vector<1x4x16xf32>
    %215 = vector.extract_strided_slice %0 {offsets = [0, 0, 176], sizes = [1, 4, 16], strides = [1, 1, 1]} : vector<1x4x256xf32> to vector<1x4x16xf32>
    %216 = arith.maximumf %197, %215 : vector<1x4x16xf32>
    %217 = arith.addf %198, %215 : vector<1x4x16xf32>
    %c11_i32 = arith.constant 11 : i32
    %218 = vector.broadcast %c11_i32 : i32 to vector<1x1x16xi32>
    %219 = arith.cmpi eq, %5, %218 : vector<1x1x16xi32>
    %cst_28 = arith.constant dense<0xFF800000> : vector<1x4xf32>
    %220 = vector.multi_reduction <maximumf>, %215, %cst_28 [2] : vector<1x4x16xf32> to vector<1x4xf32>
    %221 = vector.shape_cast %220 : vector<1x4xf32> to vector<1x4x1xf32>
    %222 = vector.shape_cast %219 : vector<1x1x16xi1> to vector<1x1x16xi1>
    %223 = vector.broadcast %222 : vector<1x1x16xi1> to vector<1x4x16xi1>
    %224 = vector.shape_cast %221 : vector<1x4x1xf32> to vector<1x4x1xf32>
    %225 = vector.broadcast %224 : vector<1x4x1xf32> to vector<1x4x16xf32>
    %226 = arith.select %223, %225, %207 : vector<1x4x16xi1>, vector<1x4x16xf32>
    %cst_29 = arith.constant dense<0.000000e+00> : vector<1x4xf32>
    %227 = vector.multi_reduction <add>, %215, %cst_29 [2] : vector<1x4x16xf32> to vector<1x4xf32>
    %228 = vector.shape_cast %227 : vector<1x4xf32> to vector<1x4x1xf32>
    %229 = vector.shape_cast %219 : vector<1x1x16xi1> to vector<1x1x16xi1>
    %230 = vector.broadcast %229 : vector<1x1x16xi1> to vector<1x4x16xi1>
    %231 = vector.shape_cast %228 : vector<1x4x1xf32> to vector<1x4x1xf32>
    %232 = vector.broadcast %231 : vector<1x4x1xf32> to vector<1x4x16xf32>
    %233 = arith.select %230, %232, %214 : vector<1x4x16xi1>, vector<1x4x16xf32>
    %234 = vector.extract_strided_slice %0 {offsets = [0, 0, 192], sizes = [1, 4, 16], strides = [1, 1, 1]} : vector<1x4x256xf32> to vector<1x4x16xf32>
    %235 = arith.maximumf %216, %234 : vector<1x4x16xf32>
    %236 = arith.addf %217, %234 : vector<1x4x16xf32>
    %c12_i32 = arith.constant 12 : i32
    %237 = vector.broadcast %c12_i32 : i32 to vector<1x1x16xi32>
    %238 = arith.cmpi eq, %5, %237 : vector<1x1x16xi32>
    %cst_30 = arith.constant dense<0xFF800000> : vector<1x4xf32>
    %239 = vector.multi_reduction <maximumf>, %234, %cst_30 [2] : vector<1x4x16xf32> to vector<1x4xf32>
    %240 = vector.shape_cast %239 : vector<1x4xf32> to vector<1x4x1xf32>
    %241 = vector.shape_cast %238 : vector<1x1x16xi1> to vector<1x1x16xi1>
    %242 = vector.broadcast %241 : vector<1x1x16xi1> to vector<1x4x16xi1>
    %243 = vector.shape_cast %240 : vector<1x4x1xf32> to vector<1x4x1xf32>
    %244 = vector.broadcast %243 : vector<1x4x1xf32> to vector<1x4x16xf32>
    %245 = arith.select %242, %244, %226 : vector<1x4x16xi1>, vector<1x4x16xf32>
    %cst_31 = arith.constant dense<0.000000e+00> : vector<1x4xf32>
    %246 = vector.multi_reduction <add>, %234, %cst_31 [2] : vector<1x4x16xf32> to vector<1x4xf32>
    %247 = vector.shape_cast %246 : vector<1x4xf32> to vector<1x4x1xf32>
    %248 = vector.shape_cast %238 : vector<1x1x16xi1> to vector<1x1x16xi1>
    %249 = vector.broadcast %248 : vector<1x1x16xi1> to vector<1x4x16xi1>
    %250 = vector.shape_cast %247 : vector<1x4x1xf32> to vector<1x4x1xf32>
    %251 = vector.broadcast %250 : vector<1x4x1xf32> to vector<1x4x16xf32>
    %252 = arith.select %249, %251, %233 : vector<1x4x16xi1>, vector<1x4x16xf32>
    %253 = vector.extract_strided_slice %0 {offsets = [0, 0, 208], sizes = [1, 4, 16], strides = [1, 1, 1]} : vector<1x4x256xf32> to vector<1x4x16xf32>
    %254 = arith.maximumf %235, %253 : vector<1x4x16xf32>
    %255 = arith.addf %236, %253 : vector<1x4x16xf32>
    %c13_i32 = arith.constant 13 : i32
    %256 = vector.broadcast %c13_i32 : i32 to vector<1x1x16xi32>
    %257 = arith.cmpi eq, %5, %256 : vector<1x1x16xi32>
    %cst_32 = arith.constant dense<0xFF800000> : vector<1x4xf32>
    %258 = vector.multi_reduction <maximumf>, %253, %cst_32 [2] : vector<1x4x16xf32> to vector<1x4xf32>
    %259 = vector.shape_cast %258 : vector<1x4xf32> to vector<1x4x1xf32>
    %260 = vector.shape_cast %257 : vector<1x1x16xi1> to vector<1x1x16xi1>
    %261 = vector.broadcast %260 : vector<1x1x16xi1> to vector<1x4x16xi1>
    %262 = vector.shape_cast %259 : vector<1x4x1xf32> to vector<1x4x1xf32>
    %263 = vector.broadcast %262 : vector<1x4x1xf32> to vector<1x4x16xf32>
    %264 = arith.select %261, %263, %245 : vector<1x4x16xi1>, vector<1x4x16xf32>
    %cst_33 = arith.constant dense<0.000000e+00> : vector<1x4xf32>
    %265 = vector.multi_reduction <add>, %253, %cst_33 [2] : vector<1x4x16xf32> to vector<1x4xf32>
    %266 = vector.shape_cast %265 : vector<1x4xf32> to vector<1x4x1xf32>
    %267 = vector.shape_cast %257 : vector<1x1x16xi1> to vector<1x1x16xi1>
    %268 = vector.broadcast %267 : vector<1x1x16xi1> to vector<1x4x16xi1>
    %269 = vector.shape_cast %266 : vector<1x4x1xf32> to vector<1x4x1xf32>
    %270 = vector.broadcast %269 : vector<1x4x1xf32> to vector<1x4x16xf32>
    %271 = arith.select %268, %270, %252 : vector<1x4x16xi1>, vector<1x4x16xf32>
    %272 = vector.extract_strided_slice %0 {offsets = [0, 0, 224], sizes = [1, 4, 16], strides = [1, 1, 1]} : vector<1x4x256xf32> to vector<1x4x16xf32>
    %273 = arith.maximumf %254, %272 : vector<1x4x16xf32>
    %274 = arith.addf %255, %272 : vector<1x4x16xf32>
    %c14_i32 = arith.constant 14 : i32
    %275 = vector.broadcast %c14_i32 : i32 to vector<1x1x16xi32>
    %276 = arith.cmpi eq, %5, %275 : vector<1x1x16xi32>
    %cst_34 = arith.constant dense<0xFF800000> : vector<1x4xf32>
    %277 = vector.multi_reduction <maximumf>, %272, %cst_34 [2] : vector<1x4x16xf32> to vector<1x4xf32>
    %278 = vector.shape_cast %277 : vector<1x4xf32> to vector<1x4x1xf32>
    %279 = vector.shape_cast %276 : vector<1x1x16xi1> to vector<1x1x16xi1>
    %280 = vector.broadcast %279 : vector<1x1x16xi1> to vector<1x4x16xi1>
    %281 = vector.shape_cast %278 : vector<1x4x1xf32> to vector<1x4x1xf32>
    %282 = vector.broadcast %281 : vector<1x4x1xf32> to vector<1x4x16xf32>
    %283 = arith.select %280, %282, %264 : vector<1x4x16xi1>, vector<1x4x16xf32>
    %cst_35 = arith.constant dense<0.000000e+00> : vector<1x4xf32>
    %284 = vector.multi_reduction <add>, %272, %cst_35 [2] : vector<1x4x16xf32> to vector<1x4xf32>
    %285 = vector.shape_cast %284 : vector<1x4xf32> to vector<1x4x1xf32>
    %286 = vector.shape_cast %276 : vector<1x1x16xi1> to vector<1x1x16xi1>
    %287 = vector.broadcast %286 : vector<1x1x16xi1> to vector<1x4x16xi1>
    %288 = vector.shape_cast %285 : vector<1x4x1xf32> to vector<1x4x1xf32>
    %289 = vector.broadcast %288 : vector<1x4x1xf32> to vector<1x4x16xf32>
    %290 = arith.select %287, %289, %271 : vector<1x4x16xi1>, vector<1x4x16xf32>
    %291 = vector.extract_strided_slice %0 {offsets = [0, 0, 240], sizes = [1, 4, 16], strides = [1, 1, 1]} : vector<1x4x256xf32> to vector<1x4x16xf32>
    %292 = arith.maximumf %273, %291 : vector<1x4x16xf32>
    %293 = arith.addf %274, %291 : vector<1x4x16xf32>
    %c15_i32 = arith.constant 15 : i32
    %294 = vector.broadcast %c15_i32 : i32 to vector<1x1x16xi32>
    %295 = arith.cmpi eq, %5, %294 : vector<1x1x16xi32>
    %cst_36 = arith.constant dense<0xFF800000> : vector<1x4xf32>
    %296 = vector.multi_reduction <maximumf>, %291, %cst_36 [2] : vector<1x4x16xf32> to vector<1x4xf32>
    %297 = vector.shape_cast %296 : vector<1x4xf32> to vector<1x4x1xf32>
    %298 = vector.shape_cast %295 : vector<1x1x16xi1> to vector<1x1x16xi1>
    %299 = vector.broadcast %298 : vector<1x1x16xi1> to vector<1x4x16xi1>
    %300 = vector.shape_cast %297 : vector<1x4x1xf32> to vector<1x4x1xf32>
    %301 = vector.broadcast %300 : vector<1x4x1xf32> to vector<1x4x16xf32>
    %302 = arith.select %299, %301, %283 : vector<1x4x16xi1>, vector<1x4x16xf32>
    %cst_37 = arith.constant dense<0.000000e+00> : vector<1x4xf32>
    %303 = vector.multi_reduction <add>, %291, %cst_37 [2] : vector<1x4x16xf32> to vector<1x4xf32>
    %304 = vector.shape_cast %303 : vector<1x4xf32> to vector<1x4x1xf32>
    %305 = vector.shape_cast %295 : vector<1x1x16xi1> to vector<1x1x16xi1>
    %306 = vector.broadcast %305 : vector<1x1x16xi1> to vector<1x4x16xi1>
    %307 = vector.shape_cast %304 : vector<1x4x1xf32> to vector<1x4x1xf32>
    %308 = vector.broadcast %307 : vector<1x4x1xf32> to vector<1x4x16xf32>
    %309 = arith.select %306, %308, %290 : vector<1x4x16xi1>, vector<1x4x16xf32>
    %cst_38 = arith.constant 6.250000e-02 : f32
    %310 = vector.broadcast %cst_38 : f32 to vector<1x4x16xf32>
    %311 = arith.mulf %293, %310 : vector<1x4x16xf32>
    %cst_39 = arith.constant 6.250000e-02 : f32
    %312 = vector.broadcast %cst_39 : f32 to vector<1x4x16xf32>
    %313 = arith.mulf %309, %312 : vector<1x4x16xf32>
    %314 = tpu.iota {dimensions = array<i32: 1>} : vector<1x16xi32>
    %315 = tpu.concatenate %314, %314, %314, %314, %314, %314, %314, %314, %314, %314, %314, %314, %314, %314, %314, %314 in 1 : vector<1x16xi32>, vector<1x16xi32>, vector<1x16xi32>, vector<1x16xi32>, vector<1x16xi32>, vector<1x16xi32>, vector<1x16xi32>, vector<1x16xi32>, vector<1x16xi32>, vector<1x16xi32>, vector<1x16xi32>, vector<1x16xi32>, vector<1x16xi32>, vector<1x16xi32>, vector<1x16xi32>, vector<1x16xi32> -> vector<1x256xi32>
    %c-3_i32 = arith.constant -3 : i32
    %316 = vector.broadcast %c-3_i32 : i32 to vector<1x256xi32>
    %317 = arith.addi %315, %316 : vector<1x256xi32>
    %c0_i32_40 = arith.constant 0 : i32
    %318 = vector.broadcast %c0_i32_40 : i32 to vector<1x256xi32>
    %319 = arith.cmpi sge, %317, %318 : vector<1x256xi32>
    %c-3_i32_41 = arith.constant -3 : i32
    %320 = vector.broadcast %c-3_i32_41 : i32 to vector<1x256xi32>
    %321 = arith.addi %315, %320 : vector<1x256xi32>
    %c16_i32 = arith.constant 16 : i32
    %322 = vector.broadcast %c16_i32 : i32 to vector<1x256xi32>
    %323 = arith.cmpi slt, %321, %322 : vector<1x256xi32>
    %324 = arith.andi %319, %323 : vector<1x256xi1>
    %c-2_i32 = arith.constant -2 : i32
    %325 = vector.broadcast %c-2_i32 : i32 to vector<1x256xi32>
    %326 = arith.addi %315, %325 : vector<1x256xi32>
    %c0_i32_42 = arith.constant 0 : i32
    %327 = vector.broadcast %c0_i32_42 : i32 to vector<1x256xi32>
    %328 = arith.cmpi sge, %326, %327 : vector<1x256xi32>
    %c-2_i32_43 = arith.constant -2 : i32
    %329 = vector.broadcast %c-2_i32_43 : i32 to vector<1x256xi32>
    %330 = arith.addi %315, %329 : vector<1x256xi32>
    %c16_i32_44 = arith.constant 16 : i32
    %331 = vector.broadcast %c16_i32_44 : i32 to vector<1x256xi32>
    %332 = arith.cmpi slt, %330, %331 : vector<1x256xi32>
    %333 = arith.andi %328, %332 : vector<1x256xi1>
    %c-1_i32 = arith.constant -1 : i32
    %334 = vector.broadcast %c-1_i32 : i32 to vector<1x256xi32>
    %335 = arith.addi %315, %334 : vector<1x256xi32>
    %c0_i32_45 = arith.constant 0 : i32
    %336 = vector.broadcast %c0_i32_45 : i32 to vector<1x256xi32>
    %337 = arith.cmpi sge, %335, %336 : vector<1x256xi32>
    %c-1_i32_46 = arith.constant -1 : i32
    %338 = vector.broadcast %c-1_i32_46 : i32 to vector<1x256xi32>
    %339 = arith.addi %315, %338 : vector<1x256xi32>
    %c16_i32_47 = arith.constant 16 : i32
    %340 = vector.broadcast %c16_i32_47 : i32 to vector<1x256xi32>
    %341 = arith.cmpi slt, %339, %340 : vector<1x256xi32>
    %342 = arith.andi %337, %341 : vector<1x256xi1>
    %c1_i32_48 = arith.constant 1 : i32
    %343 = vector.broadcast %c1_i32_48 : i32 to vector<1x256xi32>
    %344 = arith.addi %315, %343 : vector<1x256xi32>
    %c0_i32_49 = arith.constant 0 : i32
    %345 = vector.broadcast %c0_i32_49 : i32 to vector<1x256xi32>
    %346 = arith.cmpi sge, %344, %345 : vector<1x256xi32>
    %c1_i32_50 = arith.constant 1 : i32
    %347 = vector.broadcast %c1_i32_50 : i32 to vector<1x256xi32>
    %348 = arith.addi %315, %347 : vector<1x256xi32>
    %c16_i32_51 = arith.constant 16 : i32
    %349 = vector.broadcast %c16_i32_51 : i32 to vector<1x256xi32>
    %350 = arith.cmpi slt, %348, %349 : vector<1x256xi32>
    %351 = arith.andi %346, %350 : vector<1x256xi1>
    %c2_i32_52 = arith.constant 2 : i32
    %352 = vector.broadcast %c2_i32_52 : i32 to vector<1x256xi32>
    %353 = arith.addi %315, %352 : vector<1x256xi32>
    %c0_i32_53 = arith.constant 0 : i32
    %354 = vector.broadcast %c0_i32_53 : i32 to vector<1x256xi32>
    %355 = arith.cmpi sge, %353, %354 : vector<1x256xi32>
    %c2_i32_54 = arith.constant 2 : i32
    %356 = vector.broadcast %c2_i32_54 : i32 to vector<1x256xi32>
    %357 = arith.addi %315, %356 : vector<1x256xi32>
    %c16_i32_55 = arith.constant 16 : i32
    %358 = vector.broadcast %c16_i32_55 : i32 to vector<1x256xi32>
    %359 = arith.cmpi slt, %357, %358 : vector<1x256xi32>
    %360 = arith.andi %355, %359 : vector<1x256xi1>
    %c3_i32_56 = arith.constant 3 : i32
    %361 = vector.broadcast %c3_i32_56 : i32 to vector<1x256xi32>
    %362 = arith.addi %315, %361 : vector<1x256xi32>
    %c0_i32_57 = arith.constant 0 : i32
    %363 = vector.broadcast %c0_i32_57 : i32 to vector<1x256xi32>
    %364 = arith.cmpi sge, %362, %363 : vector<1x256xi32>
    %c3_i32_58 = arith.constant 3 : i32
    %365 = vector.broadcast %c3_i32_58 : i32 to vector<1x256xi32>
    %366 = arith.addi %315, %365 : vector<1x256xi32>
    %c16_i32_59 = arith.constant 16 : i32
    %367 = vector.broadcast %c16_i32_59 : i32 to vector<1x256xi32>
    %368 = arith.cmpi slt, %366, %367 : vector<1x256xi32>
    %369 = arith.andi %364, %368 : vector<1x256xi1>
    %cst_60 = arith.constant 0.000000e+00 : f32
    %370 = vector.broadcast %cst_60 : f32 to vector<1x4x3xf32>
    %371 = vector.extract_strided_slice %292 {offsets = [0, 0, 0], sizes = [1, 4, 13], strides = [1, 1, 1]} : vector<1x4x16xf32> to vector<1x4x13xf32>
    %372 = tpu.concatenate %370, %371 in 2 : vector<1x4x3xf32>, vector<1x4x13xf32> -> vector<1x4x16xf32>
    %c0_61 = arith.constant 0 : index
    %373 = memref.load %arg1[%c0_61] : memref<294xf32, #tpu.memory_space<smem>>
    %374 = vector.broadcast %373 : f32 to vector<1x4x16xf32>
    %375 = arith.mulf %374, %372 : vector<1x4x16xf32>
    %c7 = arith.constant 7 : index
    %376 = memref.load %arg1[%c7] : memref<294xf32, #tpu.memory_space<smem>>
    %377 = vector.broadcast %376 : f32 to vector<1x4x16xf32>
    %378 = arith.mulf %377, %372 : vector<1x4x16xf32>
    %c14 = arith.constant 14 : index
    %379 = memref.load %arg1[%c14] : memref<294xf32, #tpu.memory_space<smem>>
    %380 = vector.broadcast %379 : f32 to vector<1x4x16xf32>
    %381 = arith.mulf %380, %372 : vector<1x4x16xf32>
    %c21 = arith.constant 21 : index
    %382 = memref.load %arg1[%c21] : memref<294xf32, #tpu.memory_space<smem>>
    %383 = vector.broadcast %382 : f32 to vector<1x4x16xf32>
    %384 = arith.mulf %383, %372 : vector<1x4x16xf32>
    %c28 = arith.constant 28 : index
    %385 = memref.load %arg1[%c28] : memref<294xf32, #tpu.memory_space<smem>>
    %386 = vector.broadcast %385 : f32 to vector<1x4x16xf32>
    %387 = arith.mulf %386, %372 : vector<1x4x16xf32>
    %c35 = arith.constant 35 : index
    %388 = memref.load %arg1[%c35] : memref<294xf32, #tpu.memory_space<smem>>
    %389 = vector.broadcast %388 : f32 to vector<1x4x16xf32>
    %390 = arith.mulf %389, %372 : vector<1x4x16xf32>
    %c42 = arith.constant 42 : index
    %391 = memref.load %arg1[%c42] : memref<294xf32, #tpu.memory_space<smem>>
    %392 = vector.broadcast %391 : f32 to vector<1x4x16xf32>
    %393 = arith.mulf %392, %372 : vector<1x4x16xf32>
    %cst_62 = arith.constant 0.000000e+00 : f32
    %394 = vector.broadcast %cst_62 : f32 to vector<1x4x3xf32>
    %395 = vector.extract_strided_slice %311 {offsets = [0, 0, 0], sizes = [1, 4, 13], strides = [1, 1, 1]} : vector<1x4x16xf32> to vector<1x4x13xf32>
    %396 = tpu.concatenate %394, %395 in 2 : vector<1x4x3xf32>, vector<1x4x13xf32> -> vector<1x4x16xf32>
    %c49 = arith.constant 49 : index
    %397 = memref.load %arg1[%c49] : memref<294xf32, #tpu.memory_space<smem>>
    %398 = vector.broadcast %397 : f32 to vector<1x4x16xf32>
    %399 = arith.mulf %398, %396 : vector<1x4x16xf32>
    %400 = arith.addf %375, %399 : vector<1x4x16xf32>
    %c56 = arith.constant 56 : index
    %401 = memref.load %arg1[%c56] : memref<294xf32, #tpu.memory_space<smem>>
    %402 = vector.broadcast %401 : f32 to vector<1x4x16xf32>
    %403 = arith.mulf %402, %396 : vector<1x4x16xf32>
    %404 = arith.addf %378, %403 : vector<1x4x16xf32>
    %c63 = arith.constant 63 : index
    %405 = memref.load %arg1[%c63] : memref<294xf32, #tpu.memory_space<smem>>
    %406 = vector.broadcast %405 : f32 to vector<1x4x16xf32>
    %407 = arith.mulf %406, %396 : vector<1x4x16xf32>
    %408 = arith.addf %381, %407 : vector<1x4x16xf32>
    %c70 = arith.constant 70 : index
    %409 = memref.load %arg1[%c70] : memref<294xf32, #tpu.memory_space<smem>>
    %410 = vector.broadcast %409 : f32 to vector<1x4x16xf32>
    %411 = arith.mulf %410, %396 : vector<1x4x16xf32>
    %412 = arith.addf %384, %411 : vector<1x4x16xf32>
    %c77 = arith.constant 77 : index
    %413 = memref.load %arg1[%c77] : memref<294xf32, #tpu.memory_space<smem>>
    %414 = vector.broadcast %413 : f32 to vector<1x4x16xf32>
    %415 = arith.mulf %414, %396 : vector<1x4x16xf32>
    %416 = arith.addf %387, %415 : vector<1x4x16xf32>
    %c84 = arith.constant 84 : index
    %417 = memref.load %arg1[%c84] : memref<294xf32, #tpu.memory_space<smem>>
    %418 = vector.broadcast %417 : f32 to vector<1x4x16xf32>
    %419 = arith.mulf %418, %396 : vector<1x4x16xf32>
    %420 = arith.addf %390, %419 : vector<1x4x16xf32>
    %c91 = arith.constant 91 : index
    %421 = memref.load %arg1[%c91] : memref<294xf32, #tpu.memory_space<smem>>
    %422 = vector.broadcast %421 : f32 to vector<1x4x16xf32>
    %423 = arith.mulf %422, %396 : vector<1x4x16xf32>
    %424 = arith.addf %393, %423 : vector<1x4x16xf32>
    %cst_63 = arith.constant 0.000000e+00 : f32
    %425 = vector.broadcast %cst_63 : f32 to vector<1x4x2xf32>
    %426 = vector.extract_strided_slice %292 {offsets = [0, 0, 0], sizes = [1, 4, 14], strides = [1, 1, 1]} : vector<1x4x16xf32> to vector<1x4x14xf32>
    %427 = tpu.concatenate %425, %426 in 2 : vector<1x4x2xf32>, vector<1x4x14xf32> -> vector<1x4x16xf32>
    %c1 = arith.constant 1 : index
    %428 = memref.load %arg1[%c1] : memref<294xf32, #tpu.memory_space<smem>>
    %429 = vector.broadcast %428 : f32 to vector<1x4x16xf32>
    %430 = arith.mulf %429, %427 : vector<1x4x16xf32>
    %431 = arith.addf %400, %430 : vector<1x4x16xf32>
    %c8 = arith.constant 8 : index
    %432 = memref.load %arg1[%c8] : memref<294xf32, #tpu.memory_space<smem>>
    %433 = vector.broadcast %432 : f32 to vector<1x4x16xf32>
    %434 = arith.mulf %433, %427 : vector<1x4x16xf32>
    %435 = arith.addf %404, %434 : vector<1x4x16xf32>
    %c15 = arith.constant 15 : index
    %436 = memref.load %arg1[%c15] : memref<294xf32, #tpu.memory_space<smem>>
    %437 = vector.broadcast %436 : f32 to vector<1x4x16xf32>
    %438 = arith.mulf %437, %427 : vector<1x4x16xf32>
    %439 = arith.addf %408, %438 : vector<1x4x16xf32>
    %c22 = arith.constant 22 : index
    %440 = memref.load %arg1[%c22] : memref<294xf32, #tpu.memory_space<smem>>
    %441 = vector.broadcast %440 : f32 to vector<1x4x16xf32>
    %442 = arith.mulf %441, %427 : vector<1x4x16xf32>
    %443 = arith.addf %412, %442 : vector<1x4x16xf32>
    %c29 = arith.constant 29 : index
    %444 = memref.load %arg1[%c29] : memref<294xf32, #tpu.memory_space<smem>>
    %445 = vector.broadcast %444 : f32 to vector<1x4x16xf32>
    %446 = arith.mulf %445, %427 : vector<1x4x16xf32>
    %447 = arith.addf %416, %446 : vector<1x4x16xf32>
    %c36 = arith.constant 36 : index
    %448 = memref.load %arg1[%c36] : memref<294xf32, #tpu.memory_space<smem>>
    %449 = vector.broadcast %448 : f32 to vector<1x4x16xf32>
    %450 = arith.mulf %449, %427 : vector<1x4x16xf32>
    %451 = arith.addf %420, %450 : vector<1x4x16xf32>
    %c43 = arith.constant 43 : index
    %452 = memref.load %arg1[%c43] : memref<294xf32, #tpu.memory_space<smem>>
    %453 = vector.broadcast %452 : f32 to vector<1x4x16xf32>
    %454 = arith.mulf %453, %427 : vector<1x4x16xf32>
    %455 = arith.addf %424, %454 : vector<1x4x16xf32>
    %cst_64 = arith.constant 0.000000e+00 : f32
    %456 = vector.broadcast %cst_64 : f32 to vector<1x4x2xf32>
    %457 = vector.extract_strided_slice %311 {offsets = [0, 0, 0], sizes = [1, 4, 14], strides = [1, 1, 1]} : vector<1x4x16xf32> to vector<1x4x14xf32>
    %458 = tpu.concatenate %456, %457 in 2 : vector<1x4x2xf32>, vector<1x4x14xf32> -> vector<1x4x16xf32>
    %c50 = arith.constant 50 : index
    %459 = memref.load %arg1[%c50] : memref<294xf32, #tpu.memory_space<smem>>
    %460 = vector.broadcast %459 : f32 to vector<1x4x16xf32>
    %461 = arith.mulf %460, %458 : vector<1x4x16xf32>
    %462 = arith.addf %431, %461 : vector<1x4x16xf32>
    %c57 = arith.constant 57 : index
    %463 = memref.load %arg1[%c57] : memref<294xf32, #tpu.memory_space<smem>>
    %464 = vector.broadcast %463 : f32 to vector<1x4x16xf32>
    %465 = arith.mulf %464, %458 : vector<1x4x16xf32>
    %466 = arith.addf %435, %465 : vector<1x4x16xf32>
    %c64 = arith.constant 64 : index
    %467 = memref.load %arg1[%c64] : memref<294xf32, #tpu.memory_space<smem>>
    %468 = vector.broadcast %467 : f32 to vector<1x4x16xf32>
    %469 = arith.mulf %468, %458 : vector<1x4x16xf32>
    %470 = arith.addf %439, %469 : vector<1x4x16xf32>
    %c71 = arith.constant 71 : index
    %471 = memref.load %arg1[%c71] : memref<294xf32, #tpu.memory_space<smem>>
    %472 = vector.broadcast %471 : f32 to vector<1x4x16xf32>
    %473 = arith.mulf %472, %458 : vector<1x4x16xf32>
    %474 = arith.addf %443, %473 : vector<1x4x16xf32>
    %c78 = arith.constant 78 : index
    %475 = memref.load %arg1[%c78] : memref<294xf32, #tpu.memory_space<smem>>
    %476 = vector.broadcast %475 : f32 to vector<1x4x16xf32>
    %477 = arith.mulf %476, %458 : vector<1x4x16xf32>
    %478 = arith.addf %447, %477 : vector<1x4x16xf32>
    %c85 = arith.constant 85 : index
    %479 = memref.load %arg1[%c85] : memref<294xf32, #tpu.memory_space<smem>>
    %480 = vector.broadcast %479 : f32 to vector<1x4x16xf32>
    %481 = arith.mulf %480, %458 : vector<1x4x16xf32>
    %482 = arith.addf %451, %481 : vector<1x4x16xf32>
    %c92 = arith.constant 92 : index
    %483 = memref.load %arg1[%c92] : memref<294xf32, #tpu.memory_space<smem>>
    %484 = vector.broadcast %483 : f32 to vector<1x4x16xf32>
    %485 = arith.mulf %484, %458 : vector<1x4x16xf32>
    %486 = arith.addf %455, %485 : vector<1x4x16xf32>
    %cst_65 = arith.constant 0.000000e+00 : f32
    %487 = vector.broadcast %cst_65 : f32 to vector<1x4x1xf32>
    %488 = vector.extract_strided_slice %292 {offsets = [0, 0, 0], sizes = [1, 4, 15], strides = [1, 1, 1]} : vector<1x4x16xf32> to vector<1x4x15xf32>
    %489 = tpu.concatenate %487, %488 in 2 : vector<1x4x1xf32>, vector<1x4x15xf32> -> vector<1x4x16xf32>
    %c2 = arith.constant 2 : index
    %490 = memref.load %arg1[%c2] : memref<294xf32, #tpu.memory_space<smem>>
    %491 = vector.broadcast %490 : f32 to vector<1x4x16xf32>
    %492 = arith.mulf %491, %489 : vector<1x4x16xf32>
    %493 = arith.addf %462, %492 : vector<1x4x16xf32>
    %c9 = arith.constant 9 : index
    %494 = memref.load %arg1[%c9] : memref<294xf32, #tpu.memory_space<smem>>
    %495 = vector.broadcast %494 : f32 to vector<1x4x16xf32>
    %496 = arith.mulf %495, %489 : vector<1x4x16xf32>
    %497 = arith.addf %466, %496 : vector<1x4x16xf32>
    %c16 = arith.constant 16 : index
    %498 = memref.load %arg1[%c16] : memref<294xf32, #tpu.memory_space<smem>>
    %499 = vector.broadcast %498 : f32 to vector<1x4x16xf32>
    %500 = arith.mulf %499, %489 : vector<1x4x16xf32>
    %501 = arith.addf %470, %500 : vector<1x4x16xf32>
    %c23 = arith.constant 23 : index
    %502 = memref.load %arg1[%c23] : memref<294xf32, #tpu.memory_space<smem>>
    %503 = vector.broadcast %502 : f32 to vector<1x4x16xf32>
    %504 = arith.mulf %503, %489 : vector<1x4x16xf32>
    %505 = arith.addf %474, %504 : vector<1x4x16xf32>
    %c30 = arith.constant 30 : index
    %506 = memref.load %arg1[%c30] : memref<294xf32, #tpu.memory_space<smem>>
    %507 = vector.broadcast %506 : f32 to vector<1x4x16xf32>
    %508 = arith.mulf %507, %489 : vector<1x4x16xf32>
    %509 = arith.addf %478, %508 : vector<1x4x16xf32>
    %c37 = arith.constant 37 : index
    %510 = memref.load %arg1[%c37] : memref<294xf32, #tpu.memory_space<smem>>
    %511 = vector.broadcast %510 : f32 to vector<1x4x16xf32>
    %512 = arith.mulf %511, %489 : vector<1x4x16xf32>
    %513 = arith.addf %482, %512 : vector<1x4x16xf32>
    %c44 = arith.constant 44 : index
    %514 = memref.load %arg1[%c44] : memref<294xf32, #tpu.memory_space<smem>>
    %515 = vector.broadcast %514 : f32 to vector<1x4x16xf32>
    %516 = arith.mulf %515, %489 : vector<1x4x16xf32>
    %517 = arith.addf %486, %516 : vector<1x4x16xf32>
    %cst_66 = arith.constant 0.000000e+00 : f32
    %518 = vector.broadcast %cst_66 : f32 to vector<1x4x1xf32>
    %519 = vector.extract_strided_slice %311 {offsets = [0, 0, 0], sizes = [1, 4, 15], strides = [1, 1, 1]} : vector<1x4x16xf32> to vector<1x4x15xf32>
    %520 = tpu.concatenate %518, %519 in 2 : vector<1x4x1xf32>, vector<1x4x15xf32> -> vector<1x4x16xf32>
    %c51 = arith.constant 51 : index
    %521 = memref.load %arg1[%c51] : memref<294xf32, #tpu.memory_space<smem>>
    %522 = vector.broadcast %521 : f32 to vector<1x4x16xf32>
    %523 = arith.mulf %522, %520 : vector<1x4x16xf32>
    %524 = arith.addf %493, %523 : vector<1x4x16xf32>
    %c58 = arith.constant 58 : index
    %525 = memref.load %arg1[%c58] : memref<294xf32, #tpu.memory_space<smem>>
    %526 = vector.broadcast %525 : f32 to vector<1x4x16xf32>
    %527 = arith.mulf %526, %520 : vector<1x4x16xf32>
    %528 = arith.addf %497, %527 : vector<1x4x16xf32>
    %c65 = arith.constant 65 : index
    %529 = memref.load %arg1[%c65] : memref<294xf32, #tpu.memory_space<smem>>
    %530 = vector.broadcast %529 : f32 to vector<1x4x16xf32>
    %531 = arith.mulf %530, %520 : vector<1x4x16xf32>
    %532 = arith.addf %501, %531 : vector<1x4x16xf32>
    %c72 = arith.constant 72 : index
    %533 = memref.load %arg1[%c72] : memref<294xf32, #tpu.memory_space<smem>>
    %534 = vector.broadcast %533 : f32 to vector<1x4x16xf32>
    %535 = arith.mulf %534, %520 : vector<1x4x16xf32>
    %536 = arith.addf %505, %535 : vector<1x4x16xf32>
    %c79 = arith.constant 79 : index
    %537 = memref.load %arg1[%c79] : memref<294xf32, #tpu.memory_space<smem>>
    %538 = vector.broadcast %537 : f32 to vector<1x4x16xf32>
    %539 = arith.mulf %538, %520 : vector<1x4x16xf32>
    %540 = arith.addf %509, %539 : vector<1x4x16xf32>
    %c86 = arith.constant 86 : index
    %541 = memref.load %arg1[%c86] : memref<294xf32, #tpu.memory_space<smem>>
    %542 = vector.broadcast %541 : f32 to vector<1x4x16xf32>
    %543 = arith.mulf %542, %520 : vector<1x4x16xf32>
    %544 = arith.addf %513, %543 : vector<1x4x16xf32>
    %c93 = arith.constant 93 : index
    %545 = memref.load %arg1[%c93] : memref<294xf32, #tpu.memory_space<smem>>
    %546 = vector.broadcast %545 : f32 to vector<1x4x16xf32>
    %547 = arith.mulf %546, %520 : vector<1x4x16xf32>
    %548 = arith.addf %517, %547 : vector<1x4x16xf32>
    %c3 = arith.constant 3 : index
    %549 = memref.load %arg1[%c3] : memref<294xf32, #tpu.memory_space<smem>>
    %550 = vector.broadcast %549 : f32 to vector<1x4x16xf32>
    %551 = arith.mulf %550, %292 : vector<1x4x16xf32>
    %552 = arith.addf %524, %551 : vector<1x4x16xf32>
    %c10 = arith.constant 10 : index
    %553 = memref.load %arg1[%c10] : memref<294xf32, #tpu.memory_space<smem>>
    %554 = vector.broadcast %553 : f32 to vector<1x4x16xf32>
    %555 = arith.mulf %554, %292 : vector<1x4x16xf32>
    %556 = arith.addf %528, %555 : vector<1x4x16xf32>
    %c17 = arith.constant 17 : index
    %557 = memref.load %arg1[%c17] : memref<294xf32, #tpu.memory_space<smem>>
    %558 = vector.broadcast %557 : f32 to vector<1x4x16xf32>
    %559 = arith.mulf %558, %292 : vector<1x4x16xf32>
    %560 = arith.addf %532, %559 : vector<1x4x16xf32>
    %c24 = arith.constant 24 : index
    %561 = memref.load %arg1[%c24] : memref<294xf32, #tpu.memory_space<smem>>
    %562 = vector.broadcast %561 : f32 to vector<1x4x16xf32>
    %563 = arith.mulf %562, %292 : vector<1x4x16xf32>
    %564 = arith.addf %536, %563 : vector<1x4x16xf32>
    %c31 = arith.constant 31 : index
    %565 = memref.load %arg1[%c31] : memref<294xf32, #tpu.memory_space<smem>>
    %566 = vector.broadcast %565 : f32 to vector<1x4x16xf32>
    %567 = arith.mulf %566, %292 : vector<1x4x16xf32>
    %568 = arith.addf %540, %567 : vector<1x4x16xf32>
    %c38 = arith.constant 38 : index
    %569 = memref.load %arg1[%c38] : memref<294xf32, #tpu.memory_space<smem>>
    %570 = vector.broadcast %569 : f32 to vector<1x4x16xf32>
    %571 = arith.mulf %570, %292 : vector<1x4x16xf32>
    %572 = arith.addf %544, %571 : vector<1x4x16xf32>
    %c45 = arith.constant 45 : index
    %573 = memref.load %arg1[%c45] : memref<294xf32, #tpu.memory_space<smem>>
    %574 = vector.broadcast %573 : f32 to vector<1x4x16xf32>
    %575 = arith.mulf %574, %292 : vector<1x4x16xf32>
    %576 = arith.addf %548, %575 : vector<1x4x16xf32>
    %c52 = arith.constant 52 : index
    %577 = memref.load %arg1[%c52] : memref<294xf32, #tpu.memory_space<smem>>
    %578 = vector.broadcast %577 : f32 to vector<1x4x16xf32>
    %579 = arith.mulf %578, %311 : vector<1x4x16xf32>
    %580 = arith.addf %552, %579 : vector<1x4x16xf32>
    %c59 = arith.constant 59 : index
    %581 = memref.load %arg1[%c59] : memref<294xf32, #tpu.memory_space<smem>>
    %582 = vector.broadcast %581 : f32 to vector<1x4x16xf32>
    %583 = arith.mulf %582, %311 : vector<1x4x16xf32>
    %584 = arith.addf %556, %583 : vector<1x4x16xf32>
    %c66 = arith.constant 66 : index
    %585 = memref.load %arg1[%c66] : memref<294xf32, #tpu.memory_space<smem>>
    %586 = vector.broadcast %585 : f32 to vector<1x4x16xf32>
    %587 = arith.mulf %586, %311 : vector<1x4x16xf32>
    %588 = arith.addf %560, %587 : vector<1x4x16xf32>
    %c73 = arith.constant 73 : index
    %589 = memref.load %arg1[%c73] : memref<294xf32, #tpu.memory_space<smem>>
    %590 = vector.broadcast %589 : f32 to vector<1x4x16xf32>
    %591 = arith.mulf %590, %311 : vector<1x4x16xf32>
    %592 = arith.addf %564, %591 : vector<1x4x16xf32>
    %c80 = arith.constant 80 : index
    %593 = memref.load %arg1[%c80] : memref<294xf32, #tpu.memory_space<smem>>
    %594 = vector.broadcast %593 : f32 to vector<1x4x16xf32>
    %595 = arith.mulf %594, %311 : vector<1x4x16xf32>
    %596 = arith.addf %568, %595 : vector<1x4x16xf32>
    %c87 = arith.constant 87 : index
    %597 = memref.load %arg1[%c87] : memref<294xf32, #tpu.memory_space<smem>>
    %598 = vector.broadcast %597 : f32 to vector<1x4x16xf32>
    %599 = arith.mulf %598, %311 : vector<1x4x16xf32>
    %600 = arith.addf %572, %599 : vector<1x4x16xf32>
    %c94 = arith.constant 94 : index
    %601 = memref.load %arg1[%c94] : memref<294xf32, #tpu.memory_space<smem>>
    %602 = vector.broadcast %601 : f32 to vector<1x4x16xf32>
    %603 = arith.mulf %602, %311 : vector<1x4x16xf32>
    %604 = arith.addf %576, %603 : vector<1x4x16xf32>
    %cst_67 = arith.constant 0.000000e+00 : f32
    %605 = vector.broadcast %cst_67 : f32 to vector<1x4x1xf32>
    %606 = vector.extract_strided_slice %292 {offsets = [0, 0, 1], sizes = [1, 4, 15], strides = [1, 1, 1]} : vector<1x4x16xf32> to vector<1x4x15xf32>
    %607 = tpu.concatenate %606, %605 in 2 : vector<1x4x15xf32>, vector<1x4x1xf32> -> vector<1x4x16xf32>
    %c4 = arith.constant 4 : index
    %608 = memref.load %arg1[%c4] : memref<294xf32, #tpu.memory_space<smem>>
    %609 = vector.broadcast %608 : f32 to vector<1x4x16xf32>
    %610 = arith.mulf %609, %607 : vector<1x4x16xf32>
    %611 = arith.addf %580, %610 : vector<1x4x16xf32>
    %c11 = arith.constant 11 : index
    %612 = memref.load %arg1[%c11] : memref<294xf32, #tpu.memory_space<smem>>
    %613 = vector.broadcast %612 : f32 to vector<1x4x16xf32>
    %614 = arith.mulf %613, %607 : vector<1x4x16xf32>
    %615 = arith.addf %584, %614 : vector<1x4x16xf32>
    %c18 = arith.constant 18 : index
    %616 = memref.load %arg1[%c18] : memref<294xf32, #tpu.memory_space<smem>>
    %617 = vector.broadcast %616 : f32 to vector<1x4x16xf32>
    %618 = arith.mulf %617, %607 : vector<1x4x16xf32>
    %619 = arith.addf %588, %618 : vector<1x4x16xf32>
    %c25 = arith.constant 25 : index
    %620 = memref.load %arg1[%c25] : memref<294xf32, #tpu.memory_space<smem>>
    %621 = vector.broadcast %620 : f32 to vector<1x4x16xf32>
    %622 = arith.mulf %621, %607 : vector<1x4x16xf32>
    %623 = arith.addf %592, %622 : vector<1x4x16xf32>
    %c32 = arith.constant 32 : index
    %624 = memref.load %arg1[%c32] : memref<294xf32, #tpu.memory_space<smem>>
    %625 = vector.broadcast %624 : f32 to vector<1x4x16xf32>
    %626 = arith.mulf %625, %607 : vector<1x4x16xf32>
    %627 = arith.addf %596, %626 : vector<1x4x16xf32>
    %c39 = arith.constant 39 : index
    %628 = memref.load %arg1[%c39] : memref<294xf32, #tpu.memory_space<smem>>
    %629 = vector.broadcast %628 : f32 to vector<1x4x16xf32>
    %630 = arith.mulf %629, %607 : vector<1x4x16xf32>
    %631 = arith.addf %600, %630 : vector<1x4x16xf32>
    %c46 = arith.constant 46 : index
    %632 = memref.load %arg1[%c46] : memref<294xf32, #tpu.memory_space<smem>>
    %633 = vector.broadcast %632 : f32 to vector<1x4x16xf32>
    %634 = arith.mulf %633, %607 : vector<1x4x16xf32>
    %635 = arith.addf %604, %634 : vector<1x4x16xf32>
    %cst_68 = arith.constant 0.000000e+00 : f32
    %636 = vector.broadcast %cst_68 : f32 to vector<1x4x1xf32>
    %637 = vector.extract_strided_slice %311 {offsets = [0, 0, 1], sizes = [1, 4, 15], strides = [1, 1, 1]} : vector<1x4x16xf32> to vector<1x4x15xf32>
    %638 = tpu.concatenate %637, %636 in 2 : vector<1x4x15xf32>, vector<1x4x1xf32> -> vector<1x4x16xf32>
    %c53 = arith.constant 53 : index
    %639 = memref.load %arg1[%c53] : memref<294xf32, #tpu.memory_space<smem>>
    %640 = vector.broadcast %639 : f32 to vector<1x4x16xf32>
    %641 = arith.mulf %640, %638 : vector<1x4x16xf32>
    %642 = arith.addf %611, %641 : vector<1x4x16xf32>
    %c60 = arith.constant 60 : index
    %643 = memref.load %arg1[%c60] : memref<294xf32, #tpu.memory_space<smem>>
    %644 = vector.broadcast %643 : f32 to vector<1x4x16xf32>
    %645 = arith.mulf %644, %638 : vector<1x4x16xf32>
    %646 = arith.addf %615, %645 : vector<1x4x16xf32>
    %c67 = arith.constant 67 : index
    %647 = memref.load %arg1[%c67] : memref<294xf32, #tpu.memory_space<smem>>
    %648 = vector.broadcast %647 : f32 to vector<1x4x16xf32>
    %649 = arith.mulf %648, %638 : vector<1x4x16xf32>
    %650 = arith.addf %619, %649 : vector<1x4x16xf32>
    %c74 = arith.constant 74 : index
    %651 = memref.load %arg1[%c74] : memref<294xf32, #tpu.memory_space<smem>>
    %652 = vector.broadcast %651 : f32 to vector<1x4x16xf32>
    %653 = arith.mulf %652, %638 : vector<1x4x16xf32>
    %654 = arith.addf %623, %653 : vector<1x4x16xf32>
    %c81 = arith.constant 81 : index
    %655 = memref.load %arg1[%c81] : memref<294xf32, #tpu.memory_space<smem>>
    %656 = vector.broadcast %655 : f32 to vector<1x4x16xf32>
    %657 = arith.mulf %656, %638 : vector<1x4x16xf32>
    %658 = arith.addf %627, %657 : vector<1x4x16xf32>
    %c88 = arith.constant 88 : index
    %659 = memref.load %arg1[%c88] : memref<294xf32, #tpu.memory_space<smem>>
    %660 = vector.broadcast %659 : f32 to vector<1x4x16xf32>
    %661 = arith.mulf %660, %638 : vector<1x4x16xf32>
    %662 = arith.addf %631, %661 : vector<1x4x16xf32>
    %c95 = arith.constant 95 : index
    %663 = memref.load %arg1[%c95] : memref<294xf32, #tpu.memory_space<smem>>
    %664 = vector.broadcast %663 : f32 to vector<1x4x16xf32>
    %665 = arith.mulf %664, %638 : vector<1x4x16xf32>
    %666 = arith.addf %635, %665 : vector<1x4x16xf32>
    %cst_69 = arith.constant 0.000000e+00 : f32
    %667 = vector.broadcast %cst_69 : f32 to vector<1x4x2xf32>
    %668 = vector.extract_strided_slice %292 {offsets = [0, 0, 2], sizes = [1, 4, 14], strides = [1, 1, 1]} : vector<1x4x16xf32> to vector<1x4x14xf32>
    %669 = tpu.concatenate %668, %667 in 2 : vector<1x4x14xf32>, vector<1x4x2xf32> -> vector<1x4x16xf32>
    %c5 = arith.constant 5 : index
    %670 = memref.load %arg1[%c5] : memref<294xf32, #tpu.memory_space<smem>>
    %671 = vector.broadcast %670 : f32 to vector<1x4x16xf32>
    %672 = arith.mulf %671, %669 : vector<1x4x16xf32>
    %673 = arith.addf %642, %672 : vector<1x4x16xf32>
    %c12 = arith.constant 12 : index
    %674 = memref.load %arg1[%c12] : memref<294xf32, #tpu.memory_space<smem>>
    %675 = vector.broadcast %674 : f32 to vector<1x4x16xf32>
    %676 = arith.mulf %675, %669 : vector<1x4x16xf32>
    %677 = arith.addf %646, %676 : vector<1x4x16xf32>
    %c19 = arith.constant 19 : index
    %678 = memref.load %arg1[%c19] : memref<294xf32, #tpu.memory_space<smem>>
    %679 = vector.broadcast %678 : f32 to vector<1x4x16xf32>
    %680 = arith.mulf %679, %669 : vector<1x4x16xf32>
    %681 = arith.addf %650, %680 : vector<1x4x16xf32>
    %c26 = arith.constant 26 : index
    %682 = memref.load %arg1[%c26] : memref<294xf32, #tpu.memory_space<smem>>
    %683 = vector.broadcast %682 : f32 to vector<1x4x16xf32>
    %684 = arith.mulf %683, %669 : vector<1x4x16xf32>
    %685 = arith.addf %654, %684 : vector<1x4x16xf32>
    %c33 = arith.constant 33 : index
    %686 = memref.load %arg1[%c33] : memref<294xf32, #tpu.memory_space<smem>>
    %687 = vector.broadcast %686 : f32 to vector<1x4x16xf32>
    %688 = arith.mulf %687, %669 : vector<1x4x16xf32>
    %689 = arith.addf %658, %688 : vector<1x4x16xf32>
    %c40 = arith.constant 40 : index
    %690 = memref.load %arg1[%c40] : memref<294xf32, #tpu.memory_space<smem>>
    %691 = vector.broadcast %690 : f32 to vector<1x4x16xf32>
    %692 = arith.mulf %691, %669 : vector<1x4x16xf32>
    %693 = arith.addf %662, %692 : vector<1x4x16xf32>
    %c47 = arith.constant 47 : index
    %694 = memref.load %arg1[%c47] : memref<294xf32, #tpu.memory_space<smem>>
    %695 = vector.broadcast %694 : f32 to vector<1x4x16xf32>
    %696 = arith.mulf %695, %669 : vector<1x4x16xf32>
    %697 = arith.addf %666, %696 : vector<1x4x16xf32>
    %cst_70 = arith.constant 0.000000e+00 : f32
    %698 = vector.broadcast %cst_70 : f32 to vector<1x4x2xf32>
    %699 = vector.extract_strided_slice %311 {offsets = [0, 0, 2], sizes = [1, 4, 14], strides = [1, 1, 1]} : vector<1x4x16xf32> to vector<1x4x14xf32>
    %700 = tpu.concatenate %699, %698 in 2 : vector<1x4x14xf32>, vector<1x4x2xf32> -> vector<1x4x16xf32>
    %c54 = arith.constant 54 : index
    %701 = memref.load %arg1[%c54] : memref<294xf32, #tpu.memory_space<smem>>
    %702 = vector.broadcast %701 : f32 to vector<1x4x16xf32>
    %703 = arith.mulf %702, %700 : vector<1x4x16xf32>
    %704 = arith.addf %673, %703 : vector<1x4x16xf32>
    %c61 = arith.constant 61 : index
    %705 = memref.load %arg1[%c61] : memref<294xf32, #tpu.memory_space<smem>>
    %706 = vector.broadcast %705 : f32 to vector<1x4x16xf32>
    %707 = arith.mulf %706, %700 : vector<1x4x16xf32>
    %708 = arith.addf %677, %707 : vector<1x4x16xf32>
    %c68 = arith.constant 68 : index
    %709 = memref.load %arg1[%c68] : memref<294xf32, #tpu.memory_space<smem>>
    %710 = vector.broadcast %709 : f32 to vector<1x4x16xf32>
    %711 = arith.mulf %710, %700 : vector<1x4x16xf32>
    %712 = arith.addf %681, %711 : vector<1x4x16xf32>
    %c75 = arith.constant 75 : index
    %713 = memref.load %arg1[%c75] : memref<294xf32, #tpu.memory_space<smem>>
    %714 = vector.broadcast %713 : f32 to vector<1x4x16xf32>
    %715 = arith.mulf %714, %700 : vector<1x4x16xf32>
    %716 = arith.addf %685, %715 : vector<1x4x16xf32>
    %c82 = arith.constant 82 : index
    %717 = memref.load %arg1[%c82] : memref<294xf32, #tpu.memory_space<smem>>
    %718 = vector.broadcast %717 : f32 to vector<1x4x16xf32>
    %719 = arith.mulf %718, %700 : vector<1x4x16xf32>
    %720 = arith.addf %689, %719 : vector<1x4x16xf32>
    %c89 = arith.constant 89 : index
    %721 = memref.load %arg1[%c89] : memref<294xf32, #tpu.memory_space<smem>>
    %722 = vector.broadcast %721 : f32 to vector<1x4x16xf32>
    %723 = arith.mulf %722, %700 : vector<1x4x16xf32>
    %724 = arith.addf %693, %723 : vector<1x4x16xf32>
    %c96 = arith.constant 96 : index
    %725 = memref.load %arg1[%c96] : memref<294xf32, #tpu.memory_space<smem>>
    %726 = vector.broadcast %725 : f32 to vector<1x4x16xf32>
    %727 = arith.mulf %726, %700 : vector<1x4x16xf32>
    %728 = arith.addf %697, %727 : vector<1x4x16xf32>
    %cst_71 = arith.constant 0.000000e+00 : f32
    %729 = vector.broadcast %cst_71 : f32 to vector<1x4x3xf32>
    %730 = vector.extract_strided_slice %292 {offsets = [0, 0, 3], sizes = [1, 4, 13], strides = [1, 1, 1]} : vector<1x4x16xf32> to vector<1x4x13xf32>
    %731 = tpu.concatenate %730, %729 in 2 : vector<1x4x13xf32>, vector<1x4x3xf32> -> vector<1x4x16xf32>
    %c6 = arith.constant 6 : index
    %732 = memref.load %arg1[%c6] : memref<294xf32, #tpu.memory_space<smem>>
    %733 = vector.broadcast %732 : f32 to vector<1x4x16xf32>
    %734 = arith.mulf %733, %731 : vector<1x4x16xf32>
    %735 = arith.addf %704, %734 : vector<1x4x16xf32>
    %c13 = arith.constant 13 : index
    %736 = memref.load %arg1[%c13] : memref<294xf32, #tpu.memory_space<smem>>
    %737 = vector.broadcast %736 : f32 to vector<1x4x16xf32>
    %738 = arith.mulf %737, %731 : vector<1x4x16xf32>
    %739 = arith.addf %708, %738 : vector<1x4x16xf32>
    %c20 = arith.constant 20 : index
    %740 = memref.load %arg1[%c20] : memref<294xf32, #tpu.memory_space<smem>>
    %741 = vector.broadcast %740 : f32 to vector<1x4x16xf32>
    %742 = arith.mulf %741, %731 : vector<1x4x16xf32>
    %743 = arith.addf %712, %742 : vector<1x4x16xf32>
    %c27 = arith.constant 27 : index
    %744 = memref.load %arg1[%c27] : memref<294xf32, #tpu.memory_space<smem>>
    %745 = vector.broadcast %744 : f32 to vector<1x4x16xf32>
    %746 = arith.mulf %745, %731 : vector<1x4x16xf32>
    %747 = arith.addf %716, %746 : vector<1x4x16xf32>
    %c34 = arith.constant 34 : index
    %748 = memref.load %arg1[%c34] : memref<294xf32, #tpu.memory_space<smem>>
    %749 = vector.broadcast %748 : f32 to vector<1x4x16xf32>
    %750 = arith.mulf %749, %731 : vector<1x4x16xf32>
    %751 = arith.addf %720, %750 : vector<1x4x16xf32>
    %c41 = arith.constant 41 : index
    %752 = memref.load %arg1[%c41] : memref<294xf32, #tpu.memory_space<smem>>
    %753 = vector.broadcast %752 : f32 to vector<1x4x16xf32>
    %754 = arith.mulf %753, %731 : vector<1x4x16xf32>
    %755 = arith.addf %724, %754 : vector<1x4x16xf32>
    %c48 = arith.constant 48 : index
    %756 = memref.load %arg1[%c48] : memref<294xf32, #tpu.memory_space<smem>>
    %757 = vector.broadcast %756 : f32 to vector<1x4x16xf32>
    %758 = arith.mulf %757, %731 : vector<1x4x16xf32>
    %759 = arith.addf %728, %758 : vector<1x4x16xf32>
    %cst_72 = arith.constant 0.000000e+00 : f32
    %760 = vector.broadcast %cst_72 : f32 to vector<1x4x3xf32>
    %761 = vector.extract_strided_slice %311 {offsets = [0, 0, 3], sizes = [1, 4, 13], strides = [1, 1, 1]} : vector<1x4x16xf32> to vector<1x4x13xf32>
    %762 = tpu.concatenate %761, %760 in 2 : vector<1x4x13xf32>, vector<1x4x3xf32> -> vector<1x4x16xf32>
    %c55 = arith.constant 55 : index
    %763 = memref.load %arg1[%c55] : memref<294xf32, #tpu.memory_space<smem>>
    %764 = vector.broadcast %763 : f32 to vector<1x4x16xf32>
    %765 = arith.mulf %764, %762 : vector<1x4x16xf32>
    %766 = arith.addf %735, %765 : vector<1x4x16xf32>
    %c62 = arith.constant 62 : index
    %767 = memref.load %arg1[%c62] : memref<294xf32, #tpu.memory_space<smem>>
    %768 = vector.broadcast %767 : f32 to vector<1x4x16xf32>
    %769 = arith.mulf %768, %762 : vector<1x4x16xf32>
    %770 = arith.addf %739, %769 : vector<1x4x16xf32>
    %c69 = arith.constant 69 : index
    %771 = memref.load %arg1[%c69] : memref<294xf32, #tpu.memory_space<smem>>
    %772 = vector.broadcast %771 : f32 to vector<1x4x16xf32>
    %773 = arith.mulf %772, %762 : vector<1x4x16xf32>
    %774 = arith.addf %743, %773 : vector<1x4x16xf32>
    %c76 = arith.constant 76 : index
    %775 = memref.load %arg1[%c76] : memref<294xf32, #tpu.memory_space<smem>>
    %776 = vector.broadcast %775 : f32 to vector<1x4x16xf32>
    %777 = arith.mulf %776, %762 : vector<1x4x16xf32>
    %778 = arith.addf %747, %777 : vector<1x4x16xf32>
    %c83 = arith.constant 83 : index
    %779 = memref.load %arg1[%c83] : memref<294xf32, #tpu.memory_space<smem>>
    %780 = vector.broadcast %779 : f32 to vector<1x4x16xf32>
    %781 = arith.mulf %780, %762 : vector<1x4x16xf32>
    %782 = arith.addf %751, %781 : vector<1x4x16xf32>
    %c90 = arith.constant 90 : index
    %783 = memref.load %arg1[%c90] : memref<294xf32, #tpu.memory_space<smem>>
    %784 = vector.broadcast %783 : f32 to vector<1x4x16xf32>
    %785 = arith.mulf %784, %762 : vector<1x4x16xf32>
    %786 = arith.addf %755, %785 : vector<1x4x16xf32>
    %c97 = arith.constant 97 : index
    %787 = memref.load %arg1[%c97] : memref<294xf32, #tpu.memory_space<smem>>
    %788 = vector.broadcast %787 : f32 to vector<1x4x16xf32>
    %789 = arith.mulf %788, %762 : vector<1x4x16xf32>
    %790 = arith.addf %759, %789 : vector<1x4x16xf32>
    %cst_73 = arith.constant 0.000000e+00 : f32
    %791 = vector.broadcast %cst_73 : f32 to vector<1x3x16xf32>
    %792 = vector.extract_strided_slice %766 {offsets = [0, 0, 0], sizes = [1, 1, 16], strides = [1, 1, 1]} : vector<1x4x16xf32> to vector<1x1x16xf32>
    %793 = tpu.concatenate %791, %792 in 1 : vector<1x3x16xf32>, vector<1x1x16xf32> -> vector<1x4x16xf32>
    %cst_74 = arith.constant 0.000000e+00 : f32
    %794 = vector.broadcast %cst_74 : f32 to vector<1x2x16xf32>
    %795 = vector.extract_strided_slice %770 {offsets = [0, 0, 0], sizes = [1, 2, 16], strides = [1, 1, 1]} : vector<1x4x16xf32> to vector<1x2x16xf32>
    %796 = tpu.concatenate %794, %795 in 1 : vector<1x2x16xf32>, vector<1x2x16xf32> -> vector<1x4x16xf32>
    %cst_75 = arith.constant 0.000000e+00 : f32
    %797 = vector.broadcast %cst_75 : f32 to vector<1x1x16xf32>
    %798 = vector.extract_strided_slice %774 {offsets = [0, 0, 0], sizes = [1, 3, 16], strides = [1, 1, 1]} : vector<1x4x16xf32> to vector<1x3x16xf32>
    %799 = tpu.concatenate %797, %798 in 1 : vector<1x1x16xf32>, vector<1x3x16xf32> -> vector<1x4x16xf32>
    %cst_76 = arith.constant 0.000000e+00 : f32
    %800 = vector.broadcast %cst_76 : f32 to vector<1x1x16xf32>
    %801 = vector.extract_strided_slice %782 {offsets = [0, 1, 0], sizes = [1, 3, 16], strides = [1, 1, 1]} : vector<1x4x16xf32> to vector<1x3x16xf32>
    %802 = tpu.concatenate %801, %800 in 1 : vector<1x3x16xf32>, vector<1x1x16xf32> -> vector<1x4x16xf32>
    %cst_77 = arith.constant 0.000000e+00 : f32
    %803 = vector.broadcast %cst_77 : f32 to vector<1x2x16xf32>
    %804 = vector.extract_strided_slice %786 {offsets = [0, 2, 0], sizes = [1, 2, 16], strides = [1, 1, 1]} : vector<1x4x16xf32> to vector<1x2x16xf32>
    %805 = tpu.concatenate %804, %803 in 1 : vector<1x2x16xf32>, vector<1x2x16xf32> -> vector<1x4x16xf32>
    %cst_78 = arith.constant 0.000000e+00 : f32
    %806 = vector.broadcast %cst_78 : f32 to vector<1x3x16xf32>
    %807 = vector.extract_strided_slice %790 {offsets = [0, 3, 0], sizes = [1, 1, 16], strides = [1, 1, 1]} : vector<1x4x16xf32> to vector<1x1x16xf32>
    %808 = tpu.concatenate %807, %806 in 1 : vector<1x1x16xf32>, vector<1x3x16xf32> -> vector<1x4x16xf32>
    %809 = arith.addf %793, %796 : vector<1x4x16xf32>
    %810 = arith.addf %799, %778 : vector<1x4x16xf32>
    %811 = arith.addf %802, %805 : vector<1x4x16xf32>
    %812 = arith.addf %809, %810 : vector<1x4x16xf32>
    %813 = arith.addf %811, %808 : vector<1x4x16xf32>
    %814 = arith.addf %812, %813 : vector<1x4x16xf32>
    %c0_79 = arith.constant 0 : index
    %815 = memref.load %arg2[%c0_79] : memref<3xf32, #tpu.memory_space<smem>>
    %816 = vector.broadcast %815 : f32 to vector<1x4x16xf32>
    %817 = arith.addf %814, %816 : vector<1x4x16xf32>
    %818 = arith.negf %817 : vector<1x4x16xf32>
    %819 = math.exp %818 : vector<1x4x16xf32>
    %cst_80 = arith.constant 1.000000e+00 : f32
    %820 = vector.broadcast %cst_80 : f32 to vector<1x4x16xf32>
    %821 = arith.addf %820, %819 : vector<1x4x16xf32>
    %822 = arith.divf %820, %821 : vector<1x4x16xf32>
    %cst_81 = arith.constant 0.000000e+00 : f32
    %823 = vector.broadcast %cst_81 : f32 to vector<1x3x16xf32>
    %824 = vector.extract_strided_slice %302 {offsets = [0, 0, 0], sizes = [1, 1, 16], strides = [1, 1, 1]} : vector<1x4x16xf32> to vector<1x1x16xf32>
    %825 = tpu.concatenate %823, %824 in 1 : vector<1x3x16xf32>, vector<1x1x16xf32> -> vector<1x4x16xf32>
    %c98 = arith.constant 98 : index
    %826 = memref.load %arg1[%c98] : memref<294xf32, #tpu.memory_space<smem>>
    %827 = vector.broadcast %826 : f32 to vector<1x4x16xf32>
    %828 = arith.mulf %827, %825 : vector<1x4x16xf32>
    %c105 = arith.constant 105 : index
    %829 = memref.load %arg1[%c105] : memref<294xf32, #tpu.memory_space<smem>>
    %830 = vector.broadcast %829 : f32 to vector<1x4x16xf32>
    %831 = arith.mulf %830, %825 : vector<1x4x16xf32>
    %c112 = arith.constant 112 : index
    %832 = memref.load %arg1[%c112] : memref<294xf32, #tpu.memory_space<smem>>
    %833 = vector.broadcast %832 : f32 to vector<1x4x16xf32>
    %834 = arith.mulf %833, %825 : vector<1x4x16xf32>
    %c119 = arith.constant 119 : index
    %835 = memref.load %arg1[%c119] : memref<294xf32, #tpu.memory_space<smem>>
    %836 = vector.broadcast %835 : f32 to vector<1x4x16xf32>
    %837 = arith.mulf %836, %825 : vector<1x4x16xf32>
    %c126 = arith.constant 126 : index
    %838 = memref.load %arg1[%c126] : memref<294xf32, #tpu.memory_space<smem>>
    %839 = vector.broadcast %838 : f32 to vector<1x4x16xf32>
    %840 = arith.mulf %839, %825 : vector<1x4x16xf32>
    %c133 = arith.constant 133 : index
    %841 = memref.load %arg1[%c133] : memref<294xf32, #tpu.memory_space<smem>>
    %842 = vector.broadcast %841 : f32 to vector<1x4x16xf32>
    %843 = arith.mulf %842, %825 : vector<1x4x16xf32>
    %c140 = arith.constant 140 : index
    %844 = memref.load %arg1[%c140] : memref<294xf32, #tpu.memory_space<smem>>
    %845 = vector.broadcast %844 : f32 to vector<1x4x16xf32>
    %846 = arith.mulf %845, %825 : vector<1x4x16xf32>
    %cst_82 = arith.constant 0.000000e+00 : f32
    %847 = vector.broadcast %cst_82 : f32 to vector<1x3x16xf32>
    %848 = vector.extract_strided_slice %313 {offsets = [0, 0, 0], sizes = [1, 1, 16], strides = [1, 1, 1]} : vector<1x4x16xf32> to vector<1x1x16xf32>
    %849 = tpu.concatenate %847, %848 in 1 : vector<1x3x16xf32>, vector<1x1x16xf32> -> vector<1x4x16xf32>
    %c147 = arith.constant 147 : index
    %850 = memref.load %arg1[%c147] : memref<294xf32, #tpu.memory_space<smem>>
    %851 = vector.broadcast %850 : f32 to vector<1x4x16xf32>
    %852 = arith.mulf %851, %849 : vector<1x4x16xf32>
    %853 = arith.addf %828, %852 : vector<1x4x16xf32>
    %c154 = arith.constant 154 : index
    %854 = memref.load %arg1[%c154] : memref<294xf32, #tpu.memory_space<smem>>
    %855 = vector.broadcast %854 : f32 to vector<1x4x16xf32>
    %856 = arith.mulf %855, %849 : vector<1x4x16xf32>
    %857 = arith.addf %831, %856 : vector<1x4x16xf32>
    %c161 = arith.constant 161 : index
    %858 = memref.load %arg1[%c161] : memref<294xf32, #tpu.memory_space<smem>>
    %859 = vector.broadcast %858 : f32 to vector<1x4x16xf32>
    %860 = arith.mulf %859, %849 : vector<1x4x16xf32>
    %861 = arith.addf %834, %860 : vector<1x4x16xf32>
    %c168 = arith.constant 168 : index
    %862 = memref.load %arg1[%c168] : memref<294xf32, #tpu.memory_space<smem>>
    %863 = vector.broadcast %862 : f32 to vector<1x4x16xf32>
    %864 = arith.mulf %863, %849 : vector<1x4x16xf32>
    %865 = arith.addf %837, %864 : vector<1x4x16xf32>
    %c175 = arith.constant 175 : index
    %866 = memref.load %arg1[%c175] : memref<294xf32, #tpu.memory_space<smem>>
    %867 = vector.broadcast %866 : f32 to vector<1x4x16xf32>
    %868 = arith.mulf %867, %849 : vector<1x4x16xf32>
    %869 = arith.addf %840, %868 : vector<1x4x16xf32>
    %c182 = arith.constant 182 : index
    %870 = memref.load %arg1[%c182] : memref<294xf32, #tpu.memory_space<smem>>
    %871 = vector.broadcast %870 : f32 to vector<1x4x16xf32>
    %872 = arith.mulf %871, %849 : vector<1x4x16xf32>
    %873 = arith.addf %843, %872 : vector<1x4x16xf32>
    %c189 = arith.constant 189 : index
    %874 = memref.load %arg1[%c189] : memref<294xf32, #tpu.memory_space<smem>>
    %875 = vector.broadcast %874 : f32 to vector<1x4x16xf32>
    %876 = arith.mulf %875, %849 : vector<1x4x16xf32>
    %877 = arith.addf %846, %876 : vector<1x4x16xf32>
    %cst_83 = arith.constant 0.000000e+00 : f32
    %878 = vector.broadcast %cst_83 : f32 to vector<1x2x16xf32>
    %879 = vector.extract_strided_slice %302 {offsets = [0, 0, 0], sizes = [1, 2, 16], strides = [1, 1, 1]} : vector<1x4x16xf32> to vector<1x2x16xf32>
    %880 = tpu.concatenate %878, %879 in 1 : vector<1x2x16xf32>, vector<1x2x16xf32> -> vector<1x4x16xf32>
    %c99 = arith.constant 99 : index
    %881 = memref.load %arg1[%c99] : memref<294xf32, #tpu.memory_space<smem>>
    %882 = vector.broadcast %881 : f32 to vector<1x4x16xf32>
    %883 = arith.mulf %882, %880 : vector<1x4x16xf32>
    %884 = arith.addf %853, %883 : vector<1x4x16xf32>
    %c106 = arith.constant 106 : index
    %885 = memref.load %arg1[%c106] : memref<294xf32, #tpu.memory_space<smem>>
    %886 = vector.broadcast %885 : f32 to vector<1x4x16xf32>
    %887 = arith.mulf %886, %880 : vector<1x4x16xf32>
    %888 = arith.addf %857, %887 : vector<1x4x16xf32>
    %c113 = arith.constant 113 : index
    %889 = memref.load %arg1[%c113] : memref<294xf32, #tpu.memory_space<smem>>
    %890 = vector.broadcast %889 : f32 to vector<1x4x16xf32>
    %891 = arith.mulf %890, %880 : vector<1x4x16xf32>
    %892 = arith.addf %861, %891 : vector<1x4x16xf32>
    %c120 = arith.constant 120 : index
    %893 = memref.load %arg1[%c120] : memref<294xf32, #tpu.memory_space<smem>>
    %894 = vector.broadcast %893 : f32 to vector<1x4x16xf32>
    %895 = arith.mulf %894, %880 : vector<1x4x16xf32>
    %896 = arith.addf %865, %895 : vector<1x4x16xf32>
    %c127 = arith.constant 127 : index
    %897 = memref.load %arg1[%c127] : memref<294xf32, #tpu.memory_space<smem>>
    %898 = vector.broadcast %897 : f32 to vector<1x4x16xf32>
    %899 = arith.mulf %898, %880 : vector<1x4x16xf32>
    %900 = arith.addf %869, %899 : vector<1x4x16xf32>
    %c134 = arith.constant 134 : index
    %901 = memref.load %arg1[%c134] : memref<294xf32, #tpu.memory_space<smem>>
    %902 = vector.broadcast %901 : f32 to vector<1x4x16xf32>
    %903 = arith.mulf %902, %880 : vector<1x4x16xf32>
    %904 = arith.addf %873, %903 : vector<1x4x16xf32>
    %c141 = arith.constant 141 : index
    %905 = memref.load %arg1[%c141] : memref<294xf32, #tpu.memory_space<smem>>
    %906 = vector.broadcast %905 : f32 to vector<1x4x16xf32>
    %907 = arith.mulf %906, %880 : vector<1x4x16xf32>
    %908 = arith.addf %877, %907 : vector<1x4x16xf32>
    %cst_84 = arith.constant 0.000000e+00 : f32
    %909 = vector.broadcast %cst_84 : f32 to vector<1x2x16xf32>
    %910 = vector.extract_strided_slice %313 {offsets = [0, 0, 0], sizes = [1, 2, 16], strides = [1, 1, 1]} : vector<1x4x16xf32> to vector<1x2x16xf32>
    %911 = tpu.concatenate %909, %910 in 1 : vector<1x2x16xf32>, vector<1x2x16xf32> -> vector<1x4x16xf32>
    %c148 = arith.constant 148 : index
    %912 = memref.load %arg1[%c148] : memref<294xf32, #tpu.memory_space<smem>>
    %913 = vector.broadcast %912 : f32 to vector<1x4x16xf32>
    %914 = arith.mulf %913, %911 : vector<1x4x16xf32>
    %915 = arith.addf %884, %914 : vector<1x4x16xf32>
    %c155 = arith.constant 155 : index
    %916 = memref.load %arg1[%c155] : memref<294xf32, #tpu.memory_space<smem>>
    %917 = vector.broadcast %916 : f32 to vector<1x4x16xf32>
    %918 = arith.mulf %917, %911 : vector<1x4x16xf32>
    %919 = arith.addf %888, %918 : vector<1x4x16xf32>
    %c162 = arith.constant 162 : index
    %920 = memref.load %arg1[%c162] : memref<294xf32, #tpu.memory_space<smem>>
    %921 = vector.broadcast %920 : f32 to vector<1x4x16xf32>
    %922 = arith.mulf %921, %911 : vector<1x4x16xf32>
    %923 = arith.addf %892, %922 : vector<1x4x16xf32>
    %c169 = arith.constant 169 : index
    %924 = memref.load %arg1[%c169] : memref<294xf32, #tpu.memory_space<smem>>
    %925 = vector.broadcast %924 : f32 to vector<1x4x16xf32>
    %926 = arith.mulf %925, %911 : vector<1x4x16xf32>
    %927 = arith.addf %896, %926 : vector<1x4x16xf32>
    %c176 = arith.constant 176 : index
    %928 = memref.load %arg1[%c176] : memref<294xf32, #tpu.memory_space<smem>>
    %929 = vector.broadcast %928 : f32 to vector<1x4x16xf32>
    %930 = arith.mulf %929, %911 : vector<1x4x16xf32>
    %931 = arith.addf %900, %930 : vector<1x4x16xf32>
    %c183 = arith.constant 183 : index
    %932 = memref.load %arg1[%c183] : memref<294xf32, #tpu.memory_space<smem>>
    %933 = vector.broadcast %932 : f32 to vector<1x4x16xf32>
    %934 = arith.mulf %933, %911 : vector<1x4x16xf32>
    %935 = arith.addf %904, %934 : vector<1x4x16xf32>
    %c190 = arith.constant 190 : index
    %936 = memref.load %arg1[%c190] : memref<294xf32, #tpu.memory_space<smem>>
    %937 = vector.broadcast %936 : f32 to vector<1x4x16xf32>
    %938 = arith.mulf %937, %911 : vector<1x4x16xf32>
    %939 = arith.addf %908, %938 : vector<1x4x16xf32>
    %cst_85 = arith.constant 0.000000e+00 : f32
    %940 = vector.broadcast %cst_85 : f32 to vector<1x1x16xf32>
    %941 = vector.extract_strided_slice %302 {offsets = [0, 0, 0], sizes = [1, 3, 16], strides = [1, 1, 1]} : vector<1x4x16xf32> to vector<1x3x16xf32>
    %942 = tpu.concatenate %940, %941 in 1 : vector<1x1x16xf32>, vector<1x3x16xf32> -> vector<1x4x16xf32>
    %c100 = arith.constant 100 : index
    %943 = memref.load %arg1[%c100] : memref<294xf32, #tpu.memory_space<smem>>
    %944 = vector.broadcast %943 : f32 to vector<1x4x16xf32>
    %945 = arith.mulf %944, %942 : vector<1x4x16xf32>
    %946 = arith.addf %915, %945 : vector<1x4x16xf32>
    %c107 = arith.constant 107 : index
    %947 = memref.load %arg1[%c107] : memref<294xf32, #tpu.memory_space<smem>>
    %948 = vector.broadcast %947 : f32 to vector<1x4x16xf32>
    %949 = arith.mulf %948, %942 : vector<1x4x16xf32>
    %950 = arith.addf %919, %949 : vector<1x4x16xf32>
    %c114 = arith.constant 114 : index
    %951 = memref.load %arg1[%c114] : memref<294xf32, #tpu.memory_space<smem>>
    %952 = vector.broadcast %951 : f32 to vector<1x4x16xf32>
    %953 = arith.mulf %952, %942 : vector<1x4x16xf32>
    %954 = arith.addf %923, %953 : vector<1x4x16xf32>
    %c121 = arith.constant 121 : index
    %955 = memref.load %arg1[%c121] : memref<294xf32, #tpu.memory_space<smem>>
    %956 = vector.broadcast %955 : f32 to vector<1x4x16xf32>
    %957 = arith.mulf %956, %942 : vector<1x4x16xf32>
    %958 = arith.addf %927, %957 : vector<1x4x16xf32>
    %c128 = arith.constant 128 : index
    %959 = memref.load %arg1[%c128] : memref<294xf32, #tpu.memory_space<smem>>
    %960 = vector.broadcast %959 : f32 to vector<1x4x16xf32>
    %961 = arith.mulf %960, %942 : vector<1x4x16xf32>
    %962 = arith.addf %931, %961 : vector<1x4x16xf32>
    %c135 = arith.constant 135 : index
    %963 = memref.load %arg1[%c135] : memref<294xf32, #tpu.memory_space<smem>>
    %964 = vector.broadcast %963 : f32 to vector<1x4x16xf32>
    %965 = arith.mulf %964, %942 : vector<1x4x16xf32>
    %966 = arith.addf %935, %965 : vector<1x4x16xf32>
    %c142 = arith.constant 142 : index
    %967 = memref.load %arg1[%c142] : memref<294xf32, #tpu.memory_space<smem>>
    %968 = vector.broadcast %967 : f32 to vector<1x4x16xf32>
    %969 = arith.mulf %968, %942 : vector<1x4x16xf32>
    %970 = arith.addf %939, %969 : vector<1x4x16xf32>
    %cst_86 = arith.constant 0.000000e+00 : f32
    %971 = vector.broadcast %cst_86 : f32 to vector<1x1x16xf32>
    %972 = vector.extract_strided_slice %313 {offsets = [0, 0, 0], sizes = [1, 3, 16], strides = [1, 1, 1]} : vector<1x4x16xf32> to vector<1x3x16xf32>
    %973 = tpu.concatenate %971, %972 in 1 : vector<1x1x16xf32>, vector<1x3x16xf32> -> vector<1x4x16xf32>
    %c149 = arith.constant 149 : index
    %974 = memref.load %arg1[%c149] : memref<294xf32, #tpu.memory_space<smem>>
    %975 = vector.broadcast %974 : f32 to vector<1x4x16xf32>
    %976 = arith.mulf %975, %973 : vector<1x4x16xf32>
    %977 = arith.addf %946, %976 : vector<1x4x16xf32>
    %c156 = arith.constant 156 : index
    %978 = memref.load %arg1[%c156] : memref<294xf32, #tpu.memory_space<smem>>
    %979 = vector.broadcast %978 : f32 to vector<1x4x16xf32>
    %980 = arith.mulf %979, %973 : vector<1x4x16xf32>
    %981 = arith.addf %950, %980 : vector<1x4x16xf32>
    %c163 = arith.constant 163 : index
    %982 = memref.load %arg1[%c163] : memref<294xf32, #tpu.memory_space<smem>>
    %983 = vector.broadcast %982 : f32 to vector<1x4x16xf32>
    %984 = arith.mulf %983, %973 : vector<1x4x16xf32>
    %985 = arith.addf %954, %984 : vector<1x4x16xf32>
    %c170 = arith.constant 170 : index
    %986 = memref.load %arg1[%c170] : memref<294xf32, #tpu.memory_space<smem>>
    %987 = vector.broadcast %986 : f32 to vector<1x4x16xf32>
    %988 = arith.mulf %987, %973 : vector<1x4x16xf32>
    %989 = arith.addf %958, %988 : vector<1x4x16xf32>
    %c177 = arith.constant 177 : index
    %990 = memref.load %arg1[%c177] : memref<294xf32, #tpu.memory_space<smem>>
    %991 = vector.broadcast %990 : f32 to vector<1x4x16xf32>
    %992 = arith.mulf %991, %973 : vector<1x4x16xf32>
    %993 = arith.addf %962, %992 : vector<1x4x16xf32>
    %c184 = arith.constant 184 : index
    %994 = memref.load %arg1[%c184] : memref<294xf32, #tpu.memory_space<smem>>
    %995 = vector.broadcast %994 : f32 to vector<1x4x16xf32>
    %996 = arith.mulf %995, %973 : vector<1x4x16xf32>
    %997 = arith.addf %966, %996 : vector<1x4x16xf32>
    %c191 = arith.constant 191 : index
    %998 = memref.load %arg1[%c191] : memref<294xf32, #tpu.memory_space<smem>>
    %999 = vector.broadcast %998 : f32 to vector<1x4x16xf32>
    %1000 = arith.mulf %999, %973 : vector<1x4x16xf32>
    %1001 = arith.addf %970, %1000 : vector<1x4x16xf32>
    %c101 = arith.constant 101 : index
    %1002 = memref.load %arg1[%c101] : memref<294xf32, #tpu.memory_space<smem>>
    %1003 = vector.broadcast %1002 : f32 to vector<1x4x16xf32>
    %1004 = arith.mulf %1003, %302 : vector<1x4x16xf32>
    %1005 = arith.addf %977, %1004 : vector<1x4x16xf32>
    %c108 = arith.constant 108 : index
    %1006 = memref.load %arg1[%c108] : memref<294xf32, #tpu.memory_space<smem>>
    %1007 = vector.broadcast %1006 : f32 to vector<1x4x16xf32>
    %1008 = arith.mulf %1007, %302 : vector<1x4x16xf32>
    %1009 = arith.addf %981, %1008 : vector<1x4x16xf32>
    %c115 = arith.constant 115 : index
    %1010 = memref.load %arg1[%c115] : memref<294xf32, #tpu.memory_space<smem>>
    %1011 = vector.broadcast %1010 : f32 to vector<1x4x16xf32>
    %1012 = arith.mulf %1011, %302 : vector<1x4x16xf32>
    %1013 = arith.addf %985, %1012 : vector<1x4x16xf32>
    %c122 = arith.constant 122 : index
    %1014 = memref.load %arg1[%c122] : memref<294xf32, #tpu.memory_space<smem>>
    %1015 = vector.broadcast %1014 : f32 to vector<1x4x16xf32>
    %1016 = arith.mulf %1015, %302 : vector<1x4x16xf32>
    %1017 = arith.addf %989, %1016 : vector<1x4x16xf32>
    %c129 = arith.constant 129 : index
    %1018 = memref.load %arg1[%c129] : memref<294xf32, #tpu.memory_space<smem>>
    %1019 = vector.broadcast %1018 : f32 to vector<1x4x16xf32>
    %1020 = arith.mulf %1019, %302 : vector<1x4x16xf32>
    %1021 = arith.addf %993, %1020 : vector<1x4x16xf32>
    %c136 = arith.constant 136 : index
    %1022 = memref.load %arg1[%c136] : memref<294xf32, #tpu.memory_space<smem>>
    %1023 = vector.broadcast %1022 : f32 to vector<1x4x16xf32>
    %1024 = arith.mulf %1023, %302 : vector<1x4x16xf32>
    %1025 = arith.addf %997, %1024 : vector<1x4x16xf32>
    %c143 = arith.constant 143 : index
    %1026 = memref.load %arg1[%c143] : memref<294xf32, #tpu.memory_space<smem>>
    %1027 = vector.broadcast %1026 : f32 to vector<1x4x16xf32>
    %1028 = arith.mulf %1027, %302 : vector<1x4x16xf32>
    %1029 = arith.addf %1001, %1028 : vector<1x4x16xf32>
    %c150 = arith.constant 150 : index
    %1030 = memref.load %arg1[%c150] : memref<294xf32, #tpu.memory_space<smem>>
    %1031 = vector.broadcast %1030 : f32 to vector<1x4x16xf32>
    %1032 = arith.mulf %1031, %313 : vector<1x4x16xf32>
    %1033 = arith.addf %1005, %1032 : vector<1x4x16xf32>
    %c157 = arith.constant 157 : index
    %1034 = memref.load %arg1[%c157] : memref<294xf32, #tpu.memory_space<smem>>
    %1035 = vector.broadcast %1034 : f32 to vector<1x4x16xf32>
    %1036 = arith.mulf %1035, %313 : vector<1x4x16xf32>
    %1037 = arith.addf %1009, %1036 : vector<1x4x16xf32>
    %c164 = arith.constant 164 : index
    %1038 = memref.load %arg1[%c164] : memref<294xf32, #tpu.memory_space<smem>>
    %1039 = vector.broadcast %1038 : f32 to vector<1x4x16xf32>
    %1040 = arith.mulf %1039, %313 : vector<1x4x16xf32>
    %1041 = arith.addf %1013, %1040 : vector<1x4x16xf32>
    %c171 = arith.constant 171 : index
    %1042 = memref.load %arg1[%c171] : memref<294xf32, #tpu.memory_space<smem>>
    %1043 = vector.broadcast %1042 : f32 to vector<1x4x16xf32>
    %1044 = arith.mulf %1043, %313 : vector<1x4x16xf32>
    %1045 = arith.addf %1017, %1044 : vector<1x4x16xf32>
    %c178 = arith.constant 178 : index
    %1046 = memref.load %arg1[%c178] : memref<294xf32, #tpu.memory_space<smem>>
    %1047 = vector.broadcast %1046 : f32 to vector<1x4x16xf32>
    %1048 = arith.mulf %1047, %313 : vector<1x4x16xf32>
    %1049 = arith.addf %1021, %1048 : vector<1x4x16xf32>
    %c185 = arith.constant 185 : index
    %1050 = memref.load %arg1[%c185] : memref<294xf32, #tpu.memory_space<smem>>
    %1051 = vector.broadcast %1050 : f32 to vector<1x4x16xf32>
    %1052 = arith.mulf %1051, %313 : vector<1x4x16xf32>
    %1053 = arith.addf %1025, %1052 : vector<1x4x16xf32>
    %c192 = arith.constant 192 : index
    %1054 = memref.load %arg1[%c192] : memref<294xf32, #tpu.memory_space<smem>>
    %1055 = vector.broadcast %1054 : f32 to vector<1x4x16xf32>
    %1056 = arith.mulf %1055, %313 : vector<1x4x16xf32>
    %1057 = arith.addf %1029, %1056 : vector<1x4x16xf32>
    %cst_87 = arith.constant 0.000000e+00 : f32
    %1058 = vector.broadcast %cst_87 : f32 to vector<1x1x16xf32>
    %1059 = vector.extract_strided_slice %302 {offsets = [0, 1, 0], sizes = [1, 3, 16], strides = [1, 1, 1]} : vector<1x4x16xf32> to vector<1x3x16xf32>
    %1060 = tpu.concatenate %1059, %1058 in 1 : vector<1x3x16xf32>, vector<1x1x16xf32> -> vector<1x4x16xf32>
    %c102 = arith.constant 102 : index
    %1061 = memref.load %arg1[%c102] : memref<294xf32, #tpu.memory_space<smem>>
    %1062 = vector.broadcast %1061 : f32 to vector<1x4x16xf32>
    %1063 = arith.mulf %1062, %1060 : vector<1x4x16xf32>
    %1064 = arith.addf %1033, %1063 : vector<1x4x16xf32>
    %c109 = arith.constant 109 : index
    %1065 = memref.load %arg1[%c109] : memref<294xf32, #tpu.memory_space<smem>>
    %1066 = vector.broadcast %1065 : f32 to vector<1x4x16xf32>
    %1067 = arith.mulf %1066, %1060 : vector<1x4x16xf32>
    %1068 = arith.addf %1037, %1067 : vector<1x4x16xf32>
    %c116 = arith.constant 116 : index
    %1069 = memref.load %arg1[%c116] : memref<294xf32, #tpu.memory_space<smem>>
    %1070 = vector.broadcast %1069 : f32 to vector<1x4x16xf32>
    %1071 = arith.mulf %1070, %1060 : vector<1x4x16xf32>
    %1072 = arith.addf %1041, %1071 : vector<1x4x16xf32>
    %c123 = arith.constant 123 : index
    %1073 = memref.load %arg1[%c123] : memref<294xf32, #tpu.memory_space<smem>>
    %1074 = vector.broadcast %1073 : f32 to vector<1x4x16xf32>
    %1075 = arith.mulf %1074, %1060 : vector<1x4x16xf32>
    %1076 = arith.addf %1045, %1075 : vector<1x4x16xf32>
    %c130 = arith.constant 130 : index
    %1077 = memref.load %arg1[%c130] : memref<294xf32, #tpu.memory_space<smem>>
    %1078 = vector.broadcast %1077 : f32 to vector<1x4x16xf32>
    %1079 = arith.mulf %1078, %1060 : vector<1x4x16xf32>
    %1080 = arith.addf %1049, %1079 : vector<1x4x16xf32>
    %c137 = arith.constant 137 : index
    %1081 = memref.load %arg1[%c137] : memref<294xf32, #tpu.memory_space<smem>>
    %1082 = vector.broadcast %1081 : f32 to vector<1x4x16xf32>
    %1083 = arith.mulf %1082, %1060 : vector<1x4x16xf32>
    %1084 = arith.addf %1053, %1083 : vector<1x4x16xf32>
    %c144 = arith.constant 144 : index
    %1085 = memref.load %arg1[%c144] : memref<294xf32, #tpu.memory_space<smem>>
    %1086 = vector.broadcast %1085 : f32 to vector<1x4x16xf32>
    %1087 = arith.mulf %1086, %1060 : vector<1x4x16xf32>
    %1088 = arith.addf %1057, %1087 : vector<1x4x16xf32>
    %cst_88 = arith.constant 0.000000e+00 : f32
    %1089 = vector.broadcast %cst_88 : f32 to vector<1x1x16xf32>
    %1090 = vector.extract_strided_slice %313 {offsets = [0, 1, 0], sizes = [1, 3, 16], strides = [1, 1, 1]} : vector<1x4x16xf32> to vector<1x3x16xf32>
    %1091 = tpu.concatenate %1090, %1089 in 1 : vector<1x3x16xf32>, vector<1x1x16xf32> -> vector<1x4x16xf32>
    %c151 = arith.constant 151 : index
    %1092 = memref.load %arg1[%c151] : memref<294xf32, #tpu.memory_space<smem>>
    %1093 = vector.broadcast %1092 : f32 to vector<1x4x16xf32>
    %1094 = arith.mulf %1093, %1091 : vector<1x4x16xf32>
    %1095 = arith.addf %1064, %1094 : vector<1x4x16xf32>
    %c158 = arith.constant 158 : index
    %1096 = memref.load %arg1[%c158] : memref<294xf32, #tpu.memory_space<smem>>
    %1097 = vector.broadcast %1096 : f32 to vector<1x4x16xf32>
    %1098 = arith.mulf %1097, %1091 : vector<1x4x16xf32>
    %1099 = arith.addf %1068, %1098 : vector<1x4x16xf32>
    %c165 = arith.constant 165 : index
    %1100 = memref.load %arg1[%c165] : memref<294xf32, #tpu.memory_space<smem>>
    %1101 = vector.broadcast %1100 : f32 to vector<1x4x16xf32>
    %1102 = arith.mulf %1101, %1091 : vector<1x4x16xf32>
    %1103 = arith.addf %1072, %1102 : vector<1x4x16xf32>
    %c172 = arith.constant 172 : index
    %1104 = memref.load %arg1[%c172] : memref<294xf32, #tpu.memory_space<smem>>
    %1105 = vector.broadcast %1104 : f32 to vector<1x4x16xf32>
    %1106 = arith.mulf %1105, %1091 : vector<1x4x16xf32>
    %1107 = arith.addf %1076, %1106 : vector<1x4x16xf32>
    %c179 = arith.constant 179 : index
    %1108 = memref.load %arg1[%c179] : memref<294xf32, #tpu.memory_space<smem>>
    %1109 = vector.broadcast %1108 : f32 to vector<1x4x16xf32>
    %1110 = arith.mulf %1109, %1091 : vector<1x4x16xf32>
    %1111 = arith.addf %1080, %1110 : vector<1x4x16xf32>
    %c186 = arith.constant 186 : index
    %1112 = memref.load %arg1[%c186] : memref<294xf32, #tpu.memory_space<smem>>
    %1113 = vector.broadcast %1112 : f32 to vector<1x4x16xf32>
    %1114 = arith.mulf %1113, %1091 : vector<1x4x16xf32>
    %1115 = arith.addf %1084, %1114 : vector<1x4x16xf32>
    %c193 = arith.constant 193 : index
    %1116 = memref.load %arg1[%c193] : memref<294xf32, #tpu.memory_space<smem>>
    %1117 = vector.broadcast %1116 : f32 to vector<1x4x16xf32>
    %1118 = arith.mulf %1117, %1091 : vector<1x4x16xf32>
    %1119 = arith.addf %1088, %1118 : vector<1x4x16xf32>
    %cst_89 = arith.constant 0.000000e+00 : f32
    %1120 = vector.broadcast %cst_89 : f32 to vector<1x2x16xf32>
    %1121 = vector.extract_strided_slice %302 {offsets = [0, 2, 0], sizes = [1, 2, 16], strides = [1, 1, 1]} : vector<1x4x16xf32> to vector<1x2x16xf32>
    %1122 = tpu.concatenate %1121, %1120 in 1 : vector<1x2x16xf32>, vector<1x2x16xf32> -> vector<1x4x16xf32>
    %c103 = arith.constant 103 : index
    %1123 = memref.load %arg1[%c103] : memref<294xf32, #tpu.memory_space<smem>>
    %1124 = vector.broadcast %1123 : f32 to vector<1x4x16xf32>
    %1125 = arith.mulf %1124, %1122 : vector<1x4x16xf32>
    %1126 = arith.addf %1095, %1125 : vector<1x4x16xf32>
    %c110 = arith.constant 110 : index
    %1127 = memref.load %arg1[%c110] : memref<294xf32, #tpu.memory_space<smem>>
    %1128 = vector.broadcast %1127 : f32 to vector<1x4x16xf32>
    %1129 = arith.mulf %1128, %1122 : vector<1x4x16xf32>
    %1130 = arith.addf %1099, %1129 : vector<1x4x16xf32>
    %c117 = arith.constant 117 : index
    %1131 = memref.load %arg1[%c117] : memref<294xf32, #tpu.memory_space<smem>>
    %1132 = vector.broadcast %1131 : f32 to vector<1x4x16xf32>
    %1133 = arith.mulf %1132, %1122 : vector<1x4x16xf32>
    %1134 = arith.addf %1103, %1133 : vector<1x4x16xf32>
    %c124 = arith.constant 124 : index
    %1135 = memref.load %arg1[%c124] : memref<294xf32, #tpu.memory_space<smem>>
    %1136 = vector.broadcast %1135 : f32 to vector<1x4x16xf32>
    %1137 = arith.mulf %1136, %1122 : vector<1x4x16xf32>
    %1138 = arith.addf %1107, %1137 : vector<1x4x16xf32>
    %c131 = arith.constant 131 : index
    %1139 = memref.load %arg1[%c131] : memref<294xf32, #tpu.memory_space<smem>>
    %1140 = vector.broadcast %1139 : f32 to vector<1x4x16xf32>
    %1141 = arith.mulf %1140, %1122 : vector<1x4x16xf32>
    %1142 = arith.addf %1111, %1141 : vector<1x4x16xf32>
    %c138 = arith.constant 138 : index
    %1143 = memref.load %arg1[%c138] : memref<294xf32, #tpu.memory_space<smem>>
    %1144 = vector.broadcast %1143 : f32 to vector<1x4x16xf32>
    %1145 = arith.mulf %1144, %1122 : vector<1x4x16xf32>
    %1146 = arith.addf %1115, %1145 : vector<1x4x16xf32>
    %c145 = arith.constant 145 : index
    %1147 = memref.load %arg1[%c145] : memref<294xf32, #tpu.memory_space<smem>>
    %1148 = vector.broadcast %1147 : f32 to vector<1x4x16xf32>
    %1149 = arith.mulf %1148, %1122 : vector<1x4x16xf32>
    %1150 = arith.addf %1119, %1149 : vector<1x4x16xf32>
    %cst_90 = arith.constant 0.000000e+00 : f32
    %1151 = vector.broadcast %cst_90 : f32 to vector<1x2x16xf32>
    %1152 = vector.extract_strided_slice %313 {offsets = [0, 2, 0], sizes = [1, 2, 16], strides = [1, 1, 1]} : vector<1x4x16xf32> to vector<1x2x16xf32>
    %1153 = tpu.concatenate %1152, %1151 in 1 : vector<1x2x16xf32>, vector<1x2x16xf32> -> vector<1x4x16xf32>
    %c152 = arith.constant 152 : index
    %1154 = memref.load %arg1[%c152] : memref<294xf32, #tpu.memory_space<smem>>
    %1155 = vector.broadcast %1154 : f32 to vector<1x4x16xf32>
    %1156 = arith.mulf %1155, %1153 : vector<1x4x16xf32>
    %1157 = arith.addf %1126, %1156 : vector<1x4x16xf32>
    %c159 = arith.constant 159 : index
    %1158 = memref.load %arg1[%c159] : memref<294xf32, #tpu.memory_space<smem>>
    %1159 = vector.broadcast %1158 : f32 to vector<1x4x16xf32>
    %1160 = arith.mulf %1159, %1153 : vector<1x4x16xf32>
    %1161 = arith.addf %1130, %1160 : vector<1x4x16xf32>
    %c166 = arith.constant 166 : index
    %1162 = memref.load %arg1[%c166] : memref<294xf32, #tpu.memory_space<smem>>
    %1163 = vector.broadcast %1162 : f32 to vector<1x4x16xf32>
    %1164 = arith.mulf %1163, %1153 : vector<1x4x16xf32>
    %1165 = arith.addf %1134, %1164 : vector<1x4x16xf32>
    %c173 = arith.constant 173 : index
    %1166 = memref.load %arg1[%c173] : memref<294xf32, #tpu.memory_space<smem>>
    %1167 = vector.broadcast %1166 : f32 to vector<1x4x16xf32>
    %1168 = arith.mulf %1167, %1153 : vector<1x4x16xf32>
    %1169 = arith.addf %1138, %1168 : vector<1x4x16xf32>
    %c180 = arith.constant 180 : index
    %1170 = memref.load %arg1[%c180] : memref<294xf32, #tpu.memory_space<smem>>
    %1171 = vector.broadcast %1170 : f32 to vector<1x4x16xf32>
    %1172 = arith.mulf %1171, %1153 : vector<1x4x16xf32>
    %1173 = arith.addf %1142, %1172 : vector<1x4x16xf32>
    %c187 = arith.constant 187 : index
    %1174 = memref.load %arg1[%c187] : memref<294xf32, #tpu.memory_space<smem>>
    %1175 = vector.broadcast %1174 : f32 to vector<1x4x16xf32>
    %1176 = arith.mulf %1175, %1153 : vector<1x4x16xf32>
    %1177 = arith.addf %1146, %1176 : vector<1x4x16xf32>
    %c194 = arith.constant 194 : index
    %1178 = memref.load %arg1[%c194] : memref<294xf32, #tpu.memory_space<smem>>
    %1179 = vector.broadcast %1178 : f32 to vector<1x4x16xf32>
    %1180 = arith.mulf %1179, %1153 : vector<1x4x16xf32>
    %1181 = arith.addf %1150, %1180 : vector<1x4x16xf32>
    %cst_91 = arith.constant 0.000000e+00 : f32
    %1182 = vector.broadcast %cst_91 : f32 to vector<1x3x16xf32>
    %1183 = vector.extract_strided_slice %302 {offsets = [0, 3, 0], sizes = [1, 1, 16], strides = [1, 1, 1]} : vector<1x4x16xf32> to vector<1x1x16xf32>
    %1184 = tpu.concatenate %1183, %1182 in 1 : vector<1x1x16xf32>, vector<1x3x16xf32> -> vector<1x4x16xf32>
    %c104 = arith.constant 104 : index
    %1185 = memref.load %arg1[%c104] : memref<294xf32, #tpu.memory_space<smem>>
    %1186 = vector.broadcast %1185 : f32 to vector<1x4x16xf32>
    %1187 = arith.mulf %1186, %1184 : vector<1x4x16xf32>
    %1188 = arith.addf %1157, %1187 : vector<1x4x16xf32>
    %c111 = arith.constant 111 : index
    %1189 = memref.load %arg1[%c111] : memref<294xf32, #tpu.memory_space<smem>>
    %1190 = vector.broadcast %1189 : f32 to vector<1x4x16xf32>
    %1191 = arith.mulf %1190, %1184 : vector<1x4x16xf32>
    %1192 = arith.addf %1161, %1191 : vector<1x4x16xf32>
    %c118 = arith.constant 118 : index
    %1193 = memref.load %arg1[%c118] : memref<294xf32, #tpu.memory_space<smem>>
    %1194 = vector.broadcast %1193 : f32 to vector<1x4x16xf32>
    %1195 = arith.mulf %1194, %1184 : vector<1x4x16xf32>
    %1196 = arith.addf %1165, %1195 : vector<1x4x16xf32>
    %c125 = arith.constant 125 : index
    %1197 = memref.load %arg1[%c125] : memref<294xf32, #tpu.memory_space<smem>>
    %1198 = vector.broadcast %1197 : f32 to vector<1x4x16xf32>
    %1199 = arith.mulf %1198, %1184 : vector<1x4x16xf32>
    %1200 = arith.addf %1169, %1199 : vector<1x4x16xf32>
    %c132 = arith.constant 132 : index
    %1201 = memref.load %arg1[%c132] : memref<294xf32, #tpu.memory_space<smem>>
    %1202 = vector.broadcast %1201 : f32 to vector<1x4x16xf32>
    %1203 = arith.mulf %1202, %1184 : vector<1x4x16xf32>
    %1204 = arith.addf %1173, %1203 : vector<1x4x16xf32>
    %c139 = arith.constant 139 : index
    %1205 = memref.load %arg1[%c139] : memref<294xf32, #tpu.memory_space<smem>>
    %1206 = vector.broadcast %1205 : f32 to vector<1x4x16xf32>
    %1207 = arith.mulf %1206, %1184 : vector<1x4x16xf32>
    %1208 = arith.addf %1177, %1207 : vector<1x4x16xf32>
    %c146 = arith.constant 146 : index
    %1209 = memref.load %arg1[%c146] : memref<294xf32, #tpu.memory_space<smem>>
    %1210 = vector.broadcast %1209 : f32 to vector<1x4x16xf32>
    %1211 = arith.mulf %1210, %1184 : vector<1x4x16xf32>
    %1212 = arith.addf %1181, %1211 : vector<1x4x16xf32>
    %cst_92 = arith.constant 0.000000e+00 : f32
    %1213 = vector.broadcast %cst_92 : f32 to vector<1x3x16xf32>
    %1214 = vector.extract_strided_slice %313 {offsets = [0, 3, 0], sizes = [1, 1, 16], strides = [1, 1, 1]} : vector<1x4x16xf32> to vector<1x1x16xf32>
    %1215 = tpu.concatenate %1214, %1213 in 1 : vector<1x1x16xf32>, vector<1x3x16xf32> -> vector<1x4x16xf32>
    %c153 = arith.constant 153 : index
    %1216 = memref.load %arg1[%c153] : memref<294xf32, #tpu.memory_space<smem>>
    %1217 = vector.broadcast %1216 : f32 to vector<1x4x16xf32>
    %1218 = arith.mulf %1217, %1215 : vector<1x4x16xf32>
    %1219 = arith.addf %1188, %1218 : vector<1x4x16xf32>
    %c160 = arith.constant 160 : index
    %1220 = memref.load %arg1[%c160] : memref<294xf32, #tpu.memory_space<smem>>
    %1221 = vector.broadcast %1220 : f32 to vector<1x4x16xf32>
    %1222 = arith.mulf %1221, %1215 : vector<1x4x16xf32>
    %1223 = arith.addf %1192, %1222 : vector<1x4x16xf32>
    %c167 = arith.constant 167 : index
    %1224 = memref.load %arg1[%c167] : memref<294xf32, #tpu.memory_space<smem>>
    %1225 = vector.broadcast %1224 : f32 to vector<1x4x16xf32>
    %1226 = arith.mulf %1225, %1215 : vector<1x4x16xf32>
    %1227 = arith.addf %1196, %1226 : vector<1x4x16xf32>
    %c174 = arith.constant 174 : index
    %1228 = memref.load %arg1[%c174] : memref<294xf32, #tpu.memory_space<smem>>
    %1229 = vector.broadcast %1228 : f32 to vector<1x4x16xf32>
    %1230 = arith.mulf %1229, %1215 : vector<1x4x16xf32>
    %1231 = arith.addf %1200, %1230 : vector<1x4x16xf32>
    %c181 = arith.constant 181 : index
    %1232 = memref.load %arg1[%c181] : memref<294xf32, #tpu.memory_space<smem>>
    %1233 = vector.broadcast %1232 : f32 to vector<1x4x16xf32>
    %1234 = arith.mulf %1233, %1215 : vector<1x4x16xf32>
    %1235 = arith.addf %1204, %1234 : vector<1x4x16xf32>
    %c188 = arith.constant 188 : index
    %1236 = memref.load %arg1[%c188] : memref<294xf32, #tpu.memory_space<smem>>
    %1237 = vector.broadcast %1236 : f32 to vector<1x4x16xf32>
    %1238 = arith.mulf %1237, %1215 : vector<1x4x16xf32>
    %1239 = arith.addf %1208, %1238 : vector<1x4x16xf32>
    %c195 = arith.constant 195 : index
    %1240 = memref.load %arg1[%c195] : memref<294xf32, #tpu.memory_space<smem>>
    %1241 = vector.broadcast %1240 : f32 to vector<1x4x16xf32>
    %1242 = arith.mulf %1241, %1215 : vector<1x4x16xf32>
    %1243 = arith.addf %1212, %1242 : vector<1x4x16xf32>
    %cst_93 = arith.constant 0.000000e+00 : f32
    %1244 = vector.broadcast %cst_93 : f32 to vector<1x4x3xf32>
    %1245 = vector.extract_strided_slice %1219 {offsets = [0, 0, 0], sizes = [1, 4, 13], strides = [1, 1, 1]} : vector<1x4x16xf32> to vector<1x4x13xf32>
    %1246 = tpu.concatenate %1244, %1245 in 2 : vector<1x4x3xf32>, vector<1x4x13xf32> -> vector<1x4x16xf32>
    %cst_94 = arith.constant 0.000000e+00 : f32
    %1247 = vector.broadcast %cst_94 : f32 to vector<1x4x2xf32>
    %1248 = vector.extract_strided_slice %1223 {offsets = [0, 0, 0], sizes = [1, 4, 14], strides = [1, 1, 1]} : vector<1x4x16xf32> to vector<1x4x14xf32>
    %1249 = tpu.concatenate %1247, %1248 in 2 : vector<1x4x2xf32>, vector<1x4x14xf32> -> vector<1x4x16xf32>
    %cst_95 = arith.constant 0.000000e+00 : f32
    %1250 = vector.broadcast %cst_95 : f32 to vector<1x4x1xf32>
    %1251 = vector.extract_strided_slice %1227 {offsets = [0, 0, 0], sizes = [1, 4, 15], strides = [1, 1, 1]} : vector<1x4x16xf32> to vector<1x4x15xf32>
    %1252 = tpu.concatenate %1250, %1251 in 2 : vector<1x4x1xf32>, vector<1x4x15xf32> -> vector<1x4x16xf32>
    %cst_96 = arith.constant 0.000000e+00 : f32
    %1253 = vector.broadcast %cst_96 : f32 to vector<1x4x1xf32>
    %1254 = vector.extract_strided_slice %1235 {offsets = [0, 0, 1], sizes = [1, 4, 15], strides = [1, 1, 1]} : vector<1x4x16xf32> to vector<1x4x15xf32>
    %1255 = tpu.concatenate %1254, %1253 in 2 : vector<1x4x15xf32>, vector<1x4x1xf32> -> vector<1x4x16xf32>
    %cst_97 = arith.constant 0.000000e+00 : f32
    %1256 = vector.broadcast %cst_97 : f32 to vector<1x4x2xf32>
    %1257 = vector.extract_strided_slice %1239 {offsets = [0, 0, 2], sizes = [1, 4, 14], strides = [1, 1, 1]} : vector<1x4x16xf32> to vector<1x4x14xf32>
    %1258 = tpu.concatenate %1257, %1256 in 2 : vector<1x4x14xf32>, vector<1x4x2xf32> -> vector<1x4x16xf32>
    %cst_98 = arith.constant 0.000000e+00 : f32
    %1259 = vector.broadcast %cst_98 : f32 to vector<1x4x3xf32>
    %1260 = vector.extract_strided_slice %1243 {offsets = [0, 0, 3], sizes = [1, 4, 13], strides = [1, 1, 1]} : vector<1x4x16xf32> to vector<1x4x13xf32>
    %1261 = tpu.concatenate %1260, %1259 in 2 : vector<1x4x13xf32>, vector<1x4x3xf32> -> vector<1x4x16xf32>
    %1262 = arith.addf %1246, %1249 : vector<1x4x16xf32>
    %1263 = arith.addf %1252, %1231 : vector<1x4x16xf32>
    %1264 = arith.addf %1255, %1258 : vector<1x4x16xf32>
    %1265 = arith.addf %1262, %1263 : vector<1x4x16xf32>
    %1266 = arith.addf %1264, %1261 : vector<1x4x16xf32>
    %1267 = arith.addf %1265, %1266 : vector<1x4x16xf32>
    %c1_99 = arith.constant 1 : index
    %1268 = memref.load %arg2[%c1_99] : memref<3xf32, #tpu.memory_space<smem>>
    %1269 = vector.broadcast %1268 : f32 to vector<1x4x16xf32>
    %1270 = arith.addf %1267, %1269 : vector<1x4x16xf32>
    %1271 = arith.negf %1270 : vector<1x4x16xf32>
    %1272 = math.exp %1271 : vector<1x4x16xf32>
    %cst_100 = arith.constant 1.000000e+00 : f32
    %1273 = vector.broadcast %cst_100 : f32 to vector<1x4x16xf32>
    %1274 = arith.addf %1273, %1272 : vector<1x4x16xf32>
    %1275 = arith.divf %1273, %1274 : vector<1x4x16xf32>
    %cst_101 = arith.constant 0.000000e+00 : f32
    %1276 = vector.broadcast %cst_101 : f32 to vector<1x3xf32>
    %1277 = vector.extract_strided_slice %1 {offsets = [0, 0], sizes = [1, 253], strides = [1, 1]} : vector<1x256xf32> to vector<1x253xf32>
    %1278 = tpu.concatenate %1276, %1277 in 1 : vector<1x3xf32>, vector<1x253xf32> -> vector<1x256xf32>
    %cst_102 = arith.constant 0.000000e+00 : f32
    %1279 = vector.broadcast %cst_102 : f32 to vector<1x256xf32>
    %1280 = arith.select %324, %1278, %1279 : vector<1x256xi1>, vector<1x256xf32>
    %c196 = arith.constant 196 : index
    %1281 = memref.load %arg1[%c196] : memref<294xf32, #tpu.memory_space<smem>>
    %1282 = vector.broadcast %1281 : f32 to vector<1x256xf32>
    %1283 = arith.mulf %1282, %1280 : vector<1x256xf32>
    %c203 = arith.constant 203 : index
    %1284 = memref.load %arg1[%c203] : memref<294xf32, #tpu.memory_space<smem>>
    %1285 = vector.broadcast %1284 : f32 to vector<1x256xf32>
    %1286 = arith.mulf %1285, %1280 : vector<1x256xf32>
    %c210 = arith.constant 210 : index
    %1287 = memref.load %arg1[%c210] : memref<294xf32, #tpu.memory_space<smem>>
    %1288 = vector.broadcast %1287 : f32 to vector<1x256xf32>
    %1289 = arith.mulf %1288, %1280 : vector<1x256xf32>
    %c217 = arith.constant 217 : index
    %1290 = memref.load %arg1[%c217] : memref<294xf32, #tpu.memory_space<smem>>
    %1291 = vector.broadcast %1290 : f32 to vector<1x256xf32>
    %1292 = arith.mulf %1291, %1280 : vector<1x256xf32>
    %c224 = arith.constant 224 : index
    %1293 = memref.load %arg1[%c224] : memref<294xf32, #tpu.memory_space<smem>>
    %1294 = vector.broadcast %1293 : f32 to vector<1x256xf32>
    %1295 = arith.mulf %1294, %1280 : vector<1x256xf32>
    %c231 = arith.constant 231 : index
    %1296 = memref.load %arg1[%c231] : memref<294xf32, #tpu.memory_space<smem>>
    %1297 = vector.broadcast %1296 : f32 to vector<1x256xf32>
    %1298 = arith.mulf %1297, %1280 : vector<1x256xf32>
    %c238 = arith.constant 238 : index
    %1299 = memref.load %arg1[%c238] : memref<294xf32, #tpu.memory_space<smem>>
    %1300 = vector.broadcast %1299 : f32 to vector<1x256xf32>
    %1301 = arith.mulf %1300, %1280 : vector<1x256xf32>
    %cst_103 = arith.constant 0.000000e+00 : f32
    %1302 = vector.broadcast %cst_103 : f32 to vector<1x3xf32>
    %1303 = vector.extract_strided_slice %4 {offsets = [0, 0], sizes = [1, 253], strides = [1, 1]} : vector<1x256xf32> to vector<1x253xf32>
    %1304 = tpu.concatenate %1302, %1303 in 1 : vector<1x3xf32>, vector<1x253xf32> -> vector<1x256xf32>
    %cst_104 = arith.constant 0.000000e+00 : f32
    %1305 = vector.broadcast %cst_104 : f32 to vector<1x256xf32>
    %1306 = arith.select %324, %1304, %1305 : vector<1x256xi1>, vector<1x256xf32>
    %c245 = arith.constant 245 : index
    %1307 = memref.load %arg1[%c245] : memref<294xf32, #tpu.memory_space<smem>>
    %1308 = vector.broadcast %1307 : f32 to vector<1x256xf32>
    %1309 = arith.mulf %1308, %1306 : vector<1x256xf32>
    %1310 = arith.addf %1283, %1309 : vector<1x256xf32>
    %c252 = arith.constant 252 : index
    %1311 = memref.load %arg1[%c252] : memref<294xf32, #tpu.memory_space<smem>>
    %1312 = vector.broadcast %1311 : f32 to vector<1x256xf32>
    %1313 = arith.mulf %1312, %1306 : vector<1x256xf32>
    %1314 = arith.addf %1286, %1313 : vector<1x256xf32>
    %c259 = arith.constant 259 : index
    %1315 = memref.load %arg1[%c259] : memref<294xf32, #tpu.memory_space<smem>>
    %1316 = vector.broadcast %1315 : f32 to vector<1x256xf32>
    %1317 = arith.mulf %1316, %1306 : vector<1x256xf32>
    %1318 = arith.addf %1289, %1317 : vector<1x256xf32>
    %c266 = arith.constant 266 : index
    %1319 = memref.load %arg1[%c266] : memref<294xf32, #tpu.memory_space<smem>>
    %1320 = vector.broadcast %1319 : f32 to vector<1x256xf32>
    %1321 = arith.mulf %1320, %1306 : vector<1x256xf32>
    %1322 = arith.addf %1292, %1321 : vector<1x256xf32>
    %c273 = arith.constant 273 : index
    %1323 = memref.load %arg1[%c273] : memref<294xf32, #tpu.memory_space<smem>>
    %1324 = vector.broadcast %1323 : f32 to vector<1x256xf32>
    %1325 = arith.mulf %1324, %1306 : vector<1x256xf32>
    %1326 = arith.addf %1295, %1325 : vector<1x256xf32>
    %c280 = arith.constant 280 : index
    %1327 = memref.load %arg1[%c280] : memref<294xf32, #tpu.memory_space<smem>>
    %1328 = vector.broadcast %1327 : f32 to vector<1x256xf32>
    %1329 = arith.mulf %1328, %1306 : vector<1x256xf32>
    %1330 = arith.addf %1298, %1329 : vector<1x256xf32>
    %c287 = arith.constant 287 : index
    %1331 = memref.load %arg1[%c287] : memref<294xf32, #tpu.memory_space<smem>>
    %1332 = vector.broadcast %1331 : f32 to vector<1x256xf32>
    %1333 = arith.mulf %1332, %1306 : vector<1x256xf32>
    %1334 = arith.addf %1301, %1333 : vector<1x256xf32>
    %cst_105 = arith.constant 0.000000e+00 : f32
    %1335 = vector.broadcast %cst_105 : f32 to vector<1x2xf32>
    %1336 = vector.extract_strided_slice %1 {offsets = [0, 0], sizes = [1, 254], strides = [1, 1]} : vector<1x256xf32> to vector<1x254xf32>
    %1337 = tpu.concatenate %1335, %1336 in 1 : vector<1x2xf32>, vector<1x254xf32> -> vector<1x256xf32>
    %cst_106 = arith.constant 0.000000e+00 : f32
    %1338 = vector.broadcast %cst_106 : f32 to vector<1x256xf32>
    %1339 = arith.select %333, %1337, %1338 : vector<1x256xi1>, vector<1x256xf32>
    %c197 = arith.constant 197 : index
    %1340 = memref.load %arg1[%c197] : memref<294xf32, #tpu.memory_space<smem>>
    %1341 = vector.broadcast %1340 : f32 to vector<1x256xf32>
    %1342 = arith.mulf %1341, %1339 : vector<1x256xf32>
    %1343 = arith.addf %1310, %1342 : vector<1x256xf32>
    %c204 = arith.constant 204 : index
    %1344 = memref.load %arg1[%c204] : memref<294xf32, #tpu.memory_space<smem>>
    %1345 = vector.broadcast %1344 : f32 to vector<1x256xf32>
    %1346 = arith.mulf %1345, %1339 : vector<1x256xf32>
    %1347 = arith.addf %1314, %1346 : vector<1x256xf32>
    %c211 = arith.constant 211 : index
    %1348 = memref.load %arg1[%c211] : memref<294xf32, #tpu.memory_space<smem>>
    %1349 = vector.broadcast %1348 : f32 to vector<1x256xf32>
    %1350 = arith.mulf %1349, %1339 : vector<1x256xf32>
    %1351 = arith.addf %1318, %1350 : vector<1x256xf32>
    %c218 = arith.constant 218 : index
    %1352 = memref.load %arg1[%c218] : memref<294xf32, #tpu.memory_space<smem>>
    %1353 = vector.broadcast %1352 : f32 to vector<1x256xf32>
    %1354 = arith.mulf %1353, %1339 : vector<1x256xf32>
    %1355 = arith.addf %1322, %1354 : vector<1x256xf32>
    %c225 = arith.constant 225 : index
    %1356 = memref.load %arg1[%c225] : memref<294xf32, #tpu.memory_space<smem>>
    %1357 = vector.broadcast %1356 : f32 to vector<1x256xf32>
    %1358 = arith.mulf %1357, %1339 : vector<1x256xf32>
    %1359 = arith.addf %1326, %1358 : vector<1x256xf32>
    %c232 = arith.constant 232 : index
    %1360 = memref.load %arg1[%c232] : memref<294xf32, #tpu.memory_space<smem>>
    %1361 = vector.broadcast %1360 : f32 to vector<1x256xf32>
    %1362 = arith.mulf %1361, %1339 : vector<1x256xf32>
    %1363 = arith.addf %1330, %1362 : vector<1x256xf32>
    %c239 = arith.constant 239 : index
    %1364 = memref.load %arg1[%c239] : memref<294xf32, #tpu.memory_space<smem>>
    %1365 = vector.broadcast %1364 : f32 to vector<1x256xf32>
    %1366 = arith.mulf %1365, %1339 : vector<1x256xf32>
    %1367 = arith.addf %1334, %1366 : vector<1x256xf32>
    %cst_107 = arith.constant 0.000000e+00 : f32
    %1368 = vector.broadcast %cst_107 : f32 to vector<1x2xf32>
    %1369 = vector.extract_strided_slice %4 {offsets = [0, 0], sizes = [1, 254], strides = [1, 1]} : vector<1x256xf32> to vector<1x254xf32>
    %1370 = tpu.concatenate %1368, %1369 in 1 : vector<1x2xf32>, vector<1x254xf32> -> vector<1x256xf32>
    %cst_108 = arith.constant 0.000000e+00 : f32
    %1371 = vector.broadcast %cst_108 : f32 to vector<1x256xf32>
    %1372 = arith.select %333, %1370, %1371 : vector<1x256xi1>, vector<1x256xf32>
    %c246 = arith.constant 246 : index
    %1373 = memref.load %arg1[%c246] : memref<294xf32, #tpu.memory_space<smem>>
    %1374 = vector.broadcast %1373 : f32 to vector<1x256xf32>
    %1375 = arith.mulf %1374, %1372 : vector<1x256xf32>
    %1376 = arith.addf %1343, %1375 : vector<1x256xf32>
    %c253 = arith.constant 253 : index
    %1377 = memref.load %arg1[%c253] : memref<294xf32, #tpu.memory_space<smem>>
    %1378 = vector.broadcast %1377 : f32 to vector<1x256xf32>
    %1379 = arith.mulf %1378, %1372 : vector<1x256xf32>
    %1380 = arith.addf %1347, %1379 : vector<1x256xf32>
    %c260 = arith.constant 260 : index
    %1381 = memref.load %arg1[%c260] : memref<294xf32, #tpu.memory_space<smem>>
    %1382 = vector.broadcast %1381 : f32 to vector<1x256xf32>
    %1383 = arith.mulf %1382, %1372 : vector<1x256xf32>
    %1384 = arith.addf %1351, %1383 : vector<1x256xf32>
    %c267 = arith.constant 267 : index
    %1385 = memref.load %arg1[%c267] : memref<294xf32, #tpu.memory_space<smem>>
    %1386 = vector.broadcast %1385 : f32 to vector<1x256xf32>
    %1387 = arith.mulf %1386, %1372 : vector<1x256xf32>
    %1388 = arith.addf %1355, %1387 : vector<1x256xf32>
    %c274 = arith.constant 274 : index
    %1389 = memref.load %arg1[%c274] : memref<294xf32, #tpu.memory_space<smem>>
    %1390 = vector.broadcast %1389 : f32 to vector<1x256xf32>
    %1391 = arith.mulf %1390, %1372 : vector<1x256xf32>
    %1392 = arith.addf %1359, %1391 : vector<1x256xf32>
    %c281 = arith.constant 281 : index
    %1393 = memref.load %arg1[%c281] : memref<294xf32, #tpu.memory_space<smem>>
    %1394 = vector.broadcast %1393 : f32 to vector<1x256xf32>
    %1395 = arith.mulf %1394, %1372 : vector<1x256xf32>
    %1396 = arith.addf %1363, %1395 : vector<1x256xf32>
    %c288 = arith.constant 288 : index
    %1397 = memref.load %arg1[%c288] : memref<294xf32, #tpu.memory_space<smem>>
    %1398 = vector.broadcast %1397 : f32 to vector<1x256xf32>
    %1399 = arith.mulf %1398, %1372 : vector<1x256xf32>
    %1400 = arith.addf %1367, %1399 : vector<1x256xf32>
    %cst_109 = arith.constant 0.000000e+00 : f32
    %1401 = vector.broadcast %cst_109 : f32 to vector<1x1xf32>
    %1402 = vector.extract_strided_slice %1 {offsets = [0, 0], sizes = [1, 255], strides = [1, 1]} : vector<1x256xf32> to vector<1x255xf32>
    %1403 = tpu.concatenate %1401, %1402 in 1 : vector<1x1xf32>, vector<1x255xf32> -> vector<1x256xf32>
    %cst_110 = arith.constant 0.000000e+00 : f32
    %1404 = vector.broadcast %cst_110 : f32 to vector<1x256xf32>
    %1405 = arith.select %342, %1403, %1404 : vector<1x256xi1>, vector<1x256xf32>
    %c198 = arith.constant 198 : index
    %1406 = memref.load %arg1[%c198] : memref<294xf32, #tpu.memory_space<smem>>
    %1407 = vector.broadcast %1406 : f32 to vector<1x256xf32>
    %1408 = arith.mulf %1407, %1405 : vector<1x256xf32>
    %1409 = arith.addf %1376, %1408 : vector<1x256xf32>
    %c205 = arith.constant 205 : index
    %1410 = memref.load %arg1[%c205] : memref<294xf32, #tpu.memory_space<smem>>
    %1411 = vector.broadcast %1410 : f32 to vector<1x256xf32>
    %1412 = arith.mulf %1411, %1405 : vector<1x256xf32>
    %1413 = arith.addf %1380, %1412 : vector<1x256xf32>
    %c212 = arith.constant 212 : index
    %1414 = memref.load %arg1[%c212] : memref<294xf32, #tpu.memory_space<smem>>
    %1415 = vector.broadcast %1414 : f32 to vector<1x256xf32>
    %1416 = arith.mulf %1415, %1405 : vector<1x256xf32>
    %1417 = arith.addf %1384, %1416 : vector<1x256xf32>
    %c219 = arith.constant 219 : index
    %1418 = memref.load %arg1[%c219] : memref<294xf32, #tpu.memory_space<smem>>
    %1419 = vector.broadcast %1418 : f32 to vector<1x256xf32>
    %1420 = arith.mulf %1419, %1405 : vector<1x256xf32>
    %1421 = arith.addf %1388, %1420 : vector<1x256xf32>
    %c226 = arith.constant 226 : index
    %1422 = memref.load %arg1[%c226] : memref<294xf32, #tpu.memory_space<smem>>
    %1423 = vector.broadcast %1422 : f32 to vector<1x256xf32>
    %1424 = arith.mulf %1423, %1405 : vector<1x256xf32>
    %1425 = arith.addf %1392, %1424 : vector<1x256xf32>
    %c233 = arith.constant 233 : index
    %1426 = memref.load %arg1[%c233] : memref<294xf32, #tpu.memory_space<smem>>
    %1427 = vector.broadcast %1426 : f32 to vector<1x256xf32>
    %1428 = arith.mulf %1427, %1405 : vector<1x256xf32>
    %1429 = arith.addf %1396, %1428 : vector<1x256xf32>
    %c240 = arith.constant 240 : index
    %1430 = memref.load %arg1[%c240] : memref<294xf32, #tpu.memory_space<smem>>
    %1431 = vector.broadcast %1430 : f32 to vector<1x256xf32>
    %1432 = arith.mulf %1431, %1405 : vector<1x256xf32>
    %1433 = arith.addf %1400, %1432 : vector<1x256xf32>
    %cst_111 = arith.constant 0.000000e+00 : f32
    %1434 = vector.broadcast %cst_111 : f32 to vector<1x1xf32>
    %1435 = vector.extract_strided_slice %4 {offsets = [0, 0], sizes = [1, 255], strides = [1, 1]} : vector<1x256xf32> to vector<1x255xf32>
    %1436 = tpu.concatenate %1434, %1435 in 1 : vector<1x1xf32>, vector<1x255xf32> -> vector<1x256xf32>
    %cst_112 = arith.constant 0.000000e+00 : f32
    %1437 = vector.broadcast %cst_112 : f32 to vector<1x256xf32>
    %1438 = arith.select %342, %1436, %1437 : vector<1x256xi1>, vector<1x256xf32>
    %c247 = arith.constant 247 : index
    %1439 = memref.load %arg1[%c247] : memref<294xf32, #tpu.memory_space<smem>>
    %1440 = vector.broadcast %1439 : f32 to vector<1x256xf32>
    %1441 = arith.mulf %1440, %1438 : vector<1x256xf32>
    %1442 = arith.addf %1409, %1441 : vector<1x256xf32>
    %c254 = arith.constant 254 : index
    %1443 = memref.load %arg1[%c254] : memref<294xf32, #tpu.memory_space<smem>>
    %1444 = vector.broadcast %1443 : f32 to vector<1x256xf32>
    %1445 = arith.mulf %1444, %1438 : vector<1x256xf32>
    %1446 = arith.addf %1413, %1445 : vector<1x256xf32>
    %c261 = arith.constant 261 : index
    %1447 = memref.load %arg1[%c261] : memref<294xf32, #tpu.memory_space<smem>>
    %1448 = vector.broadcast %1447 : f32 to vector<1x256xf32>
    %1449 = arith.mulf %1448, %1438 : vector<1x256xf32>
    %1450 = arith.addf %1417, %1449 : vector<1x256xf32>
    %c268 = arith.constant 268 : index
    %1451 = memref.load %arg1[%c268] : memref<294xf32, #tpu.memory_space<smem>>
    %1452 = vector.broadcast %1451 : f32 to vector<1x256xf32>
    %1453 = arith.mulf %1452, %1438 : vector<1x256xf32>
    %1454 = arith.addf %1421, %1453 : vector<1x256xf32>
    %c275 = arith.constant 275 : index
    %1455 = memref.load %arg1[%c275] : memref<294xf32, #tpu.memory_space<smem>>
    %1456 = vector.broadcast %1455 : f32 to vector<1x256xf32>
    %1457 = arith.mulf %1456, %1438 : vector<1x256xf32>
    %1458 = arith.addf %1425, %1457 : vector<1x256xf32>
    %c282 = arith.constant 282 : index
    %1459 = memref.load %arg1[%c282] : memref<294xf32, #tpu.memory_space<smem>>
    %1460 = vector.broadcast %1459 : f32 to vector<1x256xf32>
    %1461 = arith.mulf %1460, %1438 : vector<1x256xf32>
    %1462 = arith.addf %1429, %1461 : vector<1x256xf32>
    %c289 = arith.constant 289 : index
    %1463 = memref.load %arg1[%c289] : memref<294xf32, #tpu.memory_space<smem>>
    %1464 = vector.broadcast %1463 : f32 to vector<1x256xf32>
    %1465 = arith.mulf %1464, %1438 : vector<1x256xf32>
    %1466 = arith.addf %1433, %1465 : vector<1x256xf32>
    %c199 = arith.constant 199 : index
    %1467 = memref.load %arg1[%c199] : memref<294xf32, #tpu.memory_space<smem>>
    %1468 = vector.broadcast %1467 : f32 to vector<1x256xf32>
    %1469 = arith.mulf %1468, %1 : vector<1x256xf32>
    %1470 = arith.addf %1442, %1469 : vector<1x256xf32>
    %c206 = arith.constant 206 : index
    %1471 = memref.load %arg1[%c206] : memref<294xf32, #tpu.memory_space<smem>>
    %1472 = vector.broadcast %1471 : f32 to vector<1x256xf32>
    %1473 = arith.mulf %1472, %1 : vector<1x256xf32>
    %1474 = arith.addf %1446, %1473 : vector<1x256xf32>
    %c213 = arith.constant 213 : index
    %1475 = memref.load %arg1[%c213] : memref<294xf32, #tpu.memory_space<smem>>
    %1476 = vector.broadcast %1475 : f32 to vector<1x256xf32>
    %1477 = arith.mulf %1476, %1 : vector<1x256xf32>
    %1478 = arith.addf %1450, %1477 : vector<1x256xf32>
    %c220 = arith.constant 220 : index
    %1479 = memref.load %arg1[%c220] : memref<294xf32, #tpu.memory_space<smem>>
    %1480 = vector.broadcast %1479 : f32 to vector<1x256xf32>
    %1481 = arith.mulf %1480, %1 : vector<1x256xf32>
    %1482 = arith.addf %1454, %1481 : vector<1x256xf32>
    %c227 = arith.constant 227 : index
    %1483 = memref.load %arg1[%c227] : memref<294xf32, #tpu.memory_space<smem>>
    %1484 = vector.broadcast %1483 : f32 to vector<1x256xf32>
    %1485 = arith.mulf %1484, %1 : vector<1x256xf32>
    %1486 = arith.addf %1458, %1485 : vector<1x256xf32>
    %c234 = arith.constant 234 : index
    %1487 = memref.load %arg1[%c234] : memref<294xf32, #tpu.memory_space<smem>>
    %1488 = vector.broadcast %1487 : f32 to vector<1x256xf32>
    %1489 = arith.mulf %1488, %1 : vector<1x256xf32>
    %1490 = arith.addf %1462, %1489 : vector<1x256xf32>
    %c241 = arith.constant 241 : index
    %1491 = memref.load %arg1[%c241] : memref<294xf32, #tpu.memory_space<smem>>
    %1492 = vector.broadcast %1491 : f32 to vector<1x256xf32>
    %1493 = arith.mulf %1492, %1 : vector<1x256xf32>
    %1494 = arith.addf %1466, %1493 : vector<1x256xf32>
    %c248 = arith.constant 248 : index
    %1495 = memref.load %arg1[%c248] : memref<294xf32, #tpu.memory_space<smem>>
    %1496 = vector.broadcast %1495 : f32 to vector<1x256xf32>
    %1497 = arith.mulf %1496, %4 : vector<1x256xf32>
    %1498 = arith.addf %1470, %1497 : vector<1x256xf32>
    %c255 = arith.constant 255 : index
    %1499 = memref.load %arg1[%c255] : memref<294xf32, #tpu.memory_space<smem>>
    %1500 = vector.broadcast %1499 : f32 to vector<1x256xf32>
    %1501 = arith.mulf %1500, %4 : vector<1x256xf32>
    %1502 = arith.addf %1474, %1501 : vector<1x256xf32>
    %c262 = arith.constant 262 : index
    %1503 = memref.load %arg1[%c262] : memref<294xf32, #tpu.memory_space<smem>>
    %1504 = vector.broadcast %1503 : f32 to vector<1x256xf32>
    %1505 = arith.mulf %1504, %4 : vector<1x256xf32>
    %1506 = arith.addf %1478, %1505 : vector<1x256xf32>
    %c269 = arith.constant 269 : index
    %1507 = memref.load %arg1[%c269] : memref<294xf32, #tpu.memory_space<smem>>
    %1508 = vector.broadcast %1507 : f32 to vector<1x256xf32>
    %1509 = arith.mulf %1508, %4 : vector<1x256xf32>
    %1510 = arith.addf %1482, %1509 : vector<1x256xf32>
    %c276 = arith.constant 276 : index
    %1511 = memref.load %arg1[%c276] : memref<294xf32, #tpu.memory_space<smem>>
    %1512 = vector.broadcast %1511 : f32 to vector<1x256xf32>
    %1513 = arith.mulf %1512, %4 : vector<1x256xf32>
    %1514 = arith.addf %1486, %1513 : vector<1x256xf32>
    %c283 = arith.constant 283 : index
    %1515 = memref.load %arg1[%c283] : memref<294xf32, #tpu.memory_space<smem>>
    %1516 = vector.broadcast %1515 : f32 to vector<1x256xf32>
    %1517 = arith.mulf %1516, %4 : vector<1x256xf32>
    %1518 = arith.addf %1490, %1517 : vector<1x256xf32>
    %c290 = arith.constant 290 : index
    %1519 = memref.load %arg1[%c290] : memref<294xf32, #tpu.memory_space<smem>>
    %1520 = vector.broadcast %1519 : f32 to vector<1x256xf32>
    %1521 = arith.mulf %1520, %4 : vector<1x256xf32>
    %1522 = arith.addf %1494, %1521 : vector<1x256xf32>
    %cst_113 = arith.constant 0.000000e+00 : f32
    %1523 = vector.broadcast %cst_113 : f32 to vector<1x1xf32>
    %1524 = vector.extract_strided_slice %1 {offsets = [0, 1], sizes = [1, 255], strides = [1, 1]} : vector<1x256xf32> to vector<1x255xf32>
    %1525 = tpu.concatenate %1524, %1523 in 1 : vector<1x255xf32>, vector<1x1xf32> -> vector<1x256xf32>
    %cst_114 = arith.constant 0.000000e+00 : f32
    %1526 = vector.broadcast %cst_114 : f32 to vector<1x256xf32>
    %1527 = arith.select %351, %1525, %1526 : vector<1x256xi1>, vector<1x256xf32>
    %c200 = arith.constant 200 : index
    %1528 = memref.load %arg1[%c200] : memref<294xf32, #tpu.memory_space<smem>>
    %1529 = vector.broadcast %1528 : f32 to vector<1x256xf32>
    %1530 = arith.mulf %1529, %1527 : vector<1x256xf32>
    %1531 = arith.addf %1498, %1530 : vector<1x256xf32>
    %c207 = arith.constant 207 : index
    %1532 = memref.load %arg1[%c207] : memref<294xf32, #tpu.memory_space<smem>>
    %1533 = vector.broadcast %1532 : f32 to vector<1x256xf32>
    %1534 = arith.mulf %1533, %1527 : vector<1x256xf32>
    %1535 = arith.addf %1502, %1534 : vector<1x256xf32>
    %c214 = arith.constant 214 : index
    %1536 = memref.load %arg1[%c214] : memref<294xf32, #tpu.memory_space<smem>>
    %1537 = vector.broadcast %1536 : f32 to vector<1x256xf32>
    %1538 = arith.mulf %1537, %1527 : vector<1x256xf32>
    %1539 = arith.addf %1506, %1538 : vector<1x256xf32>
    %c221 = arith.constant 221 : index
    %1540 = memref.load %arg1[%c221] : memref<294xf32, #tpu.memory_space<smem>>
    %1541 = vector.broadcast %1540 : f32 to vector<1x256xf32>
    %1542 = arith.mulf %1541, %1527 : vector<1x256xf32>
    %1543 = arith.addf %1510, %1542 : vector<1x256xf32>
    %c228 = arith.constant 228 : index
    %1544 = memref.load %arg1[%c228] : memref<294xf32, #tpu.memory_space<smem>>
    %1545 = vector.broadcast %1544 : f32 to vector<1x256xf32>
    %1546 = arith.mulf %1545, %1527 : vector<1x256xf32>
    %1547 = arith.addf %1514, %1546 : vector<1x256xf32>
    %c235 = arith.constant 235 : index
    %1548 = memref.load %arg1[%c235] : memref<294xf32, #tpu.memory_space<smem>>
    %1549 = vector.broadcast %1548 : f32 to vector<1x256xf32>
    %1550 = arith.mulf %1549, %1527 : vector<1x256xf32>
    %1551 = arith.addf %1518, %1550 : vector<1x256xf32>
    %c242 = arith.constant 242 : index
    %1552 = memref.load %arg1[%c242] : memref<294xf32, #tpu.memory_space<smem>>
    %1553 = vector.broadcast %1552 : f32 to vector<1x256xf32>
    %1554 = arith.mulf %1553, %1527 : vector<1x256xf32>
    %1555 = arith.addf %1522, %1554 : vector<1x256xf32>
    %cst_115 = arith.constant 0.000000e+00 : f32
    %1556 = vector.broadcast %cst_115 : f32 to vector<1x1xf32>
    %1557 = vector.extract_strided_slice %4 {offsets = [0, 1], sizes = [1, 255], strides = [1, 1]} : vector<1x256xf32> to vector<1x255xf32>
    %1558 = tpu.concatenate %1557, %1556 in 1 : vector<1x255xf32>, vector<1x1xf32> -> vector<1x256xf32>
    %cst_116 = arith.constant 0.000000e+00 : f32
    %1559 = vector.broadcast %cst_116 : f32 to vector<1x256xf32>
    %1560 = arith.select %351, %1558, %1559 : vector<1x256xi1>, vector<1x256xf32>
    %c249 = arith.constant 249 : index
    %1561 = memref.load %arg1[%c249] : memref<294xf32, #tpu.memory_space<smem>>
    %1562 = vector.broadcast %1561 : f32 to vector<1x256xf32>
    %1563 = arith.mulf %1562, %1560 : vector<1x256xf32>
    %1564 = arith.addf %1531, %1563 : vector<1x256xf32>
    %c256 = arith.constant 256 : index
    %1565 = memref.load %arg1[%c256] : memref<294xf32, #tpu.memory_space<smem>>
    %1566 = vector.broadcast %1565 : f32 to vector<1x256xf32>
    %1567 = arith.mulf %1566, %1560 : vector<1x256xf32>
    %1568 = arith.addf %1535, %1567 : vector<1x256xf32>
    %c263 = arith.constant 263 : index
    %1569 = memref.load %arg1[%c263] : memref<294xf32, #tpu.memory_space<smem>>
    %1570 = vector.broadcast %1569 : f32 to vector<1x256xf32>
    %1571 = arith.mulf %1570, %1560 : vector<1x256xf32>
    %1572 = arith.addf %1539, %1571 : vector<1x256xf32>
    %c270 = arith.constant 270 : index
    %1573 = memref.load %arg1[%c270] : memref<294xf32, #tpu.memory_space<smem>>
    %1574 = vector.broadcast %1573 : f32 to vector<1x256xf32>
    %1575 = arith.mulf %1574, %1560 : vector<1x256xf32>
    %1576 = arith.addf %1543, %1575 : vector<1x256xf32>
    %c277 = arith.constant 277 : index
    %1577 = memref.load %arg1[%c277] : memref<294xf32, #tpu.memory_space<smem>>
    %1578 = vector.broadcast %1577 : f32 to vector<1x256xf32>
    %1579 = arith.mulf %1578, %1560 : vector<1x256xf32>
    %1580 = arith.addf %1547, %1579 : vector<1x256xf32>
    %c284 = arith.constant 284 : index
    %1581 = memref.load %arg1[%c284] : memref<294xf32, #tpu.memory_space<smem>>
    %1582 = vector.broadcast %1581 : f32 to vector<1x256xf32>
    %1583 = arith.mulf %1582, %1560 : vector<1x256xf32>
    %1584 = arith.addf %1551, %1583 : vector<1x256xf32>
    %c291 = arith.constant 291 : index
    %1585 = memref.load %arg1[%c291] : memref<294xf32, #tpu.memory_space<smem>>
    %1586 = vector.broadcast %1585 : f32 to vector<1x256xf32>
    %1587 = arith.mulf %1586, %1560 : vector<1x256xf32>
    %1588 = arith.addf %1555, %1587 : vector<1x256xf32>
    %cst_117 = arith.constant 0.000000e+00 : f32
    %1589 = vector.broadcast %cst_117 : f32 to vector<1x2xf32>
    %1590 = vector.extract_strided_slice %1 {offsets = [0, 2], sizes = [1, 254], strides = [1, 1]} : vector<1x256xf32> to vector<1x254xf32>
    %1591 = tpu.concatenate %1590, %1589 in 1 : vector<1x254xf32>, vector<1x2xf32> -> vector<1x256xf32>
    %cst_118 = arith.constant 0.000000e+00 : f32
    %1592 = vector.broadcast %cst_118 : f32 to vector<1x256xf32>
    %1593 = arith.select %360, %1591, %1592 : vector<1x256xi1>, vector<1x256xf32>
    %c201 = arith.constant 201 : index
    %1594 = memref.load %arg1[%c201] : memref<294xf32, #tpu.memory_space<smem>>
    %1595 = vector.broadcast %1594 : f32 to vector<1x256xf32>
    %1596 = arith.mulf %1595, %1593 : vector<1x256xf32>
    %1597 = arith.addf %1564, %1596 : vector<1x256xf32>
    %c208 = arith.constant 208 : index
    %1598 = memref.load %arg1[%c208] : memref<294xf32, #tpu.memory_space<smem>>
    %1599 = vector.broadcast %1598 : f32 to vector<1x256xf32>
    %1600 = arith.mulf %1599, %1593 : vector<1x256xf32>
    %1601 = arith.addf %1568, %1600 : vector<1x256xf32>
    %c215 = arith.constant 215 : index
    %1602 = memref.load %arg1[%c215] : memref<294xf32, #tpu.memory_space<smem>>
    %1603 = vector.broadcast %1602 : f32 to vector<1x256xf32>
    %1604 = arith.mulf %1603, %1593 : vector<1x256xf32>
    %1605 = arith.addf %1572, %1604 : vector<1x256xf32>
    %c222 = arith.constant 222 : index
    %1606 = memref.load %arg1[%c222] : memref<294xf32, #tpu.memory_space<smem>>
    %1607 = vector.broadcast %1606 : f32 to vector<1x256xf32>
    %1608 = arith.mulf %1607, %1593 : vector<1x256xf32>
    %1609 = arith.addf %1576, %1608 : vector<1x256xf32>
    %c229 = arith.constant 229 : index
    %1610 = memref.load %arg1[%c229] : memref<294xf32, #tpu.memory_space<smem>>
    %1611 = vector.broadcast %1610 : f32 to vector<1x256xf32>
    %1612 = arith.mulf %1611, %1593 : vector<1x256xf32>
    %1613 = arith.addf %1580, %1612 : vector<1x256xf32>
    %c236 = arith.constant 236 : index
    %1614 = memref.load %arg1[%c236] : memref<294xf32, #tpu.memory_space<smem>>
    %1615 = vector.broadcast %1614 : f32 to vector<1x256xf32>
    %1616 = arith.mulf %1615, %1593 : vector<1x256xf32>
    %1617 = arith.addf %1584, %1616 : vector<1x256xf32>
    %c243 = arith.constant 243 : index
    %1618 = memref.load %arg1[%c243] : memref<294xf32, #tpu.memory_space<smem>>
    %1619 = vector.broadcast %1618 : f32 to vector<1x256xf32>
    %1620 = arith.mulf %1619, %1593 : vector<1x256xf32>
    %1621 = arith.addf %1588, %1620 : vector<1x256xf32>
    %cst_119 = arith.constant 0.000000e+00 : f32
    %1622 = vector.broadcast %cst_119 : f32 to vector<1x2xf32>
    %1623 = vector.extract_strided_slice %4 {offsets = [0, 2], sizes = [1, 254], strides = [1, 1]} : vector<1x256xf32> to vector<1x254xf32>
    %1624 = tpu.concatenate %1623, %1622 in 1 : vector<1x254xf32>, vector<1x2xf32> -> vector<1x256xf32>
    %cst_120 = arith.constant 0.000000e+00 : f32
    %1625 = vector.broadcast %cst_120 : f32 to vector<1x256xf32>
    %1626 = arith.select %360, %1624, %1625 : vector<1x256xi1>, vector<1x256xf32>
    %c250 = arith.constant 250 : index
    %1627 = memref.load %arg1[%c250] : memref<294xf32, #tpu.memory_space<smem>>
    %1628 = vector.broadcast %1627 : f32 to vector<1x256xf32>
    %1629 = arith.mulf %1628, %1626 : vector<1x256xf32>
    %1630 = arith.addf %1597, %1629 : vector<1x256xf32>
    %c257 = arith.constant 257 : index
    %1631 = memref.load %arg1[%c257] : memref<294xf32, #tpu.memory_space<smem>>
    %1632 = vector.broadcast %1631 : f32 to vector<1x256xf32>
    %1633 = arith.mulf %1632, %1626 : vector<1x256xf32>
    %1634 = arith.addf %1601, %1633 : vector<1x256xf32>
    %c264 = arith.constant 264 : index
    %1635 = memref.load %arg1[%c264] : memref<294xf32, #tpu.memory_space<smem>>
    %1636 = vector.broadcast %1635 : f32 to vector<1x256xf32>
    %1637 = arith.mulf %1636, %1626 : vector<1x256xf32>
    %1638 = arith.addf %1605, %1637 : vector<1x256xf32>
    %c271 = arith.constant 271 : index
    %1639 = memref.load %arg1[%c271] : memref<294xf32, #tpu.memory_space<smem>>
    %1640 = vector.broadcast %1639 : f32 to vector<1x256xf32>
    %1641 = arith.mulf %1640, %1626 : vector<1x256xf32>
    %1642 = arith.addf %1609, %1641 : vector<1x256xf32>
    %c278 = arith.constant 278 : index
    %1643 = memref.load %arg1[%c278] : memref<294xf32, #tpu.memory_space<smem>>
    %1644 = vector.broadcast %1643 : f32 to vector<1x256xf32>
    %1645 = arith.mulf %1644, %1626 : vector<1x256xf32>
    %1646 = arith.addf %1613, %1645 : vector<1x256xf32>
    %c285 = arith.constant 285 : index
    %1647 = memref.load %arg1[%c285] : memref<294xf32, #tpu.memory_space<smem>>
    %1648 = vector.broadcast %1647 : f32 to vector<1x256xf32>
    %1649 = arith.mulf %1648, %1626 : vector<1x256xf32>
    %1650 = arith.addf %1617, %1649 : vector<1x256xf32>
    %c292 = arith.constant 292 : index
    %1651 = memref.load %arg1[%c292] : memref<294xf32, #tpu.memory_space<smem>>
    %1652 = vector.broadcast %1651 : f32 to vector<1x256xf32>
    %1653 = arith.mulf %1652, %1626 : vector<1x256xf32>
    %1654 = arith.addf %1621, %1653 : vector<1x256xf32>
    %cst_121 = arith.constant 0.000000e+00 : f32
    %1655 = vector.broadcast %cst_121 : f32 to vector<1x3xf32>
    %1656 = vector.extract_strided_slice %1 {offsets = [0, 3], sizes = [1, 253], strides = [1, 1]} : vector<1x256xf32> to vector<1x253xf32>
    %1657 = tpu.concatenate %1656, %1655 in 1 : vector<1x253xf32>, vector<1x3xf32> -> vector<1x256xf32>
    %cst_122 = arith.constant 0.000000e+00 : f32
    %1658 = vector.broadcast %cst_122 : f32 to vector<1x256xf32>
    %1659 = arith.select %369, %1657, %1658 : vector<1x256xi1>, vector<1x256xf32>
    %c202 = arith.constant 202 : index
    %1660 = memref.load %arg1[%c202] : memref<294xf32, #tpu.memory_space<smem>>
    %1661 = vector.broadcast %1660 : f32 to vector<1x256xf32>
    %1662 = arith.mulf %1661, %1659 : vector<1x256xf32>
    %1663 = arith.addf %1630, %1662 : vector<1x256xf32>
    %c209 = arith.constant 209 : index
    %1664 = memref.load %arg1[%c209] : memref<294xf32, #tpu.memory_space<smem>>
    %1665 = vector.broadcast %1664 : f32 to vector<1x256xf32>
    %1666 = arith.mulf %1665, %1659 : vector<1x256xf32>
    %1667 = arith.addf %1634, %1666 : vector<1x256xf32>
    %c216 = arith.constant 216 : index
    %1668 = memref.load %arg1[%c216] : memref<294xf32, #tpu.memory_space<smem>>
    %1669 = vector.broadcast %1668 : f32 to vector<1x256xf32>
    %1670 = arith.mulf %1669, %1659 : vector<1x256xf32>
    %1671 = arith.addf %1638, %1670 : vector<1x256xf32>
    %c223 = arith.constant 223 : index
    %1672 = memref.load %arg1[%c223] : memref<294xf32, #tpu.memory_space<smem>>
    %1673 = vector.broadcast %1672 : f32 to vector<1x256xf32>
    %1674 = arith.mulf %1673, %1659 : vector<1x256xf32>
    %1675 = arith.addf %1642, %1674 : vector<1x256xf32>
    %c230 = arith.constant 230 : index
    %1676 = memref.load %arg1[%c230] : memref<294xf32, #tpu.memory_space<smem>>
    %1677 = vector.broadcast %1676 : f32 to vector<1x256xf32>
    %1678 = arith.mulf %1677, %1659 : vector<1x256xf32>
    %1679 = arith.addf %1646, %1678 : vector<1x256xf32>
    %c237 = arith.constant 237 : index
    %1680 = memref.load %arg1[%c237] : memref<294xf32, #tpu.memory_space<smem>>
    %1681 = vector.broadcast %1680 : f32 to vector<1x256xf32>
    %1682 = arith.mulf %1681, %1659 : vector<1x256xf32>
    %1683 = arith.addf %1650, %1682 : vector<1x256xf32>
    %c244 = arith.constant 244 : index
    %1684 = memref.load %arg1[%c244] : memref<294xf32, #tpu.memory_space<smem>>
    %1685 = vector.broadcast %1684 : f32 to vector<1x256xf32>
    %1686 = arith.mulf %1685, %1659 : vector<1x256xf32>
    %1687 = arith.addf %1654, %1686 : vector<1x256xf32>
    %cst_123 = arith.constant 0.000000e+00 : f32
    %1688 = vector.broadcast %cst_123 : f32 to vector<1x3xf32>
    %1689 = vector.extract_strided_slice %4 {offsets = [0, 3], sizes = [1, 253], strides = [1, 1]} : vector<1x256xf32> to vector<1x253xf32>
    %1690 = tpu.concatenate %1689, %1688 in 1 : vector<1x253xf32>, vector<1x3xf32> -> vector<1x256xf32>
    %cst_124 = arith.constant 0.000000e+00 : f32
    %1691 = vector.broadcast %cst_124 : f32 to vector<1x256xf32>
    %1692 = arith.select %369, %1690, %1691 : vector<1x256xi1>, vector<1x256xf32>
    %c251 = arith.constant 251 : index
    %1693 = memref.load %arg1[%c251] : memref<294xf32, #tpu.memory_space<smem>>
    %1694 = vector.broadcast %1693 : f32 to vector<1x256xf32>
    %1695 = arith.mulf %1694, %1692 : vector<1x256xf32>
    %1696 = arith.addf %1663, %1695 : vector<1x256xf32>
    %c258 = arith.constant 258 : index
    %1697 = memref.load %arg1[%c258] : memref<294xf32, #tpu.memory_space<smem>>
    %1698 = vector.broadcast %1697 : f32 to vector<1x256xf32>
    %1699 = arith.mulf %1698, %1692 : vector<1x256xf32>
    %1700 = arith.addf %1667, %1699 : vector<1x256xf32>
    %c265 = arith.constant 265 : index
    %1701 = memref.load %arg1[%c265] : memref<294xf32, #tpu.memory_space<smem>>
    %1702 = vector.broadcast %1701 : f32 to vector<1x256xf32>
    %1703 = arith.mulf %1702, %1692 : vector<1x256xf32>
    %1704 = arith.addf %1671, %1703 : vector<1x256xf32>
    %c272 = arith.constant 272 : index
    %1705 = memref.load %arg1[%c272] : memref<294xf32, #tpu.memory_space<smem>>
    %1706 = vector.broadcast %1705 : f32 to vector<1x256xf32>
    %1707 = arith.mulf %1706, %1692 : vector<1x256xf32>
    %1708 = arith.addf %1675, %1707 : vector<1x256xf32>
    %c279 = arith.constant 279 : index
    %1709 = memref.load %arg1[%c279] : memref<294xf32, #tpu.memory_space<smem>>
    %1710 = vector.broadcast %1709 : f32 to vector<1x256xf32>
    %1711 = arith.mulf %1710, %1692 : vector<1x256xf32>
    %1712 = arith.addf %1679, %1711 : vector<1x256xf32>
    %c286 = arith.constant 286 : index
    %1713 = memref.load %arg1[%c286] : memref<294xf32, #tpu.memory_space<smem>>
    %1714 = vector.broadcast %1713 : f32 to vector<1x256xf32>
    %1715 = arith.mulf %1714, %1692 : vector<1x256xf32>
    %1716 = arith.addf %1683, %1715 : vector<1x256xf32>
    %c293 = arith.constant 293 : index
    %1717 = memref.load %arg1[%c293] : memref<294xf32, #tpu.memory_space<smem>>
    %1718 = vector.broadcast %1717 : f32 to vector<1x256xf32>
    %1719 = arith.mulf %1718, %1692 : vector<1x256xf32>
    %1720 = arith.addf %1687, %1719 : vector<1x256xf32>
    %cst_125 = arith.constant 0.000000e+00 : f32
    %1721 = vector.broadcast %cst_125 : f32 to vector<1x48xf32>
    %1722 = vector.extract_strided_slice %1696 {offsets = [0, 0], sizes = [1, 208], strides = [1, 1]} : vector<1x256xf32> to vector<1x208xf32>
    %1723 = tpu.concatenate %1721, %1722 in 1 : vector<1x48xf32>, vector<1x208xf32> -> vector<1x256xf32>
    %cst_126 = arith.constant 0.000000e+00 : f32
    %1724 = vector.broadcast %cst_126 : f32 to vector<1x32xf32>
    %1725 = vector.extract_strided_slice %1700 {offsets = [0, 0], sizes = [1, 224], strides = [1, 1]} : vector<1x256xf32> to vector<1x224xf32>
    %1726 = tpu.concatenate %1724, %1725 in 1 : vector<1x32xf32>, vector<1x224xf32> -> vector<1x256xf32>
    %cst_127 = arith.constant 0.000000e+00 : f32
    %1727 = vector.broadcast %cst_127 : f32 to vector<1x16xf32>
    %1728 = vector.extract_strided_slice %1704 {offsets = [0, 0], sizes = [1, 240], strides = [1, 1]} : vector<1x256xf32> to vector<1x240xf32>
    %1729 = tpu.concatenate %1727, %1728 in 1 : vector<1x16xf32>, vector<1x240xf32> -> vector<1x256xf32>
    %cst_128 = arith.constant 0.000000e+00 : f32
    %1730 = vector.broadcast %cst_128 : f32 to vector<1x16xf32>
    %1731 = vector.extract_strided_slice %1712 {offsets = [0, 16], sizes = [1, 240], strides = [1, 1]} : vector<1x256xf32> to vector<1x240xf32>
    %1732 = tpu.concatenate %1731, %1730 in 1 : vector<1x240xf32>, vector<1x16xf32> -> vector<1x256xf32>
    %cst_129 = arith.constant 0.000000e+00 : f32
    %1733 = vector.broadcast %cst_129 : f32 to vector<1x32xf32>
    %1734 = vector.extract_strided_slice %1716 {offsets = [0, 32], sizes = [1, 224], strides = [1, 1]} : vector<1x256xf32> to vector<1x224xf32>
    %1735 = tpu.concatenate %1734, %1733 in 1 : vector<1x224xf32>, vector<1x32xf32> -> vector<1x256xf32>
    %cst_130 = arith.constant 0.000000e+00 : f32
    %1736 = vector.broadcast %cst_130 : f32 to vector<1x48xf32>
    %1737 = vector.extract_strided_slice %1720 {offsets = [0, 48], sizes = [1, 208], strides = [1, 1]} : vector<1x256xf32> to vector<1x208xf32>
    %1738 = tpu.concatenate %1737, %1736 in 1 : vector<1x208xf32>, vector<1x48xf32> -> vector<1x256xf32>
    %1739 = arith.addf %1723, %1726 : vector<1x256xf32>
    %1740 = arith.addf %1729, %1708 : vector<1x256xf32>
    %1741 = arith.addf %1732, %1735 : vector<1x256xf32>
    %1742 = arith.addf %1739, %1740 : vector<1x256xf32>
    %1743 = arith.addf %1741, %1738 : vector<1x256xf32>
    %1744 = arith.addf %1742, %1743 : vector<1x256xf32>
    %c2_131 = arith.constant 2 : index
    %1745 = memref.load %arg2[%c2_131] : memref<3xf32, #tpu.memory_space<smem>>
    %1746 = vector.broadcast %1745 : f32 to vector<1x256xf32>
    %1747 = arith.addf %1744, %1746 : vector<1x256xf32>
    %1748 = arith.negf %1747 : vector<1x256xf32>
    %1749 = math.exp %1748 : vector<1x256xf32>
    %cst_132 = arith.constant 1.000000e+00 : f32
    %1750 = vector.broadcast %cst_132 : f32 to vector<1x256xf32>
    %1751 = arith.addf %1750, %1749 : vector<1x256xf32>
    %1752 = arith.divf %1750, %1751 : vector<1x256xf32>
    %cst_133 = arith.constant 0.333333343 : f32
    %1753 = vector.broadcast %cst_133 : f32 to vector<1x4x16xf32>
    %1754 = arith.mulf %822, %1753 : vector<1x4x16xf32>
    %cst_134 = arith.constant 0.333333343 : f32
    %1755 = vector.broadcast %cst_134 : f32 to vector<1x4x16xf32>
    %1756 = arith.mulf %1275, %1755 : vector<1x4x16xf32>
    %cst_135 = arith.constant 0.333333343 : f32
    %1757 = vector.broadcast %cst_135 : f32 to vector<1x256xf32>
    %1758 = arith.mulf %1752, %1757 : vector<1x256xf32>
    %1759 = tpu.concatenate %1754, %1754, %1754, %1754, %1754, %1754, %1754, %1754, %1754, %1754, %1754, %1754, %1754, %1754, %1754, %1754 in 2 : vector<1x4x16xf32>, vector<1x4x16xf32>, vector<1x4x16xf32>, vector<1x4x16xf32>, vector<1x4x16xf32>, vector<1x4x16xf32>, vector<1x4x16xf32>, vector<1x4x16xf32>, vector<1x4x16xf32>, vector<1x4x16xf32>, vector<1x4x16xf32>, vector<1x4x16xf32>, vector<1x4x16xf32>, vector<1x4x16xf32>, vector<1x4x16xf32>, vector<1x4x16xf32> -> vector<1x4x256xf32>
    %1760 = vector.extract_strided_slice %1756 {offsets = [0, 0, 0], sizes = [1, 4, 1], strides = [1, 1, 1]} : vector<1x4x16xf32> to vector<1x4x1xf32>
    %1761 = vector.shape_cast %1760 : vector<1x4x1xf32> to vector<1x4x1xf32>
    %1762 = vector.broadcast %1761 : vector<1x4x1xf32> to vector<1x4x16xf32>
    %1763 = vector.extract_strided_slice %1756 {offsets = [0, 0, 1], sizes = [1, 4, 1], strides = [1, 1, 1]} : vector<1x4x16xf32> to vector<1x4x1xf32>
    %1764 = vector.shape_cast %1763 : vector<1x4x1xf32> to vector<1x4x1xf32>
    %1765 = vector.broadcast %1764 : vector<1x4x1xf32> to vector<1x4x16xf32>
    %1766 = vector.extract_strided_slice %1756 {offsets = [0, 0, 2], sizes = [1, 4, 1], strides = [1, 1, 1]} : vector<1x4x16xf32> to vector<1x4x1xf32>
    %1767 = vector.shape_cast %1766 : vector<1x4x1xf32> to vector<1x4x1xf32>
    %1768 = vector.broadcast %1767 : vector<1x4x1xf32> to vector<1x4x16xf32>
    %1769 = vector.extract_strided_slice %1756 {offsets = [0, 0, 3], sizes = [1, 4, 1], strides = [1, 1, 1]} : vector<1x4x16xf32> to vector<1x4x1xf32>
    %1770 = vector.shape_cast %1769 : vector<1x4x1xf32> to vector<1x4x1xf32>
    %1771 = vector.broadcast %1770 : vector<1x4x1xf32> to vector<1x4x16xf32>
    %1772 = vector.extract_strided_slice %1756 {offsets = [0, 0, 4], sizes = [1, 4, 1], strides = [1, 1, 1]} : vector<1x4x16xf32> to vector<1x4x1xf32>
    %1773 = vector.shape_cast %1772 : vector<1x4x1xf32> to vector<1x4x1xf32>
    %1774 = vector.broadcast %1773 : vector<1x4x1xf32> to vector<1x4x16xf32>
    %1775 = vector.extract_strided_slice %1756 {offsets = [0, 0, 5], sizes = [1, 4, 1], strides = [1, 1, 1]} : vector<1x4x16xf32> to vector<1x4x1xf32>
    %1776 = vector.shape_cast %1775 : vector<1x4x1xf32> to vector<1x4x1xf32>
    %1777 = vector.broadcast %1776 : vector<1x4x1xf32> to vector<1x4x16xf32>
    %1778 = vector.extract_strided_slice %1756 {offsets = [0, 0, 6], sizes = [1, 4, 1], strides = [1, 1, 1]} : vector<1x4x16xf32> to vector<1x4x1xf32>
    %1779 = vector.shape_cast %1778 : vector<1x4x1xf32> to vector<1x4x1xf32>
    %1780 = vector.broadcast %1779 : vector<1x4x1xf32> to vector<1x4x16xf32>
    %1781 = vector.extract_strided_slice %1756 {offsets = [0, 0, 7], sizes = [1, 4, 1], strides = [1, 1, 1]} : vector<1x4x16xf32> to vector<1x4x1xf32>
    %1782 = vector.shape_cast %1781 : vector<1x4x1xf32> to vector<1x4x1xf32>
    %1783 = vector.broadcast %1782 : vector<1x4x1xf32> to vector<1x4x16xf32>
    %1784 = vector.extract_strided_slice %1756 {offsets = [0, 0, 8], sizes = [1, 4, 1], strides = [1, 1, 1]} : vector<1x4x16xf32> to vector<1x4x1xf32>
    %1785 = vector.shape_cast %1784 : vector<1x4x1xf32> to vector<1x4x1xf32>
    %1786 = vector.broadcast %1785 : vector<1x4x1xf32> to vector<1x4x16xf32>
    %1787 = vector.extract_strided_slice %1756 {offsets = [0, 0, 9], sizes = [1, 4, 1], strides = [1, 1, 1]} : vector<1x4x16xf32> to vector<1x4x1xf32>
    %1788 = vector.shape_cast %1787 : vector<1x4x1xf32> to vector<1x4x1xf32>
    %1789 = vector.broadcast %1788 : vector<1x4x1xf32> to vector<1x4x16xf32>
    %1790 = vector.extract_strided_slice %1756 {offsets = [0, 0, 10], sizes = [1, 4, 1], strides = [1, 1, 1]} : vector<1x4x16xf32> to vector<1x4x1xf32>
    %1791 = vector.shape_cast %1790 : vector<1x4x1xf32> to vector<1x4x1xf32>
    %1792 = vector.broadcast %1791 : vector<1x4x1xf32> to vector<1x4x16xf32>
    %1793 = vector.extract_strided_slice %1756 {offsets = [0, 0, 11], sizes = [1, 4, 1], strides = [1, 1, 1]} : vector<1x4x16xf32> to vector<1x4x1xf32>
    %1794 = vector.shape_cast %1793 : vector<1x4x1xf32> to vector<1x4x1xf32>
    %1795 = vector.broadcast %1794 : vector<1x4x1xf32> to vector<1x4x16xf32>
    %1796 = vector.extract_strided_slice %1756 {offsets = [0, 0, 12], sizes = [1, 4, 1], strides = [1, 1, 1]} : vector<1x4x16xf32> to vector<1x4x1xf32>
    %1797 = vector.shape_cast %1796 : vector<1x4x1xf32> to vector<1x4x1xf32>
    %1798 = vector.broadcast %1797 : vector<1x4x1xf32> to vector<1x4x16xf32>
    %1799 = vector.extract_strided_slice %1756 {offsets = [0, 0, 13], sizes = [1, 4, 1], strides = [1, 1, 1]} : vector<1x4x16xf32> to vector<1x4x1xf32>
    %1800 = vector.shape_cast %1799 : vector<1x4x1xf32> to vector<1x4x1xf32>
    %1801 = vector.broadcast %1800 : vector<1x4x1xf32> to vector<1x4x16xf32>
    %1802 = vector.extract_strided_slice %1756 {offsets = [0, 0, 14], sizes = [1, 4, 1], strides = [1, 1, 1]} : vector<1x4x16xf32> to vector<1x4x1xf32>
    %1803 = vector.shape_cast %1802 : vector<1x4x1xf32> to vector<1x4x1xf32>
    %1804 = vector.broadcast %1803 : vector<1x4x1xf32> to vector<1x4x16xf32>
    %1805 = vector.extract_strided_slice %1756 {offsets = [0, 0, 15], sizes = [1, 4, 1], strides = [1, 1, 1]} : vector<1x4x16xf32> to vector<1x4x1xf32>
    %1806 = vector.shape_cast %1805 : vector<1x4x1xf32> to vector<1x4x1xf32>
    %1807 = vector.broadcast %1806 : vector<1x4x1xf32> to vector<1x4x16xf32>
    %1808 = tpu.concatenate %1762, %1765, %1768, %1771, %1774, %1777, %1780, %1783, %1786, %1789, %1792, %1795, %1798, %1801, %1804, %1807 in 2 : vector<1x4x16xf32>, vector<1x4x16xf32>, vector<1x4x16xf32>, vector<1x4x16xf32>, vector<1x4x16xf32>, vector<1x4x16xf32>, vector<1x4x16xf32>, vector<1x4x16xf32>, vector<1x4x16xf32>, vector<1x4x16xf32>, vector<1x4x16xf32>, vector<1x4x16xf32>, vector<1x4x16xf32>, vector<1x4x16xf32>, vector<1x4x16xf32>, vector<1x4x16xf32> -> vector<1x4x256xf32>
    %1809 = arith.addf %1759, %1808 : vector<1x4x256xf32>
    %1810 = vector.shape_cast %1758 : vector<1x256xf32> to vector<1x1x256xf32>
    %1811 = vector.broadcast %1810 : vector<1x1x256xf32> to vector<1x4x256xf32>
    %1812 = arith.addf %1809, %1811 : vector<1x4x256xf32>
    %1813 = arith.mulf %0, %1812 : vector<1x4x256xf32>
    %c0_136 = arith.constant 0 : index
    %c0_137 = arith.constant 0 : index
    %c0_138 = arith.constant 0 : index
    %1814 = vector.load %arg4[%c0_136, %c0_137, %c0_138] : memref<1x4x256xf32, #tpu.memory_space<vmem>>, vector<1x4x256xf32>
    tpu.vector_store %arg4[%c0_136, %c0_137, %c0_138], %1813 {strides = array<i32>} : memref<1x4x256xf32, #tpu.memory_space<vmem>>, vector<1x4x256xf32>,
    return
  }
  func.func @transform_0(%arg0: i32) -> i32 {
    %c0_i32 = arith.constant 0 : i32
    %c0_i32_0 = arith.constant 0 : i32
    return %c0_i32 : i32
  }
  func.func @transform_1(%arg0: i32) -> i32 {
    %c0_i32 = arith.constant 0 : i32
    %c0_i32_0 = arith.constant 0 : i32
    return %c0_i32 : i32
  }
  func.func @transform_2(%arg0: i32) -> (i32, i32, i32) {
    %c0_i32 = arith.constant 0 : i32
    %c0_i32_0 = arith.constant 0 : i32
    %c0_i32_1 = arith.constant 0 : i32
    return %arg0, %c0_i32, %c0_i32_0 : i32, i32, i32
  }
  func.func @transform_3(%arg0: i32) -> (i32, i32, i32) {
    %c0_i32 = arith.constant 0 : i32
    %c0_i32_0 = arith.constant 0 : i32
    %c0_i32_1 = arith.constant 0 : i32
    return %arg0, %c0_i32, %c0_i32_0 : i32, i32, i32
  }
}

</mosaic_0001>

<llo_original>
// kernel: triplet_attention.1
$region0: #{triplet_attention.1}
  #allocation0 [shape = 'u32[]', space=smem, size = 0x4, offset = 0x4, fixed_abs, tag = 'smem constant byte address 0x4 - core index']
  #allocation1 [shape = 'u32[72,128]{1,0:T(1,128)}', space=vmem, size = 0x9000, scoped, tag = 'internal scratch']
  %s0 = inlined_call_operand.vmem [shape: f32[294], index: 0, kind: input, shape index: {}]
  %s1 = inlined_call_operand.vmem [shape: f32[3], index: 1, kind: input, shape index: {}]
  %s2 = inlined_call_operand.vmem [shape: f32[2,4,256], index: 2, kind: input, shape index: {}]
  %s3 = inlined_call_operand.vmem [shape: f32[2,4,256], index: 3, kind: output, shape index: {}]
  %s4 = sld [smem:[#allocation0]]
  $region53: #{triplet_attention.1} parent=0
    _
  %s6 = ssub.s32 1, %s4
  %s7 = scalar_select 0, %s6, %s4
  $region1: #{triplet_attention.1} parent=0
    #allocation2 [shape = 'u8[1536]{0}', space=smem, size = 0x600, scoped, tag = 'input window, operand 0, single buffered']
    #allocation3 [shape = 's32[2]{0}', space=sflag, size = 0x8, scoped, tag = 'scoped memory for triplet_attention.1']
    #allocation4 [shape = 'u8[512]{0}', space=smem, size = 0x200, scoped, tag = 'input window, operand 1, single buffered']
    #allocation5 [shape = 's32[1]{0}', space=sflag, size = 0x4, scoped, tag = 'scoped memory for triplet_attention.1']
    %8 = vsyncpa [#allocation3], 0
    %9 = vsyncpa [#allocation5], 0
    loop: start=0, step=1, limit=4
    $region2: #{triplet_attention.1} parent=1 // loop_pre_header
      _
    $region3: #{triplet_attention.1} parent=1 // loop_header
      %s11 = sphi 0, %s15
      %p12 = scmp.ge.s32.totalorder %s11, 4
      %s19 = sphi 0, %s19
      %s21 = sphi 0, %s19
      %s22 = sphi 0, %s21
      %s36 = sphi 0, %s22
      %s40 = sphi 0, %s40
      %s42 = sphi 0, %s40
      %s43 = sphi 0, %s42
      %s57 = sphi 0, %s43
      %s63 = sphi 0, %s65
      %s66 = sphi 0, %s63
      %s67 = sphi 0, %s66
      %s83 = sphi 0, %s67
      %s89 = sphi 0, %s91
      %s92 = sphi 0, %s89
      %s93 = sphi 0, %s92
      %s109 = sphi 0, %s93
    $region4: #{triplet_attention.1} parent=1 // loop_header_branch
      %14 = sbr.rel (%p12) target = $region8
    $region5: #{triplet_attention.1} parent=1 // loop_body
      %s16 = ssub.s32 %s11, 1
      %s17 = ssub.s32 %s11, 2
      %s18 = sadd.s32 %s11, 1
      %s20 = sadd.s32 %s19, 1
      %p23 = scmp.eq.s32.totalorder %s11, 1
      %p24 = scmp.ne.s32.totalorder %s19, %s21
      %p25 = scmp.eq.s32.totalorder %s11, 0
      %p26 = por %p24, %p25
      %p27 = scmp.ne.s32.totalorder %s19, %s21
      %p28 = scmp.eq.s32.totalorder %s16, 1
      %p29 = por %p27, %p28
      %p30 = scmp.ne.s32.totalorder %s21, %s22
      %p31 = scmp.eq.s32.totalorder %s16, 0
      %p32 = por %p30, %p31
      %p33 = scmp.ne.s32.totalorder %s21, %s22
      %p34 = scmp.eq.s32.totalorder %s17, 1
      %p35 = por %p33, %p34
      %p37 = scmp.ne.s32.totalorder %s22, %s36
      %p38 = scmp.eq.s32.totalorder %s17, 0
      %p39 = por %p37, %p38
      %s41 = sadd.s32 %s40, 1
      %p44 = scmp.eq.s32.totalorder %s11, 1
      %p45 = scmp.ne.s32.totalorder %s40, %s42
      %p46 = scmp.eq.s32.totalorder %s11, 0
      %p47 = por %p45, %p46
      %p48 = scmp.ne.s32.totalorder %s40, %s42
      %p49 = scmp.eq.s32.totalorder %s16, 1
      %p50 = por %p48, %p49
      %p51 = scmp.ne.s32.totalorder %s42, %s43
      %p52 = scmp.eq.s32.totalorder %s16, 0
      %p53 = por %p51, %p52
      %p54 = scmp.ne.s32.totalorder %s42, %s43
      %p55 = scmp.eq.s32.totalorder %s17, 1
      %p56 = por %p54, %p55
      %p58 = scmp.ne.s32.totalorder %s43, %s57
      %p59 = scmp.eq.s32.totalorder %s17, 0
      %p60 = por %p58, %p59
      %s61 = ssub.s32 %s11, %s18
      %p62 = scmp.eq.s32.totalorder %s61, 0
      %s64 = sadd.s32 %s63, 1
      %s65 = scalar_select %p62, %s63, %s64
      %p68 = pneg %p62
      %p69 = scmp.eq.s32.totalorder %s11, 1
      %p70 = por %p68, %p69
      %p71 = scmp.ne.s32.totalorder %s63, %s66
      %p72 = scmp.eq.s32.totalorder %s11, 0
      %p73 = por %p71, %p72
      %p74 = scmp.ne.s32.totalorder %s63, %s66
      %p75 = scmp.eq.s32.totalorder %s16, 1
      %p76 = por %p74, %p75
      %p77 = scmp.ne.s32.totalorder %s66, %s67
      %p78 = scmp.eq.s32.totalorder %s16, 0
      %p79 = por %p77, %p78
      %p80 = scmp.ne.s32.totalorder %s66, %s67
      %p81 = scmp.eq.s32.totalorder %s17, 1
      %p82 = por %p80, %p81
      %p84 = scmp.ne.s32.totalorder %s67, %s83
      %p85 = scmp.eq.s32.totalorder %s17, 0
      %p86 = por %p84, %p85
      %s87 = ssub.s32 %s11, %s18
      %p88 = scmp.eq.s32.totalorder %s87, 0
      %s90 = sadd.s32 %s89, 1
      %s91 = scalar_select %p88, %s89, %s90
      %p94 = pneg %p88
      %p95 = scmp.eq.s32.totalorder %s11, 1
      %p96 = por %p94, %p95
      %p97 = scmp.ne.s32.totalorder %s89, %s92
      %p98 = scmp.eq.s32.totalorder %s11, 0
      %p99 = por %p97, %p98
      %p100 = scmp.ne.s32.totalorder %s89, %s92
      %p101 = scmp.eq.s32.totalorder %s16, 1
      %p102 = por %p100, %p101
      %p103 = scmp.ne.s32.totalorder %s92, %s93
      %p104 = scmp.eq.s32.totalorder %s16, 0
      %p105 = por %p103, %p104
      %p106 = scmp.ne.s32.totalorder %s92, %s93
      %p107 = scmp.eq.s32.totalorder %s17, 1
      %p108 = por %p106, %p107
      %p110 = scmp.ne.s32.totalorder %s93, %s109
      %p111 = scmp.eq.s32.totalorder %s17, 0
      %p112 = por %p110, %p111
      %p113 = scmp.le.s32.totalorder 1, %s11
      %p114 = scmp.lt.s32.totalorder %s11, 3
      %p115 = pnand %p113, %p114
      %p116 = pneg %p115
      // Predicated region
      $region9: #{triplet_attention.1} parent=5 // pred_check
        _
      $region10: #{triplet_attention.1} parent=5 // pred_check_branch
        %118 = sbr.rel (%p115) target = $region12
      $region11: #{triplet_attention.1} parent=5 // pred_region
        %s119 = ssub.s32 %s11, 1
        // Predicated region
        $region13: #{triplet_attention.1} parent=11 // pred_check
          %p120 = pneg %p32
        $region14: #{triplet_attention.1} parent=11 // pred_check_branch
          %122 = sbr.rel (%p120) target = $region16
        $region15: #{triplet_attention.1} parent=11 // pred_region
          %124 = vsyncadd [#allocation3], 0
          %s126 = sshll.u32 %s0, 4
          %s127 = int_to_ptr.vmem [resolvable:$true] %s126
          %129 = dma.vmem_to_smem %s127, 48, [#allocation2], [#allocation3]
        $region16: #{triplet_attention.1} parent=11 // pred_fallthru
          _
        // Predicated region
        $region17: #{triplet_attention.1} parent=11 // pred_check
          %p130 = pneg %p53
        $region18: #{triplet_attention.1} parent=11 // pred_check_branch
          %132 = sbr.rel (%p130) target = $region20
        $region19: #{triplet_attention.1} parent=11 // pred_region
          %134 = vsyncadd [#allocation5], 0
          %s136 = sshll.u32 %s1, 4
          %s137 = int_to_ptr.vmem [resolvable:$true] %s136
          %139 = dma.vmem_to_smem %s137, 16, [#allocation4], [#allocation5]
        $region20: #{triplet_attention.1} parent=11 // pred_fallthru
          _
      $region12: #{triplet_attention.1} parent=5 // pred_fallthru
        _
      %p140 = scmp.lt.s32.totalorder %s11, 2
      // Predicated region
      $region21: #{triplet_attention.1} parent=5 // pred_check
        %p141 = pneg %p140
      $region22: #{triplet_attention.1} parent=5 // pred_check_branch
        %143 = sbr.rel (%p141) target = $region24
      $region23: #{triplet_attention.1} parent=5 // pred_region
        // Predicated region
        $region25: #{triplet_attention.1} parent=23 // pred_check
          %p144 = pneg %p73
        $region26: #{triplet_attention.1} parent=23 // pred_check_branch
          %146 = sbr.rel (%p144) target = $region28
        $region27: #{triplet_attention.1} parent=23 // pred_region
          %p147 = scmp.lt.s32.totalorder %s11, 1
          %s148 = scalar_select %p147, %s11, 1
          %s149 = smul.addr %s148, 2
          %s150 = smul.addr %s149, 4
          %s151 = scalar_lea.vmem %s2, %s150
        $region28: #{triplet_attention.1} parent=23 // pred_fallthru
          _
      $region24: #{triplet_attention.1} parent=5 // pred_fallthru
        _
      %p152 = scmp.le.s32.totalorder 1, %s11
      %p153 = scmp.lt.s32.totalorder %s11, 3
      %p154 = pnand %p152, %p153
      %p155 = pneg %p154
      // Predicated region
      $region29: #{triplet_attention.1} parent=5 // pred_check
        _
      $region30: #{triplet_attention.1} parent=5 // pred_check_branch
        %157 = sbr.rel (%p154) target = $region32
      $region31: #{triplet_attention.1} parent=5 // pred_region
        %s158 = ssub.s32 %s11, 1
        // Predicated region
        $region33: #{triplet_attention.1} parent=31 // pred_check
          %p159 = pneg %p32
        $region34: #{triplet_attention.1} parent=31 // pred_check_branch
          %161 = sbr.rel (%p159) target = $region36
        $region35: #{triplet_attention.1} parent=31 // pred_region
          %163 = dma.done [#allocation3], 48
        $region36: #{triplet_attention.1} parent=31 // pred_fallthru
          _
        // Predicated region
        $region37: #{triplet_attention.1} parent=31 // pred_check
          %p164 = pneg %p53
        $region38: #{triplet_attention.1} parent=31 // pred_check_branch
          %166 = sbr.rel (%p164) target = $region40
        $region39: #{triplet_attention.1} parent=31 // pred_region
          %168 = dma.done [#allocation5], 16
        $region40: #{triplet_attention.1} parent=31 // pred_fallthru
          _
        %169 = sfence
        %p170 = pneg %p32
        %p171 = pneg %p29
        %p172 = pneg %p53
        %p173 = pneg %p50
        %p174 = scmp.lt.s32.totalorder %s16, 1
        %s175 = scalar_select %p174, %s16, 1
        %s176 = smul.addr %s175, 2
        %s177 = smul.addr %s176, 4
        %s178 = scalar_lea.vmem %s2, %s177
        %p179 = pneg %p79
        %p180 = pneg %p76
        %p181 = pneg %p105
        %p182 = pneg %p102
        %p183 = scmp.lt.s32.totalorder %s16, 1
        %s184 = scalar_select %p183, %s16, 1
        %s185 = smul.addr %s184, 2
        %s186 = smul.addr %s185, 4
        %s187 = scalar_lea.vmem %s3, %s186
        %p188 = scmp.lt.s32.totalorder %s16, 1
        %s189 = scalar_select %p188, %s16, 1
        %s190 = smul.addr %s189, 2
        %s191 = smul.addr %s190, 4
        %s192 = scalar_lea.vmem %s2, %s191
        %p193 = scmp.lt.s32.totalorder %s16, 1
        %s194 = scalar_select %p193, %s16, 1
        %s195 = smul.addr %s194, 2
        %s196 = smul.addr %s195, 4
        %s197 = scalar_lea.vmem %s3, %s196
        %v198 = vld [vmem:[%s192] sm:$0xff]
        %200 = vst [vmem:[#allocation1] ss:$2 sm:$0xff] %v198
        %v201 = vld.sshfl [vmem:[#allocation1] sm:$0xff pattern:$0x75316420]
        %v202 = vld.sshfl [vmem:[#allocation1 + $0x8] sm:$0xff pattern:$0x75316420]
        %vm205 = vcmask 1043456
        %v206 = vsel %vm205, %v201, -inf
        %v207 = vrot.slane %v206, 4
        %v208 = vmax.f32 %v206, %v207
        %v209 = vrot.slane %v208, 2
        %v210 = vmax.f32 %v208, %v209
        %v211 = vrot.slane %v210, 1
        %v212 = vmax.f32 %v210, %v211
        %v213 = vsel %vm205, %v202, -inf
        %v214 = vrot.slane %v213, 4
        %v215 = vmax.f32 %v213, %v214
        %v216 = vrot.slane %v215, 2
        %v217 = vmax.f32 %v215, %v216
        %v218 = vrot.slane %v217, 1
        %v219 = vmax.f32 %v217, %v218
        %220 = vst [vmem:[#allocation1] ss:$2 sm:$0xff] %v198
        %v221 = vld.sshfl [vmem:[#allocation1] sm:$0xff pattern:$0x75316420]
        %v222 = vld.sshfl [vmem:[#allocation1 + $0x8] sm:$0xff pattern:$0x75316420]
        %v225 = vsel %vm205, %v221, 0.0
        %v226 = vrot.slane %v225, 4
        %v227 = vadd.f32 %v225, %v226
        %v228 = vrot.slane %v227, 2
        %v229 = vadd.f32 %v227, %v228
        %v230 = vrot.slane %v229, 1
        %v231 = vadd.f32 %v229, %v230
        %v232 = vsel %vm205, %v222, 0.0
        %v233 = vrot.slane %v232, 4
        %v234 = vadd.f32 %v232, %v233
        %v235 = vrot.slane %v234, 2
        %v236 = vadd.f32 %v234, %v235
        %v237 = vrot.slane %v236, 1
        %v238 = vadd.f32 %v236, %v237
        %v239 = vmul.f32 %v231, 0.25
        %v240 = vmul.f32 %v238, 0.25
        %v241 = vlaneseq
        %v242 = vand.u32 %v241, 127
        %vm243 = vcmp.eq.s32.totalorder %v242, 0
        %vm244 = vcmask 125952
        %v245 = vsel %vm244, %v198, -inf
        %246 = vmax.xlane.f32.xlu0 %v245
        %v247 = vpop.xlane.xlu0 %246
        %v248 = vsel %vm243, 1, 0
        %vm249 = vcmp.eq.s32.totalorder %v248, 1
        %v250 = vsel %vm249, %v247, 0.0
        %v251 = vsel %vm244, %v198, 0.0
        %252 = vadd.xlane.f32.xlu0 %v251
        %v253 = vpop.xlane.xlu0 %252
        %v254 = vsel %vm249, %v253, 0.0
        %255 = vrot.lane.b32.xlu0 %v198, 112
        %v256 = vpop.permute.xlu0 %255
        %v258 = vmax.f32 %v198, %v256
        %v259 = vadd.f32 %v198, %v256
        %vm260 = vcmp.eq.s32.totalorder %v242, 1
        %vm261 = vcmask 257152
        %v262 = vsel %vm261, %v198, -inf
        %263 = vmax.xlane.f32.xlu0 %v262
        %v264 = vpop.xlane.xlu0 %263
        %v265 = vsel %vm260, 1, 0
        %vm266 = vcmp.eq.s32.totalorder %v265, 1
        %v267 = vsel %vm266, %v264, %v250
        %268 = vst [vmem:[#allocation1] ss:$2 sm:$0xff] %v198
        %v269 = vld.sshfl [vmem:[#allocation1] sm:$0xff pattern:$0x75316420]
        %270 = vrot.lane.b32.xlu0 %v269, 112
        %v271 = vpop.permute.xlu0 %270
        %v273 = vsel %vm244, %v271, 0.0
        %274 = vadd.xlane.f32.xlu0 %v273
        %v275 = vpop.xlane.xlu0 %274
        %v276 = vsel %vm266, %v275, %v254
        %277 = vrot.lane.b32.xlu0 %v198, 96
        %v278 = vpop.permute.xlu0 %277
        %v280 = vmax.f32 %v258, %v278
        %v281 = vadd.f32 %v259, %v278
        %vm282 = vcmp.eq.s32.totalorder %v242, 2
        %vm283 = vcmask 388352
        %v284 = vsel %vm283, %v198, -inf
        %285 = vmax.xlane.f32.xlu0 %v284
        %v286 = vpop.xlane.xlu0 %285
        %v287 = vsel %vm282, 1, 0
        %vm288 = vcmp.eq.s32.totalorder %v287, 1
        %v289 = vsel %vm288, %v286, %v267
        %290 = vst [vmem:[#allocation1] ss:$2 sm:$0xff] %v198
        %v291 = vld.sshfl [vmem:[#allocation1] sm:$0xff pattern:$0x75316420]
        %292 = vrot.lane.b32.xlu0 %v291, 96
        %v293 = vpop.permute.xlu0 %292
        %v295 = vsel %vm244, %v293, 0.0
        %296 = vadd.xlane.f32.xlu0 %v295
        %v297 = vpop.xlane.xlu0 %296
        %v298 = vsel %vm288, %v297, %v276
        %299 = vrot.lane.b32.xlu0 %v198, 80
        %v300 = vpop.permute.xlu0 %299
        %v302 = vmax.f32 %v280, %v300
        %v303 = vadd.f32 %v281, %v300
        %vm304 = vcmp.eq.s32.totalorder %v242, 3
        %vm305 = vcmask 519552
        %v306 = vsel %vm305, %v198, -inf
        %307 = vmax.xlane.f32.xlu0 %v306
        %v308 = vpop.xlane.xlu0 %307
        %v309 = vsel %vm304, 1, 0
        %vm310 = vcmp.eq.s32.totalorder %v309, 1
        %v311 = vsel %vm310, %v308, %v289
        %312 = vst [vmem:[#allocation1] ss:$2 sm:$0xff] %v198
        %v313 = vld.sshfl [vmem:[#allocation1] sm:$0xff pattern:$0x75316420]
        %314 = vrot.lane.b32.xlu0 %v313, 80
        %v315 = vpop.permute.xlu0 %314
        %v317 = vsel %vm244, %v315, 0.0
        %318 = vadd.xlane.f32.xlu0 %v317
        %v319 = vpop.xlane.xlu0 %318
        %v320 = vsel %vm310, %v319, %v298
        %321 = vrot.lane.b32.xlu0 %v198, 64
        %v322 = vpop.permute.xlu0 %321
        %v324 = vmax.f32 %v302, %v322
        %v325 = vadd.f32 %v303, %v322
        %vm326 = vcmp.eq.s32.totalorder %v242, 4
        %vm327 = vcmask 650752
        %v328 = vsel %vm327, %v198, -inf
        %329 = vmax.xlane.f32.xlu0 %v328
        %v330 = vpop.xlane.xlu0 %329
        %v331 = vsel %vm326, 1, 0
        %vm332 = vcmp.eq.s32.totalorder %v331, 1
        %v333 = vsel %vm332, %v330, %v311
        %334 = vst [vmem:[#allocation1] ss:$2 sm:$0xff] %v198
        %v335 = vld.sshfl [vmem:[#allocation1] sm:$0xff pattern:$0x75316420]
        %336 = vrot.lane.b32.xlu0 %v335, 64
        %v337 = vpop.permute.xlu0 %336
        %v339 = vsel %vm244, %v337, 0.0
        %340 = vadd.xlane.f32.xlu0 %v339
        %v341 = vpop.xlane.xlu0 %340
        %v342 = vsel %vm332, %v341, %v320
        %343 = vrot.lane.b32.xlu0 %v198, 48
        %v344 = vpop.permute.xlu0 %343
        %v346 = vmax.f32 %v324, %v344
        %v347 = vadd.f32 %v325, %v344
        %vm348 = vcmp.eq.s32.totalorder %v242, 5
        %vm349 = vcmask 781952
        %v350 = vsel %vm349, %v198, -inf
        %351 = vmax.xlane.f32.xlu0 %v350
        %v352 = vpop.xlane.xlu0 %351
        %v353 = vsel %vm348, 1, 0
        %vm354 = vcmp.eq.s32.totalorder %v353, 1
        %v355 = vsel %vm354, %v352, %v333
        %356 = vst [vmem:[#allocation1] ss:$2 sm:$0xff] %v198
        %v357 = vld.sshfl [vmem:[#allocation1] sm:$0xff pattern:$0x75316420]
        %358 = vrot.lane.b32.xlu0 %v357, 48
        %v359 = vpop.permute.xlu0 %358
        %v361 = vsel %vm244, %v359, 0.0
        %362 = vadd.xlane.f32.xlu0 %v361
        %v363 = vpop.xlane.xlu0 %362
        %v364 = vsel %vm354, %v363, %v342
        %365 = vrot.lane.b32.xlu0 %v198, 32
        %v366 = vpop.permute.xlu0 %365
        %v368 = vmax.f32 %v346, %v366
        %v369 = vadd.f32 %v347, %v366
        %vm370 = vcmp.eq.s32.totalorder %v242, 6
        %vm371 = vcmask 913152
        %v372 = vsel %vm371, %v198, -inf
        %373 = vmax.xlane.f32.xlu0 %v372
        %v374 = vpop.xlane.xlu0 %373
        %v375 = vsel %vm370, 1, 0
        %vm376 = vcmp.eq.s32.totalorder %v375, 1
        %v377 = vsel %vm376, %v374, %v355
        %378 = vst [vmem:[#allocation1] ss:$2 sm:$0xff] %v198
        %v379 = vld.sshfl [vmem:[#allocation1] sm:$0xff pattern:$0x75316420]
        %380 = vrot.lane.b32.xlu0 %v379, 32
        %v381 = vpop.permute.xlu0 %380
        %v383 = vsel %vm244, %v381, 0.0
        %384 = vadd.xlane.f32.xlu0 %v383
        %v385 = vpop.xlane.xlu0 %384
        %v386 = vsel %vm376, %v385, %v364
        %387 = vrot.lane.b32.xlu0 %v198, 16
        %v388 = vpop.permute.xlu0 %387
        %v390 = vmax.f32 %v368, %v388
        %v391 = vadd.f32 %v369, %v388
        %vm392 = vcmp.eq.s32.totalorder %v242, 7
        %vm393 = vcmask 1044352
        %v394 = vsel %vm393, %v198, -inf
        %395 = vmax.xlane.f32.xlu0 %v394
        %v396 = vpop.xlane.xlu0 %395
        %v397 = vsel %vm392, 1, 0
        %vm398 = vcmp.eq.s32.totalorder %v397, 1
        %v399 = vsel %vm398, %v396, %v377
        %400 = vst [vmem:[#allocation1] ss:$2 sm:$0xff] %v198
        %v401 = vld.sshfl [vmem:[#allocation1] sm:$0xff pattern:$0x75316420]
        %402 = vrot.lane.b32.xlu0 %v401, 16
        %v403 = vpop.permute.xlu0 %402
        %v405 = vsel %vm244, %v403, 0.0
        %406 = vadd.xlane.f32.xlu0 %v405
        %v407 = vpop.xlane.xlu0 %406
        %v408 = vsel %vm398, %v407, %v386
        %v409 = vrot.slane %v198, 4
        %v411 = vmax.f32 %v390, %v409
        %v412 = vadd.f32 %v391, %v409
        %vm413 = vcmp.eq.s32.totalorder %v242, 8
        %414 = vst [vmem:[#allocation1] ss:$2 sm:$0xff] %v198
        %v415 = vld.sshfl [vmem:[#allocation1 + $0x8] sm:$0xff pattern:$0x75316420]
        %v417 = vsel %vm244, %v415, -inf
        %418 = vmax.xlane.f32.xlu0 %v417
        %v419 = vpop.xlane.xlu0 %418
        %v420 = vsel %vm413, 1, 0
        %vm421 = vcmp.eq.s32.totalorder %v420, 1
        %v422 = vsel %vm421, %v419, %v399
        %423 = vst [vmem:[#allocation1] ss:$2 sm:$0xff] %v198
        %v424 = vld.sshfl [vmem:[#allocation1 + $0x8] sm:$0xff pattern:$0x75316420]
        %v426 = vsel %vm244, %v424, 0.0
        %427 = vadd.xlane.f32.xlu0 %v426
        %v428 = vpop.xlane.xlu0 %427
        %v429 = vsel %vm421, %v428, %v408
        %v430 = vrot.slane %v256, 4
        %v432 = vmax.f32 %v411, %v430
        %v433 = vadd.f32 %v412, %v430
        %vm434 = vcmp.eq.s32.totalorder %v242, 9
        %435 = vst [vmem:[#allocation1] ss:$2 sm:$0xff] %v198
        %v436 = vld.sshfl [vmem:[#allocation1 + $0x8] sm:$0xff pattern:$0x75316420]
        %437 = vrot.lane.b32.xlu0 %v436, 112
        %v438 = vpop.permute.xlu0 %437
        %v440 = vsel %vm244, %v438, -inf
        %441 = vmax.xlane.f32.xlu0 %v440
        %v442 = vpop.xlane.xlu0 %441
        %v443 = vsel %vm434, 1, 0
        %vm444 = vcmp.eq.s32.totalorder %v443, 1
        %v445 = vsel %vm444, %v442, %v422
        %446 = vst [vmem:[#allocation1] ss:$2 sm:$0xff] %v198
        %v447 = vld.sshfl [vmem:[#allocation1 + $0x8] sm:$0xff pattern:$0x75316420]
        %448 = vrot.lane.b32.xlu0 %v447, 112
        %v449 = vpop.permute.xlu0 %448
        %v451 = vsel %vm244, %v449, 0.0
        %452 = vadd.xlane.f32.xlu0 %v451
        %v453 = vpop.xlane.xlu0 %452
        %v454 = vsel %vm444, %v453, %v429
        %v455 = vrot.slane %v278, 4
        %v457 = vmax.f32 %v432, %v455
        %v458 = vadd.f32 %v433, %v455
        %vm459 = vcmp.eq.s32.totalorder %v242, 10
        %460 = vst [vmem:[#allocation1] ss:$2 sm:$0xff] %v198
        %v461 = vld.sshfl [vmem:[#allocation1 + $0x8] sm:$0xff pattern:$0x75316420]
        %462 = vrot.lane.b32.xlu0 %v461, 96
        %v463 = vpop.permute.xlu0 %462
        %v465 = vsel %vm244, %v463, -inf
        %466 = vmax.xlane.f32.xlu0 %v465
        %v467 = vpop.xlane.xlu0 %466
        %v468 = vsel %vm459, 1, 0
        %vm469 = vcmp.eq.s32.totalorder %v468, 1
        %v470 = vsel %vm469, %v467, %v445
        %471 = vst [vmem:[#allocation1] ss:$2 sm:$0xff] %v198
        %v472 = vld.sshfl [vmem:[#allocation1 + $0x8] sm:$0xff pattern:$0x75316420]
        %473 = vrot.lane.b32.xlu0 %v472, 96
        %v474 = vpop.permute.xlu0 %473
        %v476 = vsel %vm244, %v474, 0.0
        %477 = vadd.xlane.f32.xlu0 %v476
        %v478 = vpop.xlane.xlu0 %477
        %v479 = vsel %vm469, %v478, %v454
        %v480 = vrot.slane %v300, 4
        %v482 = vmax.f32 %v457, %v480
        %v483 = vadd.f32 %v458, %v480
        %vm484 = vcmp.eq.s32.totalorder %v242, 11
        %485 = vst [vmem:[#allocation1] ss:$2 sm:$0xff] %v198
        %v486 = vld.sshfl [vmem:[#allocation1 + $0x8] sm:$0xff pattern:$0x75316420]
        %487 = vrot.lane.b32.xlu0 %v486, 80
        %v488 = vpop.permute.xlu0 %487
        %v490 = vsel %vm244, %v488, -inf
        %491 = vmax.xlane.f32.xlu0 %v490
        %v492 = vpop.xlane.xlu0 %491
        %v493 = vsel %vm484, 1, 0
        %vm494 = vcmp.eq.s32.totalorder %v493, 1
        %v495 = vsel %vm494, %v492, %v470
        %496 = vst [vmem:[#allocation1] ss:$2 sm:$0xff] %v198
        %v497 = vld.sshfl [vmem:[#allocation1 + $0x8] sm:$0xff pattern:$0x75316420]
        %498 = vrot.lane.b32.xlu0 %v497, 80
        %v499 = vpop.permute.xlu0 %498
        %v501 = vsel %vm244, %v499, 0.0
        %502 = vadd.xlane.f32.xlu0 %v501
        %v503 = vpop.xlane.xlu0 %502
        %v504 = vsel %vm494, %v503, %v479
        %v505 = vrot.slane %v322, 4
        %v507 = vmax.f32 %v482, %v505
        %v508 = vadd.f32 %v483, %v505
        %vm509 = vcmp.eq.s32.totalorder %v242, 12
        %510 = vst [vmem:[#allocation1] ss:$2 sm:$0xff] %v198
        %v511 = vld.sshfl [vmem:[#allocation1 + $0x8] sm:$0xff pattern:$0x75316420]
        %512 = vrot.lane.b32.xlu0 %v511, 64
        %v513 = vpop.permute.xlu0 %512
        %v515 = vsel %vm244, %v513, -inf
        %516 = vmax.xlane.f32.xlu0 %v515
        %v517 = vpop.xlane.xlu0 %516
        %v518 = vsel %vm509, 1, 0
        %vm519 = vcmp.eq.s32.totalorder %v518, 1
        %v520 = vsel %vm519, %v517, %v495
        %521 = vst [vmem:[#allocation1] ss:$2 sm:$0xff] %v198
        %v522 = vld.sshfl [vmem:[#allocation1 + $0x8] sm:$0xff pattern:$0x75316420]
        %523 = vrot.lane.b32.xlu0 %v522, 64
        %v524 = vpop.permute.xlu0 %523
        %v526 = vsel %vm244, %v524, 0.0
        %527 = vadd.xlane.f32.xlu0 %v526
        %v528 = vpop.xlane.xlu0 %527
        %v529 = vsel %vm519, %v528, %v504
        %v530 = vrot.slane %v344, 4
        %v532 = vmax.f32 %v507, %v530
        %v533 = vadd.f32 %v508, %v530
        %vm534 = vcmp.eq.s32.totalorder %v242, 13
        %535 = vst [vmem:[#allocation1] ss:$2 sm:$0xff] %v198
        %v536 = vld.sshfl [vmem:[#allocation1 + $0x8] sm:$0xff pattern:$0x75316420]
        %537 = vrot.lane.b32.xlu0 %v536, 48
        %v538 = vpop.permute.xlu0 %537
        %v540 = vsel %vm244, %v538, -inf
        %541 = vmax.xlane.f32.xlu0 %v540
        %v542 = vpop.xlane.xlu0 %541
        %v543 = vsel %vm534, 1, 0
        %vm544 = vcmp.eq.s32.totalorder %v543, 1
        %v545 = vsel %vm544, %v542, %v520
        %546 = vst [vmem:[#allocation1] ss:$2 sm:$0xff] %v198
        %v547 = vld.sshfl [vmem:[#allocation1 + $0x8] sm:$0xff pattern:$0x75316420]
        %548 = vrot.lane.b32.xlu0 %v547, 48
        %v549 = vpop.permute.xlu0 %548
        %v551 = vsel %vm244, %v549, 0.0
        %552 = vadd.xlane.f32.xlu0 %v551
        %v553 = vpop.xlane.xlu0 %552
        %v554 = vsel %vm544, %v553, %v529
        %v555 = vrot.slane %v366, 4
        %v557 = vmax.f32 %v532, %v555
        %v558 = vadd.f32 %v533, %v555
        %vm559 = vcmp.eq.s32.totalorder %v242, 14
        %560 = vst [vmem:[#allocation1] ss:$2 sm:$0xff] %v198
        %v561 = vld.sshfl [vmem:[#allocation1 + $0x8] sm:$0xff pattern:$0x75316420]
        %562 = vrot.lane.b32.xlu0 %v561, 32
        %v563 = vpop.permute.xlu0 %562
        %v565 = vsel %vm244, %v563, -inf
        %566 = vmax.xlane.f32.xlu0 %v565
        %v567 = vpop.xlane.xlu0 %566
        %v568 = vsel %vm559, 1, 0
        %vm569 = vcmp.eq.s32.totalorder %v568, 1
        %v570 = vsel %vm569, %v567, %v545
        %571 = vst [vmem:[#allocation1] ss:$2 sm:$0xff] %v198
        %v572 = vld.sshfl [vmem:[#allocation1 + $0x8] sm:$0xff pattern:$0x75316420]
        %573 = vrot.lane.b32.xlu0 %v572, 32
        %v574 = vpop.permute.xlu0 %573
        %v576 = vsel %vm244, %v574, 0.0
        %577 = vadd.xlane.f32.xlu0 %v576
        %v578 = vpop.xlane.xlu0 %577
        %v579 = vsel %vm569, %v578, %v554
        %v580 = vrot.slane %v388, 4
        %v582 = vmax.f32 %v557, %v580
        %v583 = vadd.f32 %v558, %v580
        %vm584 = vcmp.eq.s32.totalorder %v242, 15
        %585 = vst [vmem:[#allocation1] ss:$2 sm:$0xff] %v198
        %v586 = vld.sshfl [vmem:[#allocation1 + $0x8] sm:$0xff pattern:$0x75316420]
        %587 = vrot.lane.b32.xlu0 %v586, 16
        %v588 = vpop.permute.xlu0 %587
        %v590 = vsel %vm244, %v588, -inf
        %591 = vmax.xlane.f32.xlu0 %v590
        %v592 = vpop.xlane.xlu0 %591
        %v593 = vsel %vm584, 1, 0
        %vm594 = vcmp.eq.s32.totalorder %v593, 1
        %v595 = vsel %vm594, %v592, %v570
        %596 = vst [vmem:[#allocation1] ss:$2 sm:$0xff] %v198
        %v597 = vld.sshfl [vmem:[#allocation1 + $0x8] sm:$0xff pattern:$0x75316420]
        %598 = vrot.lane.b32.xlu0 %v597, 16
        %v599 = vpop.permute.xlu0 %598
        %v601 = vsel %vm244, %v599, 0.0
        %602 = vadd.xlane.f32.xlu0 %v601
        %v603 = vpop.xlane.xlu0 %602
        %v604 = vsel %vm594, %v603, %v579
        %v605 = vmul.f32 %v583, 0.0625
        %v606 = vmul.f32 %v604, 0.0625
        %607 = vrot.lane.b32.xlu0 %v242, 16
        %v608 = vpop.permute.xlu0 %607
        %609 = vrot.lane.b32.xlu0 %v242, 32
        %v610 = vpop.permute.xlu0 %609
        %611 = vrot.lane.b32.xlu0 %v242, 48
        %v612 = vpop.permute.xlu0 %611
        %613 = vrot.lane.b32.xlu0 %v242, 64
        %v614 = vpop.permute.xlu0 %613
        %615 = vrot.lane.b32.xlu0 %v242, 80
        %v616 = vpop.permute.xlu0 %615
        %617 = vrot.lane.b32.xlu0 %v242, 96
        %v618 = vpop.permute.xlu0 %617
        %619 = vrot.lane.b32.xlu0 %v242, 112
        %v620 = vpop.permute.xlu0 %619
        %vm621 = vcmask 130048
        %v622 = vsel %vm621, %v242, %v608
        %vm623 = vcmask 261120
        %v624 = vsel %vm623, %v622, %v610
        %vm625 = vcmask 392192
        %v626 = vsel %vm625, %v624, %v612
        %vm627 = vcmask 523264
        %v628 = vsel %vm627, %v626, %v614
        %vm629 = vcmask 654336
        %v630 = vsel %vm629, %v628, %v616
        %vm631 = vcmask 785408
        %v632 = vsel %vm631, %v630, %v618
        %vm633 = vcmask 916480
        %v634 = vsel %vm633, %v632, %v620
        %v635 = vadd.s32 %v634, 4294967293
        %vm636 = vcmp.ge.s32.totalorder %v635, 0
        %vm637 = vcmp.lt.s32.totalorder %v635, 16
        %vm638 = vmand %vm636, %vm637
        %v639 = vadd.s32 %v634, 4294967294
        %vm640 = vcmp.ge.s32.totalorder %v639, 0
        %vm641 = vcmp.lt.s32.totalorder %v639, 16
        %vm642 = vmand %vm640, %vm641
        %v643 = vadd.s32 %v634, 4294967295
        %vm644 = vcmp.ge.s32.totalorder %v643, 0
        %vm645 = vcmp.lt.s32.totalorder %v643, 16
        %vm646 = vmand %vm644, %vm645
        %v647 = vadd.s32 %v634, 1
        %vm648 = vcmp.ge.s32.totalorder %v647, 0
        %vm649 = vcmp.lt.s32.totalorder %v647, 16
        %vm650 = vmand %vm648, %vm649
        %v651 = vadd.s32 %v634, 2
        %vm652 = vcmp.ge.s32.totalorder %v651, 0
        %vm653 = vcmp.lt.s32.totalorder %v651, 16
        %vm654 = vmand %vm652, %vm653
        %v655 = vadd.s32 %v634, 3
        %vm656 = vcmp.ge.s32.totalorder %v655, 0
        %vm657 = vcmp.lt.s32.totalorder %v655, 16
        %vm658 = vmand %vm656, %vm657
        %660 = vst [vmem:[#allocation1] ss:$2 sm:$0xff] %v582
        %v661 = vld.sshfl [vmem:[#allocation1] sm:$0xff pattern:$0x75316420]
        %662 = vrot.lane.b32.xlu0 %v661, 3
        %v663 = vpop.permute.xlu0 %662
        %vm665 = vcmask 23552
        %v666 = vsel %vm665, 0.0, %v663
        %s667 = sld [smem:[#allocation2]]
        %v668 = vstv %s667
        %v669 = vmul.f32 %v668, %v666
        %s670 = sld [smem:[#allocation2 + $0x7]]
        %v671 = vstv %s670
        %v672 = vmul.f32 %v671, %v666
        %s673 = sld [smem:[#allocation2 + $0xe]]
        %v674 = vstv %s673
        %v675 = vmul.f32 %v674, %v666
        %s676 = sld [smem:[#allocation2 + $0x15]]
        %v677 = vstv %s676
        %v678 = vmul.f32 %v677, %v666
        %s679 = sld [smem:[#allocation2 + $0x1c]]
        %v680 = vstv %s679
        %v681 = vmul.f32 %v680, %v666
        %s682 = sld [smem:[#allocation2 + $0x23]]
        %v683 = vstv %s682
        %v684 = vmul.f32 %v683, %v666
        %s685 = sld [smem:[#allocation2 + $0x2a]]
        %v686 = vstv %s685
        %v687 = vmul.f32 %v686, %v666
        %689 = vst [vmem:[#allocation1] ss:$2 sm:$0xff] %v605
        %v690 = vld.sshfl [vmem:[#allocation1] sm:$0xff pattern:$0x75316420]
        %691 = vrot.lane.b32.xlu0 %v690, 3
        %v692 = vpop.permute.xlu0 %691
        %v694 = vsel %vm665, 0.0, %v692
        %s695 = sld [smem:[#allocation2 + $0x31]]
        %v696 = vstv %s695
        %v697 = vmul.f32 %v696, %v694
        %v698 = vadd.f32 %v669, %v697
        %s699 = sld [smem:[#allocation2 + $0x38]]
        %v700 = vstv %s699
        %v701 = vmul.f32 %v700, %v694
        %v702 = vadd.f32 %v672, %v701
        %s703 = sld [smem:[#allocation2 + $0x3f]]
        %v704 = vstv %s703
        %v705 = vmul.f32 %v704, %v694
        %v706 = vadd.f32 %v675, %v705
        %s707 = sld [smem:[#allocation2 + $0x46]]
        %v708 = vstv %s707
        %v709 = vmul.f32 %v708, %v694
        %v710 = vadd.f32 %v678, %v709
        %s711 = sld [smem:[#allocation2 + $0x4d]]
        %v712 = vstv %s711
        %v713 = vmul.f32 %v712, %v694
        %v714 = vadd.f32 %v681, %v713
        %s715 = sld [smem:[#allocation2 + $0x54]]
        %v716 = vstv %s715
        %v717 = vmul.f32 %v716, %v694
        %v718 = vadd.f32 %v684, %v717
        %s719 = sld [smem:[#allocation2 + $0x5b]]
        %v720 = vstv %s719
        %v721 = vmul.f32 %v720, %v694
        %v722 = vadd.f32 %v687, %v721
        %723 = vst [vmem:[#allocation1] ss:$2 sm:$0xff] %v582
        %v724 = vld.sshfl [vmem:[#allocation1] sm:$0xff pattern:$0x75316420]
        %725 = vrot.lane.b32.xlu0 %v724, 2
        %v726 = vpop.permute.xlu0 %725
        %vm728 = vcmask 15360
        %v729 = vsel %vm728, 0.0, %v726
        %s730 = sld [smem:[#allocation2 + $0x1]]
        %v731 = vstv %s730
        %v732 = vmul.f32 %v731, %v729
        %v733 = vadd.f32 %v698, %v732
        %s734 = sld [smem:[#allocation2 + $0x8]]
        %v735 = vstv %s734
        %v736 = vmul.f32 %v735, %v729
        %v737 = vadd.f32 %v702, %v736
        %s738 = sld [smem:[#allocation2 + $0xf]]
        %v739 = vstv %s738
        %v740 = vmul.f32 %v739, %v729
        %v741 = vadd.f32 %v706, %v740
        %s742 = sld [smem:[#allocation2 + $0x16]]
        %v743 = vstv %s742
        %v744 = vmul.f32 %v743, %v729
        %v745 = vadd.f32 %v710, %v744
        %s746 = sld [smem:[#allocation2 + $0x1d]]
        %v747 = vstv %s746
        %v748 = vmul.f32 %v747, %v729
        %v749 = vadd.f32 %v714, %v748
        %s750 = sld [smem:[#allocation2 + $0x24]]
        %v751 = vstv %s750
        %v752 = vmul.f32 %v751, %v729
        %v753 = vadd.f32 %v718, %v752
        %s754 = sld [smem:[#allocation2 + $0x2b]]
        %v755 = vstv %s754
        %v756 = vmul.f32 %v755, %v729
        %v757 = vadd.f32 %v722, %v756
        %758 = vst [vmem:[#allocation1] ss:$2 sm:$0xff] %v605
        %v759 = vld.sshfl [vmem:[#allocation1] sm:$0xff pattern:$0x75316420]
        %760 = vrot.lane.b32.xlu0 %v759, 2
        %v761 = vpop.permute.xlu0 %760
        %v763 = vsel %vm728, 0.0, %v761
        %s764 = sld [smem:[#allocation2 + $0x32]]
        %v765 = vstv %s764
        %v766 = vmul.f32 %v765, %v763
        %v767 = vadd.f32 %v733, %v766
        %s768 = sld [smem:[#allocation2 + $0x39]]
        %v769 = vstv %s768
        %v770 = vmul.f32 %v769, %v763
        %v771 = vadd.f32 %v737, %v770
        %s772 = sld [smem:[#allocation2 + $0x40]]
        %v773 = vstv %s772
        %v774 = vmul.f32 %v773, %v763
        %v775 = vadd.f32 %v741, %v774
        %s776 = sld [smem:[#allocation2 + $0x47]]
        %v777 = vstv %s776
        %v778 = vmul.f32 %v777, %v763
        %v779 = vadd.f32 %v745, %v778
        %s780 = sld [smem:[#allocation2 + $0x4e]]
        %v781 = vstv %s780
        %v782 = vmul.f32 %v781, %v763
        %v783 = vadd.f32 %v749, %v782
        %s784 = sld [smem:[#allocation2 + $0x55]]
        %v785 = vstv %s784
        %v786 = vmul.f32 %v785, %v763
        %v787 = vadd.f32 %v753, %v786
        %s788 = sld [smem:[#allocation2 + $0x5c]]
        %v789 = vstv %s788
        %v790 = vmul.f32 %v789, %v763
        %v791 = vadd.f32 %v757, %v790
        %792 = vst [vmem:[#allocation1] ss:$2 sm:$0xff] %v582
        %v793 = vld.sshfl [vmem:[#allocation1] sm:$0xff pattern:$0x75316420]
        %794 = vrot.lane.b32.xlu0 %v793, 1
        %v795 = vpop.permute.xlu0 %794
        %vm797 = vcmask 7168
        %v798 = vsel %vm797, 0.0, %v795
        %s799 = sld [smem:[#allocation2 + $0x2]]
        %v800 = vstv %s799
        %v801 = vmul.f32 %v800, %v798
        %v802 = vadd.f32 %v767, %v801
        %s803 = sld [smem:[#allocation2 + $0x9]]
        %v804 = vstv %s803
        %v805 = vmul.f32 %v804, %v798
        %v806 = vadd.f32 %v771, %v805
        %s807 = sld [smem:[#allocation2 + $0x10]]
        %v808 = vstv %s807
        %v809 = vmul.f32 %v808, %v798
        %v810 = vadd.f32 %v775, %v809
        %s811 = sld [smem:[#allocation2 + $0x17]]
        %v812 = vstv %s811
        %v813 = vmul.f32 %v812, %v798
        %v814 = vadd.f32 %v779, %v813
        %s815 = sld [smem:[#allocation2 + $0x1e]]
        %v816 = vstv %s815
        %v817 = vmul.f32 %v816, %v798
        %v818 = vadd.f32 %v783, %v817
        %s819 = sld [smem:[#allocation2 + $0x25]]
        %v820 = vstv %s819
        %v821 = vmul.f32 %v820, %v798
        %v822 = vadd.f32 %v787, %v821
        %s823 = sld [smem:[#allocation2 + $0x2c]]
        %v824 = vstv %s823
        %v825 = vmul.f32 %v824, %v798
        %v826 = vadd.f32 %v791, %v825
        %827 = vst [vmem:[#allocation1] ss:$2 sm:$0xff] %v605
        %v828 = vld.sshfl [vmem:[#allocation1] sm:$0xff pattern:$0x75316420]
        %829 = vrot.lane.b32.xlu0 %v828, 1
        %v830 = vpop.permute.xlu0 %829
        %v832 = vsel %vm797, 0.0, %v830
        %s833 = sld [smem:[#allocation2 + $0x33]]
        %v834 = vstv %s833
        %v835 = vmul.f32 %v834, %v832
        %v836 = vadd.f32 %v802, %v835
        %s837 = sld [smem:[#allocation2 + $0x3a]]
        %v838 = vstv %s837
        %v839 = vmul.f32 %v838, %v832
        %v840 = vadd.f32 %v806, %v839
        %s841 = sld [smem:[#allocation2 + $0x41]]
        %v842 = vstv %s841
        %v843 = vmul.f32 %v842, %v832
        %v844 = vadd.f32 %v810, %v843
        %s845 = sld [smem:[#allocation2 + $0x48]]
        %v846 = vstv %s845
        %v847 = vmul.f32 %v846, %v832
        %v848 = vadd.f32 %v814, %v847
        %s849 = sld [smem:[#allocation2 + $0x4f]]
        %v850 = vstv %s849
        %v851 = vmul.f32 %v850, %v832
        %v852 = vadd.f32 %v818, %v851
        %s853 = sld [smem:[#allocation2 + $0x56]]
        %v854 = vstv %s853
        %v855 = vmul.f32 %v854, %v832
        %v856 = vadd.f32 %v822, %v855
        %s857 = sld [smem:[#allocation2 + $0x5d]]
        %v858 = vstv %s857
        %v859 = vmul.f32 %v858, %v832
        %v860 = vadd.f32 %v826, %v859
        %s861 = sld [smem:[#allocation2 + $0x3]]
        %v862 = vstv %s861
        %v863 = vmul.f32 %v862, %v582
        %v864 = vadd.f32 %v836, %v863
        %s865 = sld [smem:[#allocation2 + $0xa]]
        %v866 = vstv %s865
        %v867 = vmul.f32 %v866, %v582
        %v868 = vadd.f32 %v840, %v867
        %s869 = sld [smem:[#allocation2 + $0x11]]
        %v870 = vstv %s869
        %v871 = vmul.f32 %v870, %v582
        %v872 = vadd.f32 %v844, %v871
        %s873 = sld [smem:[#allocation2 + $0x18]]
        %v874 = vstv %s873
        %v875 = vmul.f32 %v874, %v582
        %v876 = vadd.f32 %v848, %v875
        %s877 = sld [smem:[#allocation2 + $0x1f]]
        %v878 = vstv %s877
        %v879 = vmul.f32 %v878, %v582
        %v880 = vadd.f32 %v852, %v879
        %s881 = sld [smem:[#allocation2 + $0x26]]
        %v882 = vstv %s881
        %v883 = vmul.f32 %v882, %v582
        %v884 = vadd.f32 %v856, %v883
        %s885 = sld [smem:[#allocation2 + $0x2d]]
        %v886 = vstv %s885
        %v887 = vmul.f32 %v886, %v582
        %v888 = vadd.f32 %v860, %v887
        %s889 = sld [smem:[#allocation2 + $0x34]]
        %v890 = vstv %s889
        %v891 = vmul.f32 %v890, %v605
        %v892 = vadd.f32 %v864, %v891
        %s893 = sld [smem:[#allocation2 + $0x3b]]
        %v894 = vstv %s893
        %v895 = vmul.f32 %v894, %v605
        %v896 = vadd.f32 %v868, %v895
        %s897 = sld [smem:[#allocation2 + $0x42]]
        %v898 = vstv %s897
        %v899 = vmul.f32 %v898, %v605
        %v900 = vadd.f32 %v872, %v899
        %s901 = sld [smem:[#allocation2 + $0x49]]
        %v902 = vstv %s901
        %v903 = vmul.f32 %v902, %v605
        %v904 = vadd.f32 %v876, %v903
        %s905 = sld [smem:[#allocation2 + $0x50]]
        %v906 = vstv %s905
        %v907 = vmul.f32 %v906, %v605
        %v908 = vadd.f32 %v880, %v907
        %s909 = sld [smem:[#allocation2 + $0x57]]
        %v910 = vstv %s909
        %v911 = vmul.f32 %v910, %v605
        %v912 = vadd.f32 %v884, %v911
        %s913 = sld [smem:[#allocation2 + $0x5e]]
        %v914 = vstv %s913
        %v915 = vmul.f32 %v914, %v605
        %v916 = vadd.f32 %v888, %v915
        %917 = vst [vmem:[#allocation1] ss:$2 sm:$0xff] %v582
        %v918 = vld.sshfl [vmem:[#allocation1] sm:$0xff pattern:$0x75316420]
        %919 = vrot.lane.b32.xlu0 %v918, 127
        %v920 = vpop.permute.xlu0 %919
        %vm922 = vcmask 121856
        %v923 = vsel %vm922, %v920, 0.0
        %s924 = sld [smem:[#allocation2 + $0x4]]
        %v925 = vstv %s924
        %v926 = vmul.f32 %v925, %v923
        %v927 = vadd.f32 %v892, %v926
        %s928 = sld [smem:[#allocation2 + $0xb]]
        %v929 = vstv %s928
        %v930 = vmul.f32 %v929, %v923
        %v931 = vadd.f32 %v896, %v930
        %s932 = sld [smem:[#allocation2 + $0x12]]
        %v933 = vstv %s932
        %v934 = vmul.f32 %v933, %v923
        %v935 = vadd.f32 %v900, %v934
        %s936 = sld [smem:[#allocation2 + $0x19]]
        %v937 = vstv %s936
        %v938 = vmul.f32 %v937, %v923
        %v939 = vadd.f32 %v904, %v938
        %s940 = sld [smem:[#allocation2 + $0x20]]
        %v941 = vstv %s940
        %v942 = vmul.f32 %v941, %v923
        %v943 = vadd.f32 %v908, %v942
        %s944 = sld [smem:[#allocation2 + $0x27]]
        %v945 = vstv %s944
        %v946 = vmul.f32 %v945, %v923
        %v947 = vadd.f32 %v912, %v946
        %s948 = sld [smem:[#allocation2 + $0x2e]]
        %v949 = vstv %s948
        %v950 = vmul.f32 %v949, %v923
        %v951 = vadd.f32 %v916, %v950
        %952 = vst [vmem:[#allocation1] ss:$2 sm:$0xff] %v605
        %v953 = vld.sshfl [vmem:[#allocation1] sm:$0xff pattern:$0x75316420]
        %954 = vrot.lane.b32.xlu0 %v953, 127
        %v955 = vpop.permute.xlu0 %954
        %v957 = vsel %vm922, %v955, 0.0
        %s958 = sld [smem:[#allocation2 + $0x35]]
        %v959 = vstv %s958
        %v960 = vmul.f32 %v959, %v957
        %v961 = vadd.f32 %v927, %v960
        %s962 = sld [smem:[#allocation2 + $0x3c]]
        %v963 = vstv %s962
        %v964 = vmul.f32 %v963, %v957
        %v965 = vadd.f32 %v931, %v964
        %s966 = sld [smem:[#allocation2 + $0x43]]
        %v967 = vstv %s966
        %v968 = vmul.f32 %v967, %v957
        %v969 = vadd.f32 %v935, %v968
        %s970 = sld [smem:[#allocation2 + $0x4a]]
        %v971 = vstv %s970
        %v972 = vmul.f32 %v971, %v957
        %v973 = vadd.f32 %v939, %v972
        %s974 = sld [smem:[#allocation2 + $0x51]]
        %v975 = vstv %s974
        %v976 = vmul.f32 %v975, %v957
        %v977 = vadd.f32 %v943, %v976
        %s978 = sld [smem:[#allocation2 + $0x58]]
        %v979 = vstv %s978
        %v980 = vmul.f32 %v979, %v957
        %v981 = vadd.f32 %v947, %v980
        %s982 = sld [smem:[#allocation2 + $0x5f]]
        %v983 = vstv %s982
        %v984 = vmul.f32 %v983, %v957
        %v985 = vadd.f32 %v951, %v984
        %986 = vst [vmem:[#allocation1] ss:$2 sm:$0xff] %v582
        %v987 = vld.sshfl [vmem:[#allocation1] sm:$0xff pattern:$0x75316420]
        %988 = vrot.lane.b32.xlu0 %v987, 126
        %v989 = vpop.permute.xlu0 %988
        %vm991 = vcmask 113664
        %v992 = vsel %vm991, %v989, 0.0
        %s993 = sld [smem:[#allocation2 + $0x5]]
        %v994 = vstv %s993
        %v995 = vmul.f32 %v994, %v992
        %v996 = vadd.f32 %v961, %v995
        %s997 = sld [smem:[#allocation2 + $0xc]]
        %v998 = vstv %s997
        %v999 = vmul.f32 %v998, %v992
        %v1000 = vadd.f32 %v965, %v999
        %s1001 = sld [smem:[#allocation2 + $0x13]]
        %v1002 = vstv %s1001
        %v1003 = vmul.f32 %v1002, %v992
        %v1004 = vadd.f32 %v969, %v1003
        %s1005 = sld [smem:[#allocation2 + $0x1a]]
        %v1006 = vstv %s1005
        %v1007 = vmul.f32 %v1006, %v992
        %v1008 = vadd.f32 %v973, %v1007
        %s1009 = sld [smem:[#allocation2 + $0x21]]
        %v1010 = vstv %s1009
        %v1011 = vmul.f32 %v1010, %v992
        %v1012 = vadd.f32 %v977, %v1011
        %s1013 = sld [smem:[#allocation2 + $0x28]]
        %v1014 = vstv %s1013
        %v1015 = vmul.f32 %v1014, %v992
        %v1016 = vadd.f32 %v981, %v1015
        %s1017 = sld [smem:[#allocation2 + $0x2f]]
        %v1018 = vstv %s1017
        %v1019 = vmul.f32 %v1018, %v992
        %v1020 = vadd.f32 %v985, %v1019
        %1021 = vst [vmem:[#allocation1] ss:$2 sm:$0xff] %v605
        %v1022 = vld.sshfl [vmem:[#allocation1] sm:$0xff pattern:$0x75316420]
        %1023 = vrot.lane.b32.xlu0 %v1022, 126
        %v1024 = vpop.permute.xlu0 %1023
        %v1026 = vsel %vm991, %v1024, 0.0
        %s1027 = sld [smem:[#allocation2 + $0x36]]
        %v1028 = vstv %s1027
        %v1029 = vmul.f32 %v1028, %v1026
        %v1030 = vadd.f32 %v996, %v1029
        %s1031 = sld [smem:[#allocation2 + $0x3d]]
        %v1032 = vstv %s1031
        %v1033 = vmul.f32 %v1032, %v1026
        %v1034 = vadd.f32 %v1000, %v1033
        %s1035 = sld [smem:[#allocation2 + $0x44]]
        %v1036 = vstv %s1035
        %v1037 = vmul.f32 %v1036, %v1026
        %v1038 = vadd.f32 %v1004, %v1037
        %s1039 = sld [smem:[#allocation2 + $0x4b]]
        %v1040 = vstv %s1039
        %v1041 = vmul.f32 %v1040, %v1026
        %v1042 = vadd.f32 %v1008, %v1041
        %s1043 = sld [smem:[#allocation2 + $0x52]]
        %v1044 = vstv %s1043
        %v1045 = vmul.f32 %v1044, %v1026
        %v1046 = vadd.f32 %v1012, %v1045
        %s1047 = sld [smem:[#allocation2 + $0x59]]
        %v1048 = vstv %s1047
        %v1049 = vmul.f32 %v1048, %v1026
        %v1050 = vadd.f32 %v1016, %v1049
        %s1051 = sld [smem:[#allocation2 + $0x60]]
        %v1052 = vstv %s1051
        %v1053 = vmul.f32 %v1052, %v1026
        %v1054 = vadd.f32 %v1020, %v1053
        %1055 = vst [vmem:[#allocation1] ss:$2 sm:$0xff] %v582
        %v1056 = vld.sshfl [vmem:[#allocation1] sm:$0xff pattern:$0x75316420]
        %1057 = vrot.lane.b32.xlu0 %v1056, 125
        %v1058 = vpop.permute.xlu0 %1057
        %vm1060 = vcmask 105472
        %v1061 = vsel %vm1060, %v1058, 0.0
        %s1062 = sld [smem:[#allocation2 + $0x6]]
        %v1063 = vstv %s1062
        %v1064 = vmul.f32 %v1063, %v1061
        %v1065 = vadd.f32 %v1030, %v1064
        %s1066 = sld [smem:[#allocation2 + $0xd]]
        %v1067 = vstv %s1066
        %v1068 = vmul.f32 %v1067, %v1061
        %v1069 = vadd.f32 %v1034, %v1068
        %s1070 = sld [smem:[#allocation2 + $0x14]]
        %v1071 = vstv %s1070
        %v1072 = vmul.f32 %v1071, %v1061
        %v1073 = vadd.f32 %v1038, %v1072
        %s1074 = sld [smem:[#allocation2 + $0x1b]]
        %v1075 = vstv %s1074
        %v1076 = vmul.f32 %v1075, %v1061
        %v1077 = vadd.f32 %v1042, %v1076
        %s1078 = sld [smem:[#allocation2 + $0x22]]
        %v1079 = vstv %s1078
        %v1080 = vmul.f32 %v1079, %v1061
        %v1081 = vadd.f32 %v1046, %v1080
        %s1082 = sld [smem:[#allocation2 + $0x29]]
        %v1083 = vstv %s1082
        %v1084 = vmul.f32 %v1083, %v1061
        %v1085 = vadd.f32 %v1050, %v1084
        %s1086 = sld [smem:[#allocation2 + $0x30]]
        %v1087 = vstv %s1086
        %v1088 = vmul.f32 %v1087, %v1061
        %v1089 = vadd.f32 %v1054, %v1088
        %1090 = vst [vmem:[#allocation1] ss:$2 sm:$0xff] %v605
        %v1091 = vld.sshfl [vmem:[#allocation1] sm:$0xff pattern:$0x75316420]
        %1092 = vrot.lane.b32.xlu0 %v1091, 125
        %v1093 = vpop.permute.xlu0 %1092
        %v1095 = vsel %vm1060, %v1093, 0.0
        %s1096 = sld [smem:[#allocation2 + $0x37]]
        %v1097 = vstv %s1096
        %v1098 = vmul.f32 %v1097, %v1095
        %v1099 = vadd.f32 %v1065, %v1098
        %s1100 = sld [smem:[#allocation2 + $0x3e]]
        %v1101 = vstv %s1100
        %v1102 = vmul.f32 %v1101, %v1095
        %v1103 = vadd.f32 %v1069, %v1102
        %s1104 = sld [smem:[#allocation2 + $0x45]]
        %v1105 = vstv %s1104
        %v1106 = vmul.f32 %v1105, %v1095
        %v1107 = vadd.f32 %v1073, %v1106
        %s1108 = sld [smem:[#allocation2 + $0x4c]]
        %v1109 = vstv %s1108
        %v1110 = vmul.f32 %v1109, %v1095
        %v1111 = vadd.f32 %v1077, %v1110
        %s1112 = sld [smem:[#allocation2 + $0x53]]
        %v1113 = vstv %s1112
        %v1114 = vmul.f32 %v1113, %v1095
        %v1115 = vadd.f32 %v1081, %v1114
        %s1116 = sld [smem:[#allocation2 + $0x5a]]
        %v1117 = vstv %s1116
        %v1118 = vmul.f32 %v1117, %v1095
        %v1119 = vadd.f32 %v1085, %v1118
        %s1120 = sld [smem:[#allocation2 + $0x61]]
        %v1121 = vstv %s1120
        %v1122 = vmul.f32 %v1121, %v1095
        %v1123 = vadd.f32 %v1089, %v1122
        %v1125 = vrot.slane %v1099, 5
        %vm1127 = vcmask 1042432
        %v1128 = vsel %vm1127, 0.0, %v1125
        %v1130 = vrot.slane %v1103, 6
        %vm1132 = vcmask 1041408
        %v1133 = vsel %vm1132, 0.0, %v1130
        %v1135 = vrot.slane %v1107, 7
        %vm1137 = vcmask 1040384
        %v1138 = vsel %vm1137, 0.0, %v1135
        %v1140 = vrot.slane %v1115, 1
        %v1142 = vsel %vm1127, %v1140, 0.0
        %v1144 = vrot.slane %v1119, 2
        %v1146 = vsel %vm1132, %v1144, 0.0
        %v1148 = vrot.slane %v1123, 3
        %v1150 = vsel %vm1137, %v1148, 0.0
        %v1151 = vadd.f32 %v1128, %v1133
        %v1152 = vadd.f32 %v1138, %v1111
        %v1153 = vadd.f32 %v1142, %v1146
        %v1154 = vadd.f32 %v1151, %v1152
        %v1155 = vadd.f32 %v1153, %v1150
        %v1156 = vadd.f32 %v1154, %v1155
        %s1157 = sld [smem:[#allocation4]]
        %v1158 = vstv %s1157
        %v1159 = vadd.f32 %v1156, %v1158
        %v1160 = vxor.u32 %v1159, 2147483648
        %v1161 = vmul.f32 %v1160, 1.442695
        %v1162 = vpow.pop %v1161
        %v1163 = vadd.f32 %v1162, 1.0
        %v1164 = vrcp.pop %v1163
        %v1165 = vmul.f32 %v1163, %v1164
        %v1166 = vsub.f32 1.0, %v1165
        %v1167 = vmul.f32 %v1164, %v1166
        %v1168 = vadd.f32 %v1164, %v1167
        %vm1169 = vweird.f32 %v1163
        %vm1170 = vweird.f32 %v1164
        %vm1171 = vmor %vm1169, %vm1170
        %v1172 = vsel %vm1171, %v1164, %v1168
        %v1173 = vand.u32 2147483647, %v1163
        %vm1174 = vcmp.eq.f32.partialorder %v1173, 8.507059e+37
        %v1175 = vand.u32 %v1163, 2147483648
        %v1176 = vor.u32 1.1754944e-38, %v1175
        %v1177 = vsel %vm1174, %v1176, %v1172
        %v1178 = vmul.f32 1.0, %v1177
        %v1180 = vrot.slane %v595, 5
        %v1182 = vsel %vm1127, 0.0, %v1180
        %s1183 = sld [smem:[#allocation2 + $0x62]]
        %v1184 = vstv %s1183
        %v1185 = vmul.f32 %v1184, %v1182
        %s1186 = sld [smem:[#allocation2 + $0x69]]
        %v1187 = vstv %s1186
        %v1188 = vmul.f32 %v1187, %v1182
        %s1189 = sld [smem:[#allocation2 + $0x70]]
        %v1190 = vstv %s1189
        %v1191 = vmul.f32 %v1190, %v1182
        %s1192 = sld [smem:[#allocation2 + $0x77]]
        %v1193 = vstv %s1192
        %v1194 = vmul.f32 %v1193, %v1182
        %s1195 = sld [smem:[#allocation2 + $0x7e]]
        %v1196 = vstv %s1195
        %v1197 = vmul.f32 %v1196, %v1182
        %s1198 = sld [smem:[#allocation2 + $0x85]]
        %v1199 = vstv %s1198
        %v1200 = vmul.f32 %v1199, %v1182
        %s1201 = sld [smem:[#allocation2 + $0x8c]]
        %v1202 = vstv %s1201
        %v1203 = vmul.f32 %v1202, %v1182
        %v1205 = vrot.slane %v606, 5
        %v1207 = vsel %vm1127, 0.0, %v1205
        %s1208 = sld [smem:[#allocation2 + $0x93]]
        %v1209 = vstv %s1208
        %v1210 = vmul.f32 %v1209, %v1207
        %v1211 = vadd.f32 %v1185, %v1210
        %s1212 = sld [smem:[#allocation2 + $0x9a]]
        %v1213 = vstv %s1212
        %v1214 = vmul.f32 %v1213, %v1207
        %v1215 = vadd.f32 %v1188, %v1214
        %s1216 = sld [smem:[#allocation2 + $0xa1]]
        %v1217 = vstv %s1216
        %v1218 = vmul.f32 %v1217, %v1207
        %v1219 = vadd.f32 %v1191, %v1218
        %s1220 = sld [smem:[#allocation2 + $0xa8]]
        %v1221 = vstv %s1220
        %v1222 = vmul.f32 %v1221, %v1207
        %v1223 = vadd.f32 %v1194, %v1222
        %s1224 = sld [smem:[#allocation2 + $0xaf]]
        %v1225 = vstv %s1224
        %v1226 = vmul.f32 %v1225, %v1207
        %v1227 = vadd.f32 %v1197, %v1226
        %s1228 = sld [smem:[#allocation2 + $0xb6]]
        %v1229 = vstv %s1228
        %v1230 = vmul.f32 %v1229, %v1207
        %v1231 = vadd.f32 %v1200, %v1230
        %s1232 = sld [smem:[#allocation2 + $0xbd]]
        %v1233 = vstv %s1232
        %v1234 = vmul.f32 %v1233, %v1207
        %v1235 = vadd.f32 %v1203, %v1234
        %v1236 = vrot.slane %v595, 6
        %v1238 = vsel %vm1132, 0.0, %v1236
        %s1239 = sld [smem:[#allocation2 + $0x63]]
        %v1240 = vstv %s1239
        %v1241 = vmul.f32 %v1240, %v1238
        %v1242 = vadd.f32 %v1211, %v1241
        %s1243 = sld [smem:[#allocation2 + $0x6a]]
        %v1244 = vstv %s1243
        %v1245 = vmul.f32 %v1244, %v1238
        %v1246 = vadd.f32 %v1215, %v1245
        %s1247 = sld [smem:[#allocation2 + $0x71]]
        %v1248 = vstv %s1247
        %v1249 = vmul.f32 %v1248, %v1238
        %v1250 = vadd.f32 %v1219, %v1249
        %s1251 = sld [smem:[#allocation2 + $0x78]]
        %v1252 = vstv %s1251
        %v1253 = vmul.f32 %v1252, %v1238
        %v1254 = vadd.f32 %v1223, %v1253
        %s1255 = sld [smem:[#allocation2 + $0x7f]]
        %v1256 = vstv %s1255
        %v1257 = vmul.f32 %v1256, %v1238
        %v1258 = vadd.f32 %v1227, %v1257
        %s1259 = sld [smem:[#allocation2 + $0x86]]
        %v1260 = vstv %s1259
        %v1261 = vmul.f32 %v1260, %v1238
        %v1262 = vadd.f32 %v1231, %v1261
        %s1263 = sld [smem:[#allocation2 + $0x8d]]
        %v1264 = vstv %s1263
        %v1265 = vmul.f32 %v1264, %v1238
        %v1266 = vadd.f32 %v1235, %v1265
        %v1267 = vrot.slane %v606, 6
        %v1269 = vsel %vm1132, 0.0, %v1267
        %s1270 = sld [smem:[#allocation2 + $0x94]]
        %v1271 = vstv %s1270
        %v1272 = vmul.f32 %v1271, %v1269
        %v1273 = vadd.f32 %v1242, %v1272
        %s1274 = sld [smem:[#allocation2 + $0x9b]]
        %v1275 = vstv %s1274
        %v1276 = vmul.f32 %v1275, %v1269
        %v1277 = vadd.f32 %v1246, %v1276
        %s1278 = sld [smem:[#allocation2 + $0xa2]]
        %v1279 = vstv %s1278
        %v1280 = vmul.f32 %v1279, %v1269
        %v1281 = vadd.f32 %v1250, %v1280
        %s1282 = sld [smem:[#allocation2 + $0xa9]]
        %v1283 = vstv %s1282
        %v1284 = vmul.f32 %v1283, %v1269
        %v1285 = vadd.f32 %v1254, %v1284
        %s1286 = sld [smem:[#allocation2 + $0xb0]]
        %v1287 = vstv %s1286
        %v1288 = vmul.f32 %v1287, %v1269
        %v1289 = vadd.f32 %v1258, %v1288
        %s1290 = sld [smem:[#allocation2 + $0xb7]]
        %v1291 = vstv %s1290
        %v1292 = vmul.f32 %v1291, %v1269
        %v1293 = vadd.f32 %v1262, %v1292
        %s1294 = sld [smem:[#allocation2 + $0xbe]]
        %v1295 = vstv %s1294
        %v1296 = vmul.f32 %v1295, %v1269
        %v1297 = vadd.f32 %v1266, %v1296
        %v1298 = vrot.slane %v595, 7
        %v1300 = vsel %vm1137, 0.0, %v1298
        %s1301 = sld [smem:[#allocation2 + $0x64]]
        %v1302 = vstv %s1301
        %v1303 = vmul.f32 %v1302, %v1300
        %v1304 = vadd.f32 %v1273, %v1303
        %s1305 = sld [smem:[#allocation2 + $0x6b]]
        %v1306 = vstv %s1305
        %v1307 = vmul.f32 %v1306, %v1300
        %v1308 = vadd.f32 %v1277, %v1307
        %s1309 = sld [smem:[#allocation2 + $0x72]]
        %v1310 = vstv %s1309
        %v1311 = vmul.f32 %v1310, %v1300
        %v1312 = vadd.f32 %v1281, %v1311
        %s1313 = sld [smem:[#allocation2 + $0x79]]
        %v1314 = vstv %s1313
        %v1315 = vmul.f32 %v1314, %v1300
        %v1316 = vadd.f32 %v1285, %v1315
        %s1317 = sld [smem:[#allocation2 + $0x80]]
        %v1318 = vstv %s1317
        %v1319 = vmul.f32 %v1318, %v1300
        %v1320 = vadd.f32 %v1289, %v1319
        %s1321 = sld [smem:[#allocation2 + $0x87]]
        %v1322 = vstv %s1321
        %v1323 = vmul.f32 %v1322, %v1300
        %v1324 = vadd.f32 %v1293, %v1323
        %s1325 = sld [smem:[#allocation2 + $0x8e]]
        %v1326 = vstv %s1325
        %v1327 = vmul.f32 %v1326, %v1300
        %v1328 = vadd.f32 %v1297, %v1327
        %v1329 = vrot.slane %v606, 7
        %v1331 = vsel %vm1137, 0.0, %v1329
        %s1332 = sld [smem:[#allocation2 + $0x95]]
        %v1333 = vstv %s1332
        %v1334 = vmul.f32 %v1333, %v1331
        %v1335 = vadd.f32 %v1304, %v1334
        %s1336 = sld [smem:[#allocation2 + $0x9c]]
        %v1337 = vstv %s1336
        %v1338 = vmul.f32 %v1337, %v1331
        %v1339 = vadd.f32 %v1308, %v1338
        %s1340 = sld [smem:[#allocation2 + $0xa3]]
        %v1341 = vstv %s1340
        %v1342 = vmul.f32 %v1341, %v1331
        %v1343 = vadd.f32 %v1312, %v1342
        %s1344 = sld [smem:[#allocation2 + $0xaa]]
        %v1345 = vstv %s1344
        %v1346 = vmul.f32 %v1345, %v1331
        %v1347 = vadd.f32 %v1316, %v1346
        %s1348 = sld [smem:[#allocation2 + $0xb1]]
        %v1349 = vstv %s1348
        %v1350 = vmul.f32 %v1349, %v1331
        %v1351 = vadd.f32 %v1320, %v1350
        %s1352 = sld [smem:[#allocation2 + $0xb8]]
        %v1353 = vstv %s1352
        %v1354 = vmul.f32 %v1353, %v1331
        %v1355 = vadd.f32 %v1324, %v1354
        %s1356 = sld [smem:[#allocation2 + $0xbf]]
        %v1357 = vstv %s1356
        %v1358 = vmul.f32 %v1357, %v1331
        %v1359 = vadd.f32 %v1328, %v1358
        %s1360 = sld [smem:[#allocation2 + $0x65]]
        %v1361 = vstv %s1360
        %v1362 = vmul.f32 %v1361, %v595
        %v1363 = vadd.f32 %v1335, %v1362
        %s1364 = sld [smem:[#allocation2 + $0x6c]]
        %v1365 = vstv %s1364
        %v1366 = vmul.f32 %v1365, %v595
        %v1367 = vadd.f32 %v1339, %v1366
        %s1368 = sld [smem:[#allocation2 + $0x73]]
        %v1369 = vstv %s1368
        %v1370 = vmul.f32 %v1369, %v595
        %v1371 = vadd.f32 %v1343, %v1370
        %s1372 = sld [smem:[#allocation2 + $0x7a]]
        %v1373 = vstv %s1372
        %v1374 = vmul.f32 %v1373, %v595
        %v1375 = vadd.f32 %v1347, %v1374
        %s1376 = sld [smem:[#allocation2 + $0x81]]
        %v1377 = vstv %s1376
        %v1378 = vmul.f32 %v1377, %v595
        %v1379 = vadd.f32 %v1351, %v1378
        %s1380 = sld [smem:[#allocation2 + $0x88]]
        %v1381 = vstv %s1380
        %v1382 = vmul.f32 %v1381, %v595
        %v1383 = vadd.f32 %v1355, %v1382
        %s1384 = sld [smem:[#allocation2 + $0x8f]]
        %v1385 = vstv %s1384
        %v1386 = vmul.f32 %v1385, %v595
        %v1387 = vadd.f32 %v1359, %v1386
        %s1388 = sld [smem:[#allocation2 + $0x96]]
        %v1389 = vstv %s1388
        %v1390 = vmul.f32 %v1389, %v606
        %v1391 = vadd.f32 %v1363, %v1390
        %s1392 = sld [smem:[#allocation2 + $0x9d]]
        %v1393 = vstv %s1392
        %v1394 = vmul.f32 %v1393, %v606
        %v1395 = vadd.f32 %v1367, %v1394
        %s1396 = sld [smem:[#allocation2 + $0xa4]]
        %v1397 = vstv %s1396
        %v1398 = vmul.f32 %v1397, %v606
        %v1399 = vadd.f32 %v1371, %v1398
        %s1400 = sld [smem:[#allocation2 + $0xab]]
        %v1401 = vstv %s1400
        %v1402 = vmul.f32 %v1401, %v606
        %v1403 = vadd.f32 %v1375, %v1402
        %s1404 = sld [smem:[#allocation2 + $0xb2]]
        %v1405 = vstv %s1404
        %v1406 = vmul.f32 %v1405, %v606
        %v1407 = vadd.f32 %v1379, %v1406
        %s1408 = sld [smem:[#allocation2 + $0xb9]]
        %v1409 = vstv %s1408
        %v1410 = vmul.f32 %v1409, %v606
        %v1411 = vadd.f32 %v1383, %v1410
        %s1412 = sld [smem:[#allocation2 + $0xc0]]
        %v1413 = vstv %s1412
        %v1414 = vmul.f32 %v1413, %v606
        %v1415 = vadd.f32 %v1387, %v1414
        %v1416 = vrot.slane %v595, 1
        %v1418 = vsel %vm1127, %v1416, 0.0
        %s1419 = sld [smem:[#allocation2 + $0x66]]
        %v1420 = vstv %s1419
        %v1421 = vmul.f32 %v1420, %v1418
        %v1422 = vadd.f32 %v1391, %v1421
        %s1423 = sld [smem:[#allocation2 + $0x6d]]
        %v1424 = vstv %s1423
        %v1425 = vmul.f32 %v1424, %v1418
        %v1426 = vadd.f32 %v1395, %v1425
        %s1427 = sld [smem:[#allocation2 + $0x74]]
        %v1428 = vstv %s1427
        %v1429 = vmul.f32 %v1428, %v1418
        %v1430 = vadd.f32 %v1399, %v1429
        %s1431 = sld [smem:[#allocation2 + $0x7b]]
        %v1432 = vstv %s1431
        %v1433 = vmul.f32 %v1432, %v1418
        %v1434 = vadd.f32 %v1403, %v1433
        %s1435 = sld [smem:[#allocation2 + $0x82]]
        %v1436 = vstv %s1435
        %v1437 = vmul.f32 %v1436, %v1418
        %v1438 = vadd.f32 %v1407, %v1437
        %s1439 = sld [smem:[#allocation2 + $0x89]]
        %v1440 = vstv %s1439
        %v1441 = vmul.f32 %v1440, %v1418
        %v1442 = vadd.f32 %v1411, %v1441
        %s1443 = sld [smem:[#allocation2 + $0x90]]
        %v1444 = vstv %s1443
        %v1445 = vmul.f32 %v1444, %v1418
        %v1446 = vadd.f32 %v1415, %v1445
        %v1447 = vrot.slane %v606, 1
        %v1449 = vsel %vm1127, %v1447, 0.0
        %s1450 = sld [smem:[#allocation2 + $0x97]]
        %v1451 = vstv %s1450
        %v1452 = vmul.f32 %v1451, %v1449
        %v1453 = vadd.f32 %v1422, %v1452
        %s1454 = sld [smem:[#allocation2 + $0x9e]]
        %v1455 = vstv %s1454
        %v1456 = vmul.f32 %v1455, %v1449
        %v1457 = vadd.f32 %v1426, %v1456
        %s1458 = sld [smem:[#allocation2 + $0xa5]]
        %v1459 = vstv %s1458
        %v1460 = vmul.f32 %v1459, %v1449
        %v1461 = vadd.f32 %v1430, %v1460
        %s1462 = sld [smem:[#allocation2 + $0xac]]
        %v1463 = vstv %s1462
        %v1464 = vmul.f32 %v1463, %v1449
        %v1465 = vadd.f32 %v1434, %v1464
        %s1466 = sld [smem:[#allocation2 + $0xb3]]
        %v1467 = vstv %s1466
        %v1468 = vmul.f32 %v1467, %v1449
        %v1469 = vadd.f32 %v1438, %v1468
        %s1470 = sld [smem:[#allocation2 + $0xba]]
        %v1471 = vstv %s1470
        %v1472 = vmul.f32 %v1471, %v1449
        %v1473 = vadd.f32 %v1442, %v1472
        %s1474 = sld [smem:[#allocation2 + $0xc1]]
        %v1475 = vstv %s1474
        %v1476 = vmul.f32 %v1475, %v1449
        %v1477 = vadd.f32 %v1446, %v1476
        %v1478 = vrot.slane %v595, 2
        %v1480 = vsel %vm1132, %v1478, 0.0
        %s1481 = sld [smem:[#allocation2 + $0x67]]
        %v1482 = vstv %s1481
        %v1483 = vmul.f32 %v1482, %v1480
        %v1484 = vadd.f32 %v1453, %v1483
        %s1485 = sld [smem:[#allocation2 + $0x6e]]
        %v1486 = vstv %s1485
        %v1487 = vmul.f32 %v1486, %v1480
        %v1488 = vadd.f32 %v1457, %v1487
        %s1489 = sld [smem:[#allocation2 + $0x75]]
        %v1490 = vstv %s1489
        %v1491 = vmul.f32 %v1490, %v1480
        %v1492 = vadd.f32 %v1461, %v1491
        %s1493 = sld [smem:[#allocation2 + $0x7c]]
        %v1494 = vstv %s1493
        %v1495 = vmul.f32 %v1494, %v1480
        %v1496 = vadd.f32 %v1465, %v1495
        %s1497 = sld [smem:[#allocation2 + $0x83]]
        %v1498 = vstv %s1497
        %v1499 = vmul.f32 %v1498, %v1480
        %v1500 = vadd.f32 %v1469, %v1499
        %s1501 = sld [smem:[#allocation2 + $0x8a]]
        %v1502 = vstv %s1501
        %v1503 = vmul.f32 %v1502, %v1480
        %v1504 = vadd.f32 %v1473, %v1503
        %s1505 = sld [smem:[#allocation2 + $0x91]]
        %v1506 = vstv %s1505
        %v1507 = vmul.f32 %v1506, %v1480
        %v1508 = vadd.f32 %v1477, %v1507
        %v1509 = vrot.slane %v606, 2
        %v1511 = vsel %vm1132, %v1509, 0.0
        %s1512 = sld [smem:[#allocation2 + $0x98]]
        %v1513 = vstv %s1512
        %v1514 = vmul.f32 %v1513, %v1511
        %v1515 = vadd.f32 %v1484, %v1514
        %s1516 = sld [smem:[#allocation2 + $0x9f]]
        %v1517 = vstv %s1516
        %v1518 = vmul.f32 %v1517, %v1511
        %v1519 = vadd.f32 %v1488, %v1518
        %s1520 = sld [smem:[#allocation2 + $0xa6]]
        %v1521 = vstv %s1520
        %v1522 = vmul.f32 %v1521, %v1511
        %v1523 = vadd.f32 %v1492, %v1522
        %s1524 = sld [smem:[#allocation2 + $0xad]]
        %v1525 = vstv %s1524
        %v1526 = vmul.f32 %v1525, %v1511
        %v1527 = vadd.f32 %v1496, %v1526
        %s1528 = sld [smem:[#allocation2 + $0xb4]]
        %v1529 = vstv %s1528
        %v1530 = vmul.f32 %v1529, %v1511
        %v1531 = vadd.f32 %v1500, %v1530
        %s1532 = sld [smem:[#allocation2 + $0xbb]]
        %v1533 = vstv %s1532
        %v1534 = vmul.f32 %v1533, %v1511
        %v1535 = vadd.f32 %v1504, %v1534
        %s1536 = sld [smem:[#allocation2 + $0xc2]]
        %v1537 = vstv %s1536
        %v1538 = vmul.f32 %v1537, %v1511
        %v1539 = vadd.f32 %v1508, %v1538
        %v1540 = vrot.slane %v595, 3
        %v1542 = vsel %vm1137, %v1540, 0.0
        %s1543 = sld [smem:[#allocation2 + $0x68]]
        %v1544 = vstv %s1543
        %v1545 = vmul.f32 %v1544, %v1542
        %v1546 = vadd.f32 %v1515, %v1545
        %s1547 = sld [smem:[#allocation2 + $0x6f]]
        %v1548 = vstv %s1547
        %v1549 = vmul.f32 %v1548, %v1542
        %v1550 = vadd.f32 %v1519, %v1549
        %s1551 = sld [smem:[#allocation2 + $0x76]]
        %v1552 = vstv %s1551
        %v1553 = vmul.f32 %v1552, %v1542
        %v1554 = vadd.f32 %v1523, %v1553
        %s1555 = sld [smem:[#allocation2 + $0x7d]]
        %v1556 = vstv %s1555
        %v1557 = vmul.f32 %v1556, %v1542
        %v1558 = vadd.f32 %v1527, %v1557
        %s1559 = sld [smem:[#allocation2 + $0x84]]
        %v1560 = vstv %s1559
        %v1561 = vmul.f32 %v1560, %v1542
        %v1562 = vadd.f32 %v1531, %v1561
        %s1563 = sld [smem:[#allocation2 + $0x8b]]
        %v1564 = vstv %s1563
        %v1565 = vmul.f32 %v1564, %v1542
        %v1566 = vadd.f32 %v1535, %v1565
        %s1567 = sld [smem:[#allocation2 + $0x92]]
        %v1568 = vstv %s1567
        %v1569 = vmul.f32 %v1568, %v1542
        %v1570 = vadd.f32 %v1539, %v1569
        %v1571 = vrot.slane %v606, 3
        %v1573 = vsel %vm1137, %v1571, 0.0
        %s1574 = sld [smem:[#allocation2 + $0x99]]
        %v1575 = vstv %s1574
        %v1576 = vmul.f32 %v1575, %v1573
        %v1577 = vadd.f32 %v1546, %v1576
        %s1578 = sld [smem:[#allocation2 + $0xa0]]
        %v1579 = vstv %s1578
        %v1580 = vmul.f32 %v1579, %v1573
        %v1581 = vadd.f32 %v1550, %v1580
        %s1582 = sld [smem:[#allocation2 + $0xa7]]
        %v1583 = vstv %s1582
        %v1584 = vmul.f32 %v1583, %v1573
        %v1585 = vadd.f32 %v1554, %v1584
        %s1586 = sld [smem:[#allocation2 + $0xae]]
        %v1587 = vstv %s1586
        %v1588 = vmul.f32 %v1587, %v1573
        %v1589 = vadd.f32 %v1558, %v1588
        %s1590 = sld [smem:[#allocation2 + $0xb5]]
        %v1591 = vstv %s1590
        %v1592 = vmul.f32 %v1591, %v1573
        %v1593 = vadd.f32 %v1562, %v1592
        %s1594 = sld [smem:[#allocation2 + $0xbc]]
        %v1595 = vstv %s1594
        %v1596 = vmul.f32 %v1595, %v1573
        %v1597 = vadd.f32 %v1566, %v1596
        %s1598 = sld [smem:[#allocation2 + $0xc3]]
        %v1599 = vstv %s1598
        %v1600 = vmul.f32 %v1599, %v1573
        %v1601 = vadd.f32 %v1570, %v1600
        %1603 = vrot.lane.b32.xlu0 %v1577, 3
        %v1604 = vpop.permute.xlu0 %1603
        %v1606 = vsel %vm665, 0.0, %v1604
        %1608 = vrot.lane.b32.xlu0 %v1581, 2
        %v1609 = vpop.permute.xlu0 %1608
        %v1611 = vsel %vm728, 0.0, %v1609
        %1613 = vrot.lane.b32.xlu0 %v1585, 1
        %v1614 = vpop.permute.xlu0 %1613
        %v1616 = vsel %vm797, 0.0, %v1614
        %1618 = vrot.lane.b32.xlu0 %v1593, 127
        %v1619 = vpop.permute.xlu0 %1618
        %v1621 = vsel %vm922, %v1619, 0.0
        %1623 = vrot.lane.b32.xlu0 %v1597, 126
        %v1624 = vpop.permute.xlu0 %1623
        %v1626 = vsel %vm991, %v1624, 0.0
        %1628 = vrot.lane.b32.xlu0 %v1601, 125
        %v1629 = vpop.permute.xlu0 %1628
        %v1631 = vsel %vm1060, %v1629, 0.0
        %v1632 = vadd.f32 %v1606, %v1611
        %v1633 = vadd.f32 %v1616, %v1589
        %v1634 = vadd.f32 %v1621, %v1626
        %v1635 = vadd.f32 %v1632, %v1633
        %v1636 = vadd.f32 %v1634, %v1631
        %v1637 = vadd.f32 %v1635, %v1636
        %s1638 = sld [smem:[#allocation4 + $0x1]]
        %v1639 = vstv %s1638
        %v1640 = vadd.f32 %v1637, %v1639
        %v1641 = vxor.u32 %v1640, 2147483648
        %v1642 = vmul.f32 %v1641, 1.442695
        %v1643 = vpow.pop %v1642
        %v1644 = vadd.f32 %v1643, 1.0
        %v1645 = vrcp.pop %v1644
        %v1646 = vmul.f32 %v1644, %v1645
        %v1647 = vsub.f32 1.0, %v1646
        %v1648 = vmul.f32 %v1645, %v1647
        %v1649 = vadd.f32 %v1645, %v1648
        %vm1650 = vweird.f32 %v1644
        %vm1651 = vweird.f32 %v1645
        %vm1652 = vmor %vm1650, %vm1651
        %v1653 = vsel %vm1652, %v1645, %v1649
        %v1654 = vand.u32 2147483647, %v1644
        %vm1655 = vcmp.eq.f32.partialorder %v1654, 8.507059e+37
        %v1656 = vand.u32 %v1644, 2147483648
        %v1657 = vor.u32 1.1754944e-38, %v1656
        %v1658 = vsel %vm1655, %v1657, %v1653
        %v1659 = vmul.f32 1.0, %v1658
        %1662 = vrot.lane.b32.xlu0 %v212, 3
        %v1663 = vpop.permute.xlu0 %1662
        %1664 = vrot.lane.b32.xlu0 %v219, 3
        %v1665 = vpop.permute.xlu0 %1664
        %v1666 = vsel %vm665, %v1663, %v1665
        %v1669 = vsel %vm665, 0.0, %v1663
        %v1670 = vsel %vm638, %v1669, 0.0
        %v1671 = vsel %vm638, %v1666, 0.0
        %s1672 = sld [smem:[#allocation2 + $0xc4]]
        %v1673 = vstv %s1672
        %v1674 = vmul.f32 %v1673, %v1670
        %v1675 = vmul.f32 %v1673, %v1671
        %s1676 = sld [smem:[#allocation2 + $0xcb]]
        %v1677 = vstv %s1676
        %v1678 = vmul.f32 %v1677, %v1670
        %v1679 = vmul.f32 %v1677, %v1671
        %s1680 = sld [smem:[#allocation2 + $0xd2]]
        %v1681 = vstv %s1680
        %v1682 = vmul.f32 %v1681, %v1670
        %v1683 = vmul.f32 %v1681, %v1671
        %s1684 = sld [smem:[#allocation2 + $0xd9]]
        %v1685 = vstv %s1684
        %v1686 = vmul.f32 %v1685, %v1670
        %v1687 = vmul.f32 %v1685, %v1671
        %s1688 = sld [smem:[#allocation2 + $0xe0]]
        %v1689 = vstv %s1688
        %v1690 = vmul.f32 %v1689, %v1670
        %v1691 = vmul.f32 %v1689, %v1671
        %s1692 = sld [smem:[#allocation2 + $0xe7]]
        %v1693 = vstv %s1692
        %v1694 = vmul.f32 %v1693, %v1670
        %v1695 = vmul.f32 %v1693, %v1671
        %s1696 = sld [smem:[#allocation2 + $0xee]]
        %v1697 = vstv %s1696
        %v1698 = vmul.f32 %v1697, %v1670
        %v1699 = vmul.f32 %v1697, %v1671
        %1702 = vrot.lane.b32.xlu0 %v239, 3
        %v1703 = vpop.permute.xlu0 %1702
        %1704 = vrot.lane.b32.xlu0 %v240, 3
        %v1705 = vpop.permute.xlu0 %1704
        %v1706 = vsel %vm665, %v1703, %v1705
        %v1709 = vsel %vm665, 0.0, %v1703
        %v1710 = vsel %vm638, %v1709, 0.0
        %v1711 = vsel %vm638, %v1706, 0.0
        %s1712 = sld [smem:[#allocation2 + $0xf5]]
        %v1713 = vstv %s1712
        %v1714 = vmul.f32 %v1713, %v1710
        %v1715 = vmul.f32 %v1713, %v1711
        %v1716 = vadd.f32 %v1674, %v1714
        %v1717 = vadd.f32 %v1675, %v1715
        %s1718 = sld [smem:[#allocation2 + $0xfc]]
        %v1719 = vstv %s1718
        %v1720 = vmul.f32 %v1719, %v1710
        %v1721 = vmul.f32 %v1719, %v1711
        %v1722 = vadd.f32 %v1678, %v1720
        %v1723 = vadd.f32 %v1679, %v1721
        %s1724 = sld [smem:[#allocation2 + $0x103]]
        %v1725 = vstv %s1724
        %v1726 = vmul.f32 %v1725, %v1710
        %v1727 = vmul.f32 %v1725, %v1711
        %v1728 = vadd.f32 %v1682, %v1726
        %v1729 = vadd.f32 %v1683, %v1727
        %s1730 = sld [smem:[#allocation2 + $0x10a]]
        %v1731 = vstv %s1730
        %v1732 = vmul.f32 %v1731, %v1710
        %v1733 = vmul.f32 %v1731, %v1711
        %v1734 = vadd.f32 %v1686, %v1732
        %v1735 = vadd.f32 %v1687, %v1733
        %s1736 = sld [smem:[#allocation2 + $0x111]]
        %v1737 = vstv %s1736
        %v1738 = vmul.f32 %v1737, %v1710
        %v1739 = vmul.f32 %v1737, %v1711
        %v1740 = vadd.f32 %v1690, %v1738
        %v1741 = vadd.f32 %v1691, %v1739
        %s1742 = sld [smem:[#allocation2 + $0x118]]
        %v1743 = vstv %s1742
        %v1744 = vmul.f32 %v1743, %v1710
        %v1745 = vmul.f32 %v1743, %v1711
        %v1746 = vadd.f32 %v1694, %v1744
        %v1747 = vadd.f32 %v1695, %v1745
        %s1748 = sld [smem:[#allocation2 + $0x11f]]
        %v1749 = vstv %s1748
        %v1750 = vmul.f32 %v1749, %v1710
        %v1751 = vmul.f32 %v1749, %v1711
        %v1752 = vadd.f32 %v1698, %v1750
        %v1753 = vadd.f32 %v1699, %v1751
        %1754 = vrot.lane.b32.xlu0 %v212, 2
        %v1755 = vpop.permute.xlu0 %1754
        %1756 = vrot.lane.b32.xlu0 %v219, 2
        %v1757 = vpop.permute.xlu0 %1756
        %v1758 = vsel %vm728, %v1755, %v1757
        %v1761 = vsel %vm728, 0.0, %v1755
        %v1762 = vsel %vm642, %v1761, 0.0
        %v1763 = vsel %vm642, %v1758, 0.0
        %s1764 = sld [smem:[#allocation2 + $0xc5]]
        %v1765 = vstv %s1764
        %v1766 = vmul.f32 %v1765, %v1762
        %v1767 = vmul.f32 %v1765, %v1763
        %v1768 = vadd.f32 %v1716, %v1766
        %v1769 = vadd.f32 %v1717, %v1767
        %s1770 = sld [smem:[#allocation2 + $0xcc]]
        %v1771 = vstv %s1770
        %v1772 = vmul.f32 %v1771, %v1762
        %v1773 = vmul.f32 %v1771, %v1763
        %v1774 = vadd.f32 %v1722, %v1772
        %v1775 = vadd.f32 %v1723, %v1773
        %s1776 = sld [smem:[#allocation2 + $0xd3]]
        %v1777 = vstv %s1776
        %v1778 = vmul.f32 %v1777, %v1762
        %v1779 = vmul.f32 %v1777, %v1763
        %v1780 = vadd.f32 %v1728, %v1778
        %v1781 = vadd.f32 %v1729, %v1779
        %s1782 = sld [smem:[#allocation2 + $0xda]]
        %v1783 = vstv %s1782
        %v1784 = vmul.f32 %v1783, %v1762
        %v1785 = vmul.f32 %v1783, %v1763
        %v1786 = vadd.f32 %v1734, %v1784
        %v1787 = vadd.f32 %v1735, %v1785
        %s1788 = sld [smem:[#allocation2 + $0xe1]]
        %v1789 = vstv %s1788
        %v1790 = vmul.f32 %v1789, %v1762
        %v1791 = vmul.f32 %v1789, %v1763
        %v1792 = vadd.f32 %v1740, %v1790
        %v1793 = vadd.f32 %v1741, %v1791
        %s1794 = sld [smem:[#allocation2 + $0xe8]]
        %v1795 = vstv %s1794
        %v1796 = vmul.f32 %v1795, %v1762
        %v1797 = vmul.f32 %v1795, %v1763
        %v1798 = vadd.f32 %v1746, %v1796
        %v1799 = vadd.f32 %v1747, %v1797
        %s1800 = sld [smem:[#allocation2 + $0xef]]
        %v1801 = vstv %s1800
        %v1802 = vmul.f32 %v1801, %v1762
        %v1803 = vmul.f32 %v1801, %v1763
        %v1804 = vadd.f32 %v1752, %v1802
        %v1805 = vadd.f32 %v1753, %v1803
        %1806 = vrot.lane.b32.xlu0 %v239, 2
        %v1807 = vpop.permute.xlu0 %1806
        %1808 = vrot.lane.b32.xlu0 %v240, 2
        %v1809 = vpop.permute.xlu0 %1808
        %v1810 = vsel %vm728, %v1807, %v1809
        %v1813 = vsel %vm728, 0.0, %v1807
        %v1814 = vsel %vm642, %v1813, 0.0
        %v1815 = vsel %vm642, %v1810, 0.0
        %s1816 = sld [smem:[#allocation2 + $0xf6]]
        %v1817 = vstv %s1816
        %v1818 = vmul.f32 %v1817, %v1814
        %v1819 = vmul.f32 %v1817, %v1815
        %v1820 = vadd.f32 %v1768, %v1818
        %v1821 = vadd.f32 %v1769, %v1819
        %s1822 = sld [smem:[#allocation2 + $0xfd]]
        %v1823 = vstv %s1822
        %v1824 = vmul.f32 %v1823, %v1814
        %v1825 = vmul.f32 %v1823, %v1815
        %v1826 = vadd.f32 %v1774, %v1824
        %v1827 = vadd.f32 %v1775, %v1825
        %s1828 = sld [smem:[#allocation2 + $0x104]]
        %v1829 = vstv %s1828
        %v1830 = vmul.f32 %v1829, %v1814
        %v1831 = vmul.f32 %v1829, %v1815
        %v1832 = vadd.f32 %v1780, %v1830
        %v1833 = vadd.f32 %v1781, %v1831
        %s1834 = sld [smem:[#allocation2 + $0x10b]]
        %v1835 = vstv %s1834
        %v1836 = vmul.f32 %v1835, %v1814
        %v1837 = vmul.f32 %v1835, %v1815
        %v1838 = vadd.f32 %v1786, %v1836
        %v1839 = vadd.f32 %v1787, %v1837
        %s1840 = sld [smem:[#allocation2 + $0x112]]
        %v1841 = vstv %s1840
        %v1842 = vmul.f32 %v1841, %v1814
        %v1843 = vmul.f32 %v1841, %v1815
        %v1844 = vadd.f32 %v1792, %v1842
        %v1845 = vadd.f32 %v1793, %v1843
        %s1846 = sld [smem:[#allocation2 + $0x119]]
        %v1847 = vstv %s1846
        %v1848 = vmul.f32 %v1847, %v1814
        %v1849 = vmul.f32 %v1847, %v1815
        %v1850 = vadd.f32 %v1798, %v1848
        %v1851 = vadd.f32 %v1799, %v1849
        %s1852 = sld [smem:[#allocation2 + $0x120]]
        %v1853 = vstv %s1852
        %v1854 = vmul.f32 %v1853, %v1814
        %v1855 = vmul.f32 %v1853, %v1815
        %v1856 = vadd.f32 %v1804, %v1854
        %v1857 = vadd.f32 %v1805, %v1855
        %1858 = vrot.lane.b32.xlu0 %v212, 1
        %v1859 = vpop.permute.xlu0 %1858
        %1860 = vrot.lane.b32.xlu0 %v219, 1
        %v1861 = vpop.permute.xlu0 %1860
        %v1862 = vsel %vm797, %v1859, %v1861
        %v1865 = vsel %vm797, 0.0, %v1859
        %v1866 = vsel %vm646, %v1865, 0.0
        %v1867 = vsel %vm646, %v1862, 0.0
        %s1868 = sld [smem:[#allocation2 + $0xc6]]
        %v1869 = vstv %s1868
        %v1870 = vmul.f32 %v1869, %v1866
        %v1871 = vmul.f32 %v1869, %v1867
        %v1872 = vadd.f32 %v1820, %v1870
        %v1873 = vadd.f32 %v1821, %v1871
        %s1874 = sld [smem:[#allocation2 + $0xcd]]
        %v1875 = vstv %s1874
        %v1876 = vmul.f32 %v1875, %v1866
        %v1877 = vmul.f32 %v1875, %v1867
        %v1878 = vadd.f32 %v1826, %v1876
        %v1879 = vadd.f32 %v1827, %v1877
        %s1880 = sld [smem:[#allocation2 + $0xd4]]
        %v1881 = vstv %s1880
        %v1882 = vmul.f32 %v1881, %v1866
        %v1883 = vmul.f32 %v1881, %v1867
        %v1884 = vadd.f32 %v1832, %v1882
        %v1885 = vadd.f32 %v1833, %v1883
        %s1886 = sld [smem:[#allocation2 + $0xdb]]
        %v1887 = vstv %s1886
        %v1888 = vmul.f32 %v1887, %v1866
        %v1889 = vmul.f32 %v1887, %v1867
        %v1890 = vadd.f32 %v1838, %v1888
        %v1891 = vadd.f32 %v1839, %v1889
        %s1892 = sld [smem:[#allocation2 + $0xe2]]
        %v1893 = vstv %s1892
        %v1894 = vmul.f32 %v1893, %v1866
        %v1895 = vmul.f32 %v1893, %v1867
        %v1896 = vadd.f32 %v1844, %v1894
        %v1897 = vadd.f32 %v1845, %v1895
        %s1898 = sld [smem:[#allocation2 + $0xe9]]
        %v1899 = vstv %s1898
        %v1900 = vmul.f32 %v1899, %v1866
        %v1901 = vmul.f32 %v1899, %v1867
        %v1902 = vadd.f32 %v1850, %v1900
        %v1903 = vadd.f32 %v1851, %v1901
        %s1904 = sld [smem:[#allocation2 + $0xf0]]
        %v1905 = vstv %s1904
        %v1906 = vmul.f32 %v1905, %v1866
        %v1907 = vmul.f32 %v1905, %v1867
        %v1908 = vadd.f32 %v1856, %v1906
        %v1909 = vadd.f32 %v1857, %v1907
        %1910 = vrot.lane.b32.xlu0 %v239, 1
        %v1911 = vpop.permute.xlu0 %1910
        %1912 = vrot.lane.b32.xlu0 %v240, 1
        %v1913 = vpop.permute.xlu0 %1912
        %v1914 = vsel %vm797, %v1911, %v1913
        %v1917 = vsel %vm797, 0.0, %v1911
        %v1918 = vsel %vm646, %v1917, 0.0
        %v1919 = vsel %vm646, %v1914, 0.0
        %s1920 = sld [smem:[#allocation2 + $0xf7]]
        %v1921 = vstv %s1920
        %v1922 = vmul.f32 %v1921, %v1918
        %v1923 = vmul.f32 %v1921, %v1919
        %v1924 = vadd.f32 %v1872, %v1922
        %v1925 = vadd.f32 %v1873, %v1923
        %s1926 = sld [smem:[#allocation2 + $0xfe]]
        %v1927 = vstv %s1926
        %v1928 = vmul.f32 %v1927, %v1918
        %v1929 = vmul.f32 %v1927, %v1919
        %v1930 = vadd.f32 %v1878, %v1928
        %v1931 = vadd.f32 %v1879, %v1929
        %s1932 = sld [smem:[#allocation2 + $0x105]]
        %v1933 = vstv %s1932
        %v1934 = vmul.f32 %v1933, %v1918
        %v1935 = vmul.f32 %v1933, %v1919
        %v1936 = vadd.f32 %v1884, %v1934
        %v1937 = vadd.f32 %v1885, %v1935
        %s1938 = sld [smem:[#allocation2 + $0x10c]]
        %v1939 = vstv %s1938
        %v1940 = vmul.f32 %v1939, %v1918
        %v1941 = vmul.f32 %v1939, %v1919
        %v1942 = vadd.f32 %v1890, %v1940
        %v1943 = vadd.f32 %v1891, %v1941
        %s1944 = sld [smem:[#allocation2 + $0x113]]
        %v1945 = vstv %s1944
        %v1946 = vmul.f32 %v1945, %v1918
        %v1947 = vmul.f32 %v1945, %v1919
        %v1948 = vadd.f32 %v1896, %v1946
        %v1949 = vadd.f32 %v1897, %v1947
        %s1950 = sld [smem:[#allocation2 + $0x11a]]
        %v1951 = vstv %s1950
        %v1952 = vmul.f32 %v1951, %v1918
        %v1953 = vmul.f32 %v1951, %v1919
        %v1954 = vadd.f32 %v1902, %v1952
        %v1955 = vadd.f32 %v1903, %v1953
        %s1956 = sld [smem:[#allocation2 + $0x121]]
        %v1957 = vstv %s1956
        %v1958 = vmul.f32 %v1957, %v1918
        %v1959 = vmul.f32 %v1957, %v1919
        %v1960 = vadd.f32 %v1908, %v1958
        %v1961 = vadd.f32 %v1909, %v1959
        %s1962 = sld [smem:[#allocation2 + $0xc7]]
        %v1963 = vstv %s1962
        %v1964 = vmul.f32 %v1963, %v212
        %v1965 = vmul.f32 %v1963, %v219
        %v1966 = vadd.f32 %v1924, %v1964
        %v1967 = vadd.f32 %v1925, %v1965
        %s1968 = sld [smem:[#allocation2 + $0xce]]
        %v1969 = vstv %s1968
        %v1970 = vmul.f32 %v1969, %v212
        %v1971 = vmul.f32 %v1969, %v219
        %v1972 = vadd.f32 %v1930, %v1970
        %v1973 = vadd.f32 %v1931, %v1971
        %s1974 = sld [smem:[#allocation2 + $0xd5]]
        %v1975 = vstv %s1974
        %v1976 = vmul.f32 %v1975, %v212
        %v1977 = vmul.f32 %v1975, %v219
        %v1978 = vadd.f32 %v1936, %v1976
        %v1979 = vadd.f32 %v1937, %v1977
        %s1980 = sld [smem:[#allocation2 + $0xdc]]
        %v1981 = vstv %s1980
        %v1982 = vmul.f32 %v1981, %v212
        %v1983 = vmul.f32 %v1981, %v219
        %v1984 = vadd.f32 %v1942, %v1982
        %v1985 = vadd.f32 %v1943, %v1983
        %s1986 = sld [smem:[#allocation2 + $0xe3]]
        %v1987 = vstv %s1986
        %v1988 = vmul.f32 %v1987, %v212
        %v1989 = vmul.f32 %v1987, %v219
        %v1990 = vadd.f32 %v1948, %v1988
        %v1991 = vadd.f32 %v1949, %v1989
        %s1992 = sld [smem:[#allocation2 + $0xea]]
        %v1993 = vstv %s1992
        %v1994 = vmul.f32 %v1993, %v212
        %v1995 = vmul.f32 %v1993, %v219
        %v1996 = vadd.f32 %v1954, %v1994
        %v1997 = vadd.f32 %v1955, %v1995
        %s1998 = sld [smem:[#allocation2 + $0xf1]]
        %v1999 = vstv %s1998
        %v2000 = vmul.f32 %v1999, %v212
        %v2001 = vmul.f32 %v1999, %v219
        %v2002 = vadd.f32 %v1960, %v2000
        %v2003 = vadd.f32 %v1961, %v2001
        %s2004 = sld [smem:[#allocation2 + $0xf8]]
        %v2005 = vstv %s2004
        %v2006 = vmul.f32 %v2005, %v239
        %v2007 = vmul.f32 %v2005, %v240
        %v2008 = vadd.f32 %v1966, %v2006
        %v2009 = vadd.f32 %v1967, %v2007
        %s2010 = sld [smem:[#allocation2 + $0xff]]
        %v2011 = vstv %s2010
        %v2012 = vmul.f32 %v2011, %v239
        %v2013 = vmul.f32 %v2011, %v240
        %v2014 = vadd.f32 %v1972, %v2012
        %v2015 = vadd.f32 %v1973, %v2013
        %s2016 = sld [smem:[#allocation2 + $0x106]]
        %v2017 = vstv %s2016
        %v2018 = vmul.f32 %v2017, %v239
        %v2019 = vmul.f32 %v2017, %v240
        %v2020 = vadd.f32 %v1978, %v2018
        %v2021 = vadd.f32 %v1979, %v2019
        %s2022 = sld [smem:[#allocation2 + $0x10d]]
        %v2023 = vstv %s2022
        %v2024 = vmul.f32 %v2023, %v239
        %v2025 = vmul.f32 %v2023, %v240
        %v2026 = vadd.f32 %v1984, %v2024
        %v2027 = vadd.f32 %v1985, %v2025
        %s2028 = sld [smem:[#allocation2 + $0x114]]
        %v2029 = vstv %s2028
        %v2030 = vmul.f32 %v2029, %v239
        %v2031 = vmul.f32 %v2029, %v240
        %v2032 = vadd.f32 %v1990, %v2030
        %v2033 = vadd.f32 %v1991, %v2031
        %s2034 = sld [smem:[#allocation2 + $0x11b]]
        %v2035 = vstv %s2034
        %v2036 = vmul.f32 %v2035, %v239
        %v2037 = vmul.f32 %v2035, %v240
        %v2038 = vadd.f32 %v1996, %v2036
        %v2039 = vadd.f32 %v1997, %v2037
        %s2040 = sld [smem:[#allocation2 + $0x122]]
        %v2041 = vstv %s2040
        %v2042 = vmul.f32 %v2041, %v239
        %v2043 = vmul.f32 %v2041, %v240
        %v2044 = vadd.f32 %v2002, %v2042
        %v2045 = vadd.f32 %v2003, %v2043
        %2046 = vrot.lane.b32.xlu0 %v212, 127
        %v2047 = vpop.permute.xlu0 %2046
        %2048 = vrot.lane.b32.xlu0 %v219, 127
        %v2049 = vpop.permute.xlu0 %2048
        %vm2050 = vcmask 1039360
        %v2051 = vsel %vm2050, %v2047, %v2049
        %v2054 = vsel %vm2050, %v2049, 0.0
        %v2055 = vsel %vm650, %v2051, 0.0
        %v2056 = vsel %vm650, %v2054, 0.0
        %s2057 = sld [smem:[#allocation2 + $0xc8]]
        %v2058 = vstv %s2057
        %v2059 = vmul.f32 %v2058, %v2055
        %v2060 = vmul.f32 %v2058, %v2056
        %v2061 = vadd.f32 %v2008, %v2059
        %v2062 = vadd.f32 %v2009, %v2060
        %s2063 = sld [smem:[#allocation2 + $0xcf]]
        %v2064 = vstv %s2063
        %v2065 = vmul.f32 %v2064, %v2055
        %v2066 = vmul.f32 %v2064, %v2056
        %v2067 = vadd.f32 %v2014, %v2065
        %v2068 = vadd.f32 %v2015, %v2066
        %s2069 = sld [smem:[#allocation2 + $0xd6]]
        %v2070 = vstv %s2069
        %v2071 = vmul.f32 %v2070, %v2055
        %v2072 = vmul.f32 %v2070, %v2056
        %v2073 = vadd.f32 %v2020, %v2071
        %v2074 = vadd.f32 %v2021, %v2072
        %s2075 = sld [smem:[#allocation2 + $0xdd]]
        %v2076 = vstv %s2075
        %v2077 = vmul.f32 %v2076, %v2055
        %v2078 = vmul.f32 %v2076, %v2056
        %v2079 = vadd.f32 %v2026, %v2077
        %v2080 = vadd.f32 %v2027, %v2078
        %s2081 = sld [smem:[#allocation2 + $0xe4]]
        %v2082 = vstv %s2081
        %v2083 = vmul.f32 %v2082, %v2055
        %v2084 = vmul.f32 %v2082, %v2056
        %v2085 = vadd.f32 %v2032, %v2083
        %v2086 = vadd.f32 %v2033, %v2084
        %s2087 = sld [smem:[#allocation2 + $0xeb]]
        %v2088 = vstv %s2087
        %v2089 = vmul.f32 %v2088, %v2055
        %v2090 = vmul.f32 %v2088, %v2056
        %v2091 = vadd.f32 %v2038, %v2089
        %v2092 = vadd.f32 %v2039, %v2090
        %s2093 = sld [smem:[#allocation2 + $0xf2]]
        %v2094 = vstv %s2093
        %v2095 = vmul.f32 %v2094, %v2055
        %v2096 = vmul.f32 %v2094, %v2056
        %v2097 = vadd.f32 %v2044, %v2095
        %v2098 = vadd.f32 %v2045, %v2096
        %2099 = vrot.lane.b32.xlu0 %v239, 127
        %v2100 = vpop.permute.xlu0 %2099
        %2101 = vrot.lane.b32.xlu0 %v240, 127
        %v2102 = vpop.permute.xlu0 %2101
        %v2103 = vsel %vm2050, %v2100, %v2102
        %v2106 = vsel %vm2050, %v2102, 0.0
        %v2107 = vsel %vm650, %v2103, 0.0
        %v2108 = vsel %vm650, %v2106, 0.0
        %s2109 = sld [smem:[#allocation2 + $0xf9]]
        %v2110 = vstv %s2109
        %v2111 = vmul.f32 %v2110, %v2107
        %v2112 = vmul.f32 %v2110, %v2108
        %v2113 = vadd.f32 %v2061, %v2111
        %v2114 = vadd.f32 %v2062, %v2112
        %s2115 = sld [smem:[#allocation2 + $0x100]]
        %v2116 = vstv %s2115
        %v2117 = vmul.f32 %v2116, %v2107
        %v2118 = vmul.f32 %v2116, %v2108
        %v2119 = vadd.f32 %v2067, %v2117
        %v2120 = vadd.f32 %v2068, %v2118
        %s2121 = sld [smem:[#allocation2 + $0x107]]
        %v2122 = vstv %s2121
        %v2123 = vmul.f32 %v2122, %v2107
        %v2124 = vmul.f32 %v2122, %v2108
        %v2125 = vadd.f32 %v2073, %v2123
        %v2126 = vadd.f32 %v2074, %v2124
        %s2127 = sld [smem:[#allocation2 + $0x10e]]
        %v2128 = vstv %s2127
        %v2129 = vmul.f32 %v2128, %v2107
        %v2130 = vmul.f32 %v2128, %v2108
        %v2131 = vadd.f32 %v2079, %v2129
        %v2132 = vadd.f32 %v2080, %v2130
        %s2133 = sld [smem:[#allocation2 + $0x115]]
        %v2134 = vstv %s2133
        %v2135 = vmul.f32 %v2134, %v2107
        %v2136 = vmul.f32 %v2134, %v2108
        %v2137 = vadd.f32 %v2085, %v2135
        %v2138 = vadd.f32 %v2086, %v2136
        %s2139 = sld [smem:[#allocation2 + $0x11c]]
        %v2140 = vstv %s2139
        %v2141 = vmul.f32 %v2140, %v2107
        %v2142 = vmul.f32 %v2140, %v2108
        %v2143 = vadd.f32 %v2091, %v2141
        %v2144 = vadd.f32 %v2092, %v2142
        %s2145 = sld [smem:[#allocation2 + $0x123]]
        %v2146 = vstv %s2145
        %v2147 = vmul.f32 %v2146, %v2107
        %v2148 = vmul.f32 %v2146, %v2108
        %v2149 = vadd.f32 %v2097, %v2147
        %v2150 = vadd.f32 %v2098, %v2148
        %2151 = vrot.lane.b32.xlu0 %v212, 126
        %v2152 = vpop.permute.xlu0 %2151
        %2153 = vrot.lane.b32.xlu0 %v219, 126
        %v2154 = vpop.permute.xlu0 %2153
        %vm2155 = vcmask 1031168
        %v2156 = vsel %vm2155, %v2152, %v2154
        %v2159 = vsel %vm2155, %v2154, 0.0
        %v2160 = vsel %vm654, %v2156, 0.0
        %v2161 = vsel %vm654, %v2159, 0.0
        %s2162 = sld [smem:[#allocation2 + $0xc9]]
        %v2163 = vstv %s2162
        %v2164 = vmul.f32 %v2163, %v2160
        %v2165 = vmul.f32 %v2163, %v2161
        %v2166 = vadd.f32 %v2113, %v2164
        %v2167 = vadd.f32 %v2114, %v2165
        %s2168 = sld [smem:[#allocation2 + $0xd0]]
        %v2169 = vstv %s2168
        %v2170 = vmul.f32 %v2169, %v2160
        %v2171 = vmul.f32 %v2169, %v2161
        %v2172 = vadd.f32 %v2119, %v2170
        %v2173 = vadd.f32 %v2120, %v2171
        %s2174 = sld [smem:[#allocation2 + $0xd7]]
        %v2175 = vstv %s2174
        %v2176 = vmul.f32 %v2175, %v2160
        %v2177 = vmul.f32 %v2175, %v2161
        %v2178 = vadd.f32 %v2125, %v2176
        %v2179 = vadd.f32 %v2126, %v2177
        %s2180 = sld [smem:[#allocation2 + $0xde]]
        %v2181 = vstv %s2180
        %v2182 = vmul.f32 %v2181, %v2160
        %v2183 = vmul.f32 %v2181, %v2161
        %v2184 = vadd.f32 %v2131, %v2182
        %v2185 = vadd.f32 %v2132, %v2183
        %s2186 = sld [smem:[#allocation2 + $0xe5]]
        %v2187 = vstv %s2186
        %v2188 = vmul.f32 %v2187, %v2160
        %v2189 = vmul.f32 %v2187, %v2161
        %v2190 = vadd.f32 %v2137, %v2188
        %v2191 = vadd.f32 %v2138, %v2189
        %s2192 = sld [smem:[#allocation2 + $0xec]]
        %v2193 = vstv %s2192
        %v2194 = vmul.f32 %v2193, %v2160
        %v2195 = vmul.f32 %v2193, %v2161
        %v2196 = vadd.f32 %v2143, %v2194
        %v2197 = vadd.f32 %v2144, %v2195
        %s2198 = sld [smem:[#allocation2 + $0xf3]]
        %v2199 = vstv %s2198
        %v2200 = vmul.f32 %v2199, %v2160
        %v2201 = vmul.f32 %v2199, %v2161
        %v2202 = vadd.f32 %v2149, %v2200
        %v2203 = vadd.f32 %v2150, %v2201
        %2204 = vrot.lane.b32.xlu0 %v239, 126
        %v2205 = vpop.permute.xlu0 %2204
        %2206 = vrot.lane.b32.xlu0 %v240, 126
        %v2207 = vpop.permute.xlu0 %2206
        %v2208 = vsel %vm2155, %v2205, %v2207
        %v2211 = vsel %vm2155, %v2207, 0.0
        %v2212 = vsel %vm654, %v2208, 0.0
        %v2213 = vsel %vm654, %v2211, 0.0
        %s2214 = sld [smem:[#allocation2 + $0xfa]]
        %v2215 = vstv %s2214
        %v2216 = vmul.f32 %v2215, %v2212
        %v2217 = vmul.f32 %v2215, %v2213
        %v2218 = vadd.f32 %v2166, %v2216
        %v2219 = vadd.f32 %v2167, %v2217
        %s2220 = sld [smem:[#allocation2 + $0x101]]
        %v2221 = vstv %s2220
        %v2222 = vmul.f32 %v2221, %v2212
        %v2223 = vmul.f32 %v2221, %v2213
        %v2224 = vadd.f32 %v2172, %v2222
        %v2225 = vadd.f32 %v2173, %v2223
        %s2226 = sld [smem:[#allocation2 + $0x108]]
        %v2227 = vstv %s2226
        %v2228 = vmul.f32 %v2227, %v2212
        %v2229 = vmul.f32 %v2227, %v2213
        %v2230 = vadd.f32 %v2178, %v2228
        %v2231 = vadd.f32 %v2179, %v2229
        %s2232 = sld [smem:[#allocation2 + $0x10f]]
        %v2233 = vstv %s2232
        %v2234 = vmul.f32 %v2233, %v2212
        %v2235 = vmul.f32 %v2233, %v2213
        %v2236 = vadd.f32 %v2184, %v2234
        %v2237 = vadd.f32 %v2185, %v2235
        %s2238 = sld [smem:[#allocation2 + $0x116]]
        %v2239 = vstv %s2238
        %v2240 = vmul.f32 %v2239, %v2212
        %v2241 = vmul.f32 %v2239, %v2213
        %v2242 = vadd.f32 %v2190, %v2240
        %v2243 = vadd.f32 %v2191, %v2241
        %s2244 = sld [smem:[#allocation2 + $0x11d]]
        %v2245 = vstv %s2244
        %v2246 = vmul.f32 %v2245, %v2212
        %v2247 = vmul.f32 %v2245, %v2213
        %v2248 = vadd.f32 %v2196, %v2246
        %v2249 = vadd.f32 %v2197, %v2247
        %s2250 = sld [smem:[#allocation2 + $0x124]]
        %v2251 = vstv %s2250
        %v2252 = vmul.f32 %v2251, %v2212
        %v2253 = vmul.f32 %v2251, %v2213
        %v2254 = vadd.f32 %v2202, %v2252
        %v2255 = vadd.f32 %v2203, %v2253
        %2256 = vrot.lane.b32.xlu0 %v212, 125
        %v2257 = vpop.permute.xlu0 %2256
        %2258 = vrot.lane.b32.xlu0 %v219, 125
        %v2259 = vpop.permute.xlu0 %2258
        %vm2260 = vcmask 1022976
        %v2261 = vsel %vm2260, %v2257, %v2259
        %v2264 = vsel %vm2260, %v2259, 0.0
        %v2265 = vsel %vm658, %v2261, 0.0
        %v2266 = vsel %vm658, %v2264, 0.0
        %s2267 = sld [smem:[#allocation2 + $0xca]]
        %v2268 = vstv %s2267
        %v2269 = vmul.f32 %v2268, %v2265
        %v2270 = vmul.f32 %v2268, %v2266
        %v2271 = vadd.f32 %v2218, %v2269
        %v2272 = vadd.f32 %v2219, %v2270
        %s2273 = sld [smem:[#allocation2 + $0xd1]]
        %v2274 = vstv %s2273
        %v2275 = vmul.f32 %v2274, %v2265
        %v2276 = vmul.f32 %v2274, %v2266
        %v2277 = vadd.f32 %v2224, %v2275
        %v2278 = vadd.f32 %v2225, %v2276
        %s2279 = sld [smem:[#allocation2 + $0xd8]]
        %v2280 = vstv %s2279
        %v2281 = vmul.f32 %v2280, %v2265
        %v2282 = vmul.f32 %v2280, %v2266
        %v2283 = vadd.f32 %v2230, %v2281
        %v2284 = vadd.f32 %v2231, %v2282
        %s2285 = sld [smem:[#allocation2 + $0xdf]]
        %v2286 = vstv %s2285
        %v2287 = vmul.f32 %v2286, %v2265
        %v2288 = vmul.f32 %v2286, %v2266
        %v2289 = vadd.f32 %v2236, %v2287
        %v2290 = vadd.f32 %v2237, %v2288
        %s2291 = sld [smem:[#allocation2 + $0xe6]]
        %v2292 = vstv %s2291
        %v2293 = vmul.f32 %v2292, %v2265
        %v2294 = vmul.f32 %v2292, %v2266
        %v2295 = vadd.f32 %v2242, %v2293
        %v2296 = vadd.f32 %v2243, %v2294
        %s2297 = sld [smem:[#allocation2 + $0xed]]
        %v2298 = vstv %s2297
        %v2299 = vmul.f32 %v2298, %v2265
        %v2300 = vmul.f32 %v2298, %v2266
        %v2301 = vadd.f32 %v2248, %v2299
        %v2302 = vadd.f32 %v2249, %v2300
        %s2303 = sld [smem:[#allocation2 + $0xf4]]
        %v2304 = vstv %s2303
        %v2305 = vmul.f32 %v2304, %v2265
        %v2306 = vmul.f32 %v2304, %v2266
        %v2307 = vadd.f32 %v2254, %v2305
        %v2308 = vadd.f32 %v2255, %v2306
        %2309 = vrot.lane.b32.xlu0 %v239, 125
        %v2310 = vpop.permute.xlu0 %2309
        %2311 = vrot.lane.b32.xlu0 %v240, 125
        %v2312 = vpop.permute.xlu0 %2311
        %v2313 = vsel %vm2260, %v2310, %v2312
        %v2316 = vsel %vm2260, %v2312, 0.0
        %v2317 = vsel %vm658, %v2313, 0.0
        %v2318 = vsel %vm658, %v2316, 0.0
        %s2319 = sld [smem:[#allocation2 + $0xfb]]
        %v2320 = vstv %s2319
        %v2321 = vmul.f32 %v2320, %v2317
        %v2322 = vmul.f32 %v2320, %v2318
        %v2323 = vadd.f32 %v2271, %v2321
        %v2324 = vadd.f32 %v2272, %v2322
        %s2325 = sld [smem:[#allocation2 + $0x102]]
        %v2326 = vstv %s2325
        %v2327 = vmul.f32 %v2326, %v2317
        %v2328 = vmul.f32 %v2326, %v2318
        %v2329 = vadd.f32 %v2277, %v2327
        %v2330 = vadd.f32 %v2278, %v2328
        %s2331 = sld [smem:[#allocation2 + $0x109]]
        %v2332 = vstv %s2331
        %v2333 = vmul.f32 %v2332, %v2317
        %v2334 = vmul.f32 %v2332, %v2318
        %v2335 = vadd.f32 %v2283, %v2333
        %v2336 = vadd.f32 %v2284, %v2334
        %s2337 = sld [smem:[#allocation2 + $0x110]]
        %v2338 = vstv %s2337
        %v2339 = vmul.f32 %v2338, %v2317
        %v2340 = vmul.f32 %v2338, %v2318
        %v2341 = vadd.f32 %v2289, %v2339
        %v2342 = vadd.f32 %v2290, %v2340
        %s2343 = sld [smem:[#allocation2 + $0x117]]
        %v2344 = vstv %s2343
        %v2345 = vmul.f32 %v2344, %v2317
        %v2346 = vmul.f32 %v2344, %v2318
        %v2347 = vadd.f32 %v2295, %v2345
        %v2348 = vadd.f32 %v2296, %v2346
        %s2349 = sld [smem:[#allocation2 + $0x11e]]
        %v2350 = vstv %s2349
        %v2351 = vmul.f32 %v2350, %v2317
        %v2352 = vmul.f32 %v2350, %v2318
        %v2353 = vadd.f32 %v2301, %v2351
        %v2354 = vadd.f32 %v2302, %v2352
        %s2355 = sld [smem:[#allocation2 + $0x125]]
        %v2356 = vstv %s2355
        %v2357 = vmul.f32 %v2356, %v2317
        %v2358 = vmul.f32 %v2356, %v2318
        %v2359 = vadd.f32 %v2307, %v2357
        %v2360 = vadd.f32 %v2308, %v2358
        %2363 = vrot.lane.b32.xlu0 %v2323, 48
        %v2364 = vpop.permute.xlu0 %2363
        %2365 = vrot.lane.b32.xlu0 %v2324, 48
        %v2366 = vpop.permute.xlu0 %2365
        %v2367 = vsel %vm625, %v2364, %v2366
        %v2370 = vsel %vm625, 0.0, %v2364
        %2373 = vrot.lane.b32.xlu0 %v2329, 32
        %v2374 = vpop.permute.xlu0 %2373
        %2375 = vrot.lane.b32.xlu0 %v2330, 32
        %v2376 = vpop.permute.xlu0 %2375
        %v2377 = vsel %vm623, %v2374, %v2376
        %v2380 = vsel %vm623, 0.0, %v2374
        %2383 = vrot.lane.b32.xlu0 %v2335, 16
        %v2384 = vpop.permute.xlu0 %2383
        %2385 = vrot.lane.b32.xlu0 %v2336, 16
        %v2386 = vpop.permute.xlu0 %2385
        %v2387 = vsel %vm621, %v2384, %v2386
        %v2390 = vsel %vm621, 0.0, %v2384
        %2393 = vrot.lane.b32.xlu0 %v2347, 112
        %v2394 = vpop.permute.xlu0 %2393
        %2395 = vrot.lane.b32.xlu0 %v2348, 112
        %v2396 = vpop.permute.xlu0 %2395
        %v2397 = vsel %vm633, %v2394, %v2396
        %v2400 = vsel %vm633, %v2396, 0.0
        %2403 = vrot.lane.b32.xlu0 %v2353, 96
        %v2404 = vpop.permute.xlu0 %2403
        %2405 = vrot.lane.b32.xlu0 %v2354, 96
        %v2406 = vpop.permute.xlu0 %2405
        %v2407 = vsel %vm631, %v2404, %v2406
        %v2410 = vsel %vm631, %v2406, 0.0
        %2413 = vrot.lane.b32.xlu0 %v2359, 80
        %v2414 = vpop.permute.xlu0 %2413
        %2415 = vrot.lane.b32.xlu0 %v2360, 80
        %v2416 = vpop.permute.xlu0 %2415
        %v2417 = vsel %vm629, %v2414, %v2416
        %v2420 = vsel %vm629, %v2416, 0.0
        %v2421 = vadd.f32 %v2370, %v2380
        %v2422 = vadd.f32 %v2367, %v2377
        %v2423 = vadd.f32 %v2390, %v2341
        %v2424 = vadd.f32 %v2387, %v2342
        %v2425 = vadd.f32 %v2397, %v2407
        %v2426 = vadd.f32 %v2400, %v2410
        %v2427 = vadd.f32 %v2421, %v2423
        %v2428 = vadd.f32 %v2422, %v2424
        %v2429 = vadd.f32 %v2425, %v2417
        %v2430 = vadd.f32 %v2426, %v2420
        %v2431 = vadd.f32 %v2427, %v2429
        %v2432 = vadd.f32 %v2428, %v2430
        %s2433 = sld [smem:[#allocation4 + $0x2]]
        %v2434 = vstv %s2433
        %v2435 = vadd.f32 %v2431, %v2434
        %v2436 = vadd.f32 %v2432, %v2434
        %v2437 = vxor.u32 %v2435, 2147483648
        %v2438 = vxor.u32 %v2436, 2147483648
        %v2439 = vmul.f32 %v2437, 1.442695
        %v2440 = vpow.pop %v2439
        %v2441 = vmul.f32 %v2438, 1.442695
        %v2442 = vpow.pop %v2441
        %v2443 = vadd.f32 %v2440, 1.0
        %v2444 = vadd.f32 %v2442, 1.0
        %v2445 = vrcp.pop %v2443
        %v2446 = vmul.f32 %v2443, %v2445
        %v2447 = vsub.f32 1.0, %v2446
        %v2448 = vmul.f32 %v2445, %v2447
        %v2449 = vadd.f32 %v2445, %v2448
        %vm2450 = vweird.f32 %v2443
        %vm2451 = vweird.f32 %v2445
        %vm2452 = vmor %vm2450, %vm2451
        %v2453 = vsel %vm2452, %v2445, %v2449
        %v2454 = vand.u32 2147483647, %v2443
        %vm2455 = vcmp.eq.f32.partialorder %v2454, 8.507059e+37
        %v2456 = vand.u32 %v2443, 2147483648
        %v2457 = vor.u32 1.1754944e-38, %v2456
        %v2458 = vsel %vm2455, %v2457, %v2453
        %v2459 = vmul.f32 1.0, %v2458
        %v2460 = vrcp.pop %v2444
        %v2461 = vmul.f32 %v2444, %v2460
        %v2462 = vsub.f32 1.0, %v2461
        %v2463 = vmul.f32 %v2460, %v2462
        %v2464 = vadd.f32 %v2460, %v2463
        %vm2465 = vweird.f32 %v2444
        %vm2466 = vweird.f32 %v2460
        %vm2467 = vmor %vm2465, %vm2466
        %v2468 = vsel %vm2467, %v2460, %v2464
        %v2469 = vand.u32 2147483647, %v2444
        %vm2470 = vcmp.eq.f32.partialorder %v2469, 8.507059e+37
        %v2471 = vand.u32 %v2444, 2147483648
        %v2472 = vor.u32 1.1754944e-38, %v2471
        %v2473 = vsel %vm2470, %v2472, %v2468
        %v2474 = vmul.f32 1.0, %v2473
        %v2475 = vmul.f32 %v1178, 0.33333334
        %v2476 = vmul.f32 %v1659, 0.33333334
        %v2477 = vmul.f32 %v2459, 0.33333334
        %v2478 = vmul.f32 %v2474, 0.33333334
        %2480 = vrot.lane.b32.xlu0 %v2475, 16
        %v2481 = vpop.permute.xlu0 %2480
        %2483 = vrot.lane.b32.xlu0 %v2475, 32
        %v2484 = vpop.permute.xlu0 %2483
        %2486 = vrot.lane.b32.xlu0 %v2475, 48
        %v2487 = vpop.permute.xlu0 %2486
        %2489 = vrot.lane.b32.xlu0 %v2475, 64
        %v2490 = vpop.permute.xlu0 %2489
        %2492 = vrot.lane.b32.xlu0 %v2475, 80
        %v2493 = vpop.permute.xlu0 %2492
        %2495 = vrot.lane.b32.xlu0 %v2475, 96
        %v2496 = vpop.permute.xlu0 %2495
        %2498 = vrot.lane.b32.xlu0 %v2475, 112
        %v2499 = vpop.permute.xlu0 %2498
        %v2501 = vsel %vm621, %v2475, %v2481
        %v2502 = vsel %vm623, %v2501, %v2484
        %v2503 = vsel %vm625, %v2502, %v2487
        %v2504 = vsel %vm627, %v2503, %v2490
        %v2505 = vsel %vm629, %v2504, %v2493
        %v2506 = vsel %vm631, %v2505, %v2496
        %v2507 = vsel %vm633, %v2506, %v2499
        %2509 = vset.pattern.permute.xlu0 0
        %2510 = vperm.xlu0 %2509, %v2476
        %v2511 = vpop.permute.xlu0 %2510
        %2513 = vset.pattern.permute.xlu0 1
        %2514 = vperm.xlu0 %2513, %v2476
        %v2515 = vpop.permute.xlu0 %2514
        %2517 = vset.pattern.permute.xlu0 2
        %2518 = vperm.xlu0 %2517, %v2476
        %v2519 = vpop.permute.xlu0 %2518
        %2521 = vset.pattern.permute.xlu0 3
        %2522 = vperm.xlu0 %2521, %v2476
        %v2523 = vpop.permute.xlu0 %2522
        %2525 = vset.pattern.permute.xlu0 4
        %2526 = vperm.xlu0 %2525, %v2476
        %v2527 = vpop.permute.xlu0 %2526
        %2529 = vset.pattern.permute.xlu0 5
        %2530 = vperm.xlu0 %2529, %v2476
        %v2531 = vpop.permute.xlu0 %2530
        %2533 = vset.pattern.permute.xlu0 6
        %2534 = vperm.xlu0 %2533, %v2476
        %v2535 = vpop.permute.xlu0 %2534
        %2537 = vset.pattern.permute.xlu0 7
        %2538 = vperm.xlu0 %2537, %v2476
        %v2539 = vpop.permute.xlu0 %2538
        %2541 = vset.pattern.permute.xlu0 8
        %2542 = vperm.xlu0 %2541, %v2476
        %v2543 = vpop.permute.xlu0 %2542
        %2545 = vset.pattern.permute.xlu0 9
        %2546 = vperm.xlu0 %2545, %v2476
        %v2547 = vpop.permute.xlu0 %2546
        %2549 = vset.pattern.permute.xlu0 10
        %2550 = vperm.xlu0 %2549, %v2476
        %v2551 = vpop.permute.xlu0 %2550
        %2553 = vset.pattern.permute.xlu0 11
        %2554 = vperm.xlu0 %2553, %v2476
        %v2555 = vpop.permute.xlu0 %2554
        %2557 = vset.pattern.permute.xlu0 12
        %2558 = vperm.xlu0 %2557, %v2476
        %v2559 = vpop.permute.xlu0 %2558
        %2561 = vset.pattern.permute.xlu0 13
        %2562 = vperm.xlu0 %2561, %v2476
        %v2563 = vpop.permute.xlu0 %2562
        %2565 = vset.pattern.permute.xlu0 14
        %2566 = vperm.xlu0 %2565, %v2476
        %v2567 = vpop.permute.xlu0 %2566
        %2569 = vset.pattern.permute.xlu0 15
        %2570 = vperm.xlu0 %2569, %v2476
        %v2571 = vpop.permute.xlu0 %2570
        %v2573 = vsel %vm621, %v2511, %v2515
        %v2574 = vsel %vm623, %v2573, %v2519
        %v2575 = vsel %vm625, %v2574, %v2523
        %v2576 = vsel %vm627, %v2575, %v2527
        %v2577 = vsel %vm629, %v2576, %v2531
        %v2578 = vsel %vm631, %v2577, %v2535
        %v2579 = vsel %vm633, %v2578, %v2539
        %v2580 = vsel %vm621, %v2543, %v2547
        %v2581 = vsel %vm623, %v2580, %v2551
        %v2582 = vsel %vm625, %v2581, %v2555
        %v2583 = vsel %vm627, %v2582, %v2559
        %v2584 = vsel %vm629, %v2583, %v2563
        %v2585 = vsel %vm631, %v2584, %v2567
        %v2586 = vsel %vm633, %v2585, %v2571
        %v2587 = vadd.f32 %v2507, %v2579
        %v2588 = vadd.f32 %v2507, %v2586
        %v2589 = vperm.slane %v2477, 0
        %v2590 = vperm.slane %v2478, 0
        %v2591 = vadd.f32 %v2587, %v2589
        %v2592 = vadd.f32 %v2588, %v2590
        %v2595 = vrot.slane %v2592, 4
        %v2596 = vsel %vm205, %v2591, %v2595
        %v2598 = vmul.f32 %v198, %v2596
        %2599 = vst [vmem:[%s197] sm:$0xff] %v2598
        %p2600 = scmp.lt.s32.totalorder %s16, 1
        %s2601 = scalar_select %p2600, %s16, 1
        %s2602 = smul.addr %s2601, 2
        %s2603 = smul.addr %s2602, 4
        %s2604 = scalar_lea.vmem %s3, %s2603
        // Predicated region
        $region41: #{triplet_attention.1} parent=31 // pred_check
          %p2605 = pneg %p102
        $region42: #{triplet_attention.1} parent=31 // pred_check_branch
          %2607 = sbr.rel (%p2605) target = $region44
        $region43: #{triplet_attention.1} parent=31 // pred_region
          _
        $region44: #{triplet_attention.1} parent=31 // pred_fallthru
          _
      $region32: #{triplet_attention.1} parent=5 // pred_fallthru
        _
      %p2608 = scmp.le.s32.totalorder 2, %s11
      // Predicated region
      $region45: #{triplet_attention.1} parent=5 // pred_check
        %p2609 = pneg %p2608
      $region46: #{triplet_attention.1} parent=5 // pred_check_branch
        %2611 = sbr.rel (%p2609) target = $region48
      $region47: #{triplet_attention.1} parent=5 // pred_region
        %s2612 = ssub.s32 %s11, 2
        // Predicated region
        $region49: #{triplet_attention.1} parent=47 // pred_check
          %p2613 = pneg %p108
        $region50: #{triplet_attention.1} parent=47 // pred_check_branch
          %2615 = sbr.rel (%p2613) target = $region52
        $region51: #{triplet_attention.1} parent=47 // pred_region
          %p2616 = scmp.lt.s32.totalorder %s17, 1
          %s2617 = scalar_select %p2616, %s17, 1
          %s2618 = smul.addr %s2617, 2
          %s2619 = smul.addr %s2618, 4
          %s2620 = scalar_lea.vmem %s3, %s2619
        $region52: #{triplet_attention.1} parent=47 // pred_fallthru
          _
      $region48: #{triplet_attention.1} parent=5 // pred_fallthru
        _
    $region6: #{triplet_attention.1} parent=1 // loop_footer
      %s15 = sadd.s32 1, %s11
    $region7: #{triplet_attention.1} parent=1 // loop_footer_branch
      %10 = sbr.rel target = $region3
    $region8: #{triplet_attention.1} parent=1 // loop_exit
      _
    %2621 = vsyncpa [#allocation3], 1
    %s2622 = scalar_lea.sflag [#allocation3], 1
    %2623 = vsyncpa %s2622, 1
    %2624 = vsyncpa [#allocation5], 1

</llo_original>
